<compile_context>
chip_gen: v7x
topology: tpu7x:2x2x1
jax: 0.10.0
libtpu: 0.0.40
codegen_flags: <defaults>
</compile_context>

<pallas_src>
import functools

import jax
import jax.numpy as jnp
from jax.experimental import pallas as pl
from jax.experimental.pallas import tpu as pltpu

NUM_CLASSES = 5   # flowers dataset (train_y.shape[1])
LANE = 128        # TPU lane width; all kernel outputs padded to this


# ----------------------------- Pallas kernels ------------------------------ #

def _conv_relu_pool_kernel(p_ref, w_ref, b_ref, o_ref, *, pp):
    """Fused conv(as matmul) + bias + ReLU + 2x2 max-pool for one image.

    p_ref: (4*pp, K)  im2col patches; rows ordered (quadrant, ph, pw) so the
                      four members of each pooling window share a row index in
                      the four contiguous pp-row chunks.
    w_ref: (K, 128)   weight matrix, out-channels zero-padded to 128 lanes.
    b_ref: (1, 128)   bias, zero-padded.
    o_ref: (pp, 128)  pooled output (lane-dense store; sliced in the wrapper).
    """
    w = w_ref[...]
    b = b_ref[...]

    def quadrant(q):
        part = jnp.dot(p_ref[pl.ds(q * pp, pp), :], w,
                       preferred_element_type=jnp.float32)
        return jnp.maximum(part + b, 0.0)

    out = quadrant(0)
    for q in range(1, 4):                      # max over the 2x2 window
        out = jnp.maximum(out, quadrant(q))
    o_ref[...] = out.astype(o_ref.dtype)


def _mlp_kernel(x_ref, w1_ref, b1_ref, w2_ref, b2_ref, w3_ref, b3_ref, o_ref):
    """Fused relu(fc1) -> relu(fc2) -> fc3; all weights resident in VMEM."""
    h = jnp.dot(x_ref[...], w1_ref[...], preferred_element_type=jnp.float32)
    h = jnp.maximum(h + b1_ref[...], 0.0)
    h = jnp.dot(h, w2_ref[...], preferred_element_type=jnp.float32)
    h = jnp.maximum(h + b2_ref[...], 0.0)
    h = jnp.dot(h, w3_ref[...], preferred_element_type=jnp.float32)
    o_ref[...] = (h + b3_ref[...]).astype(o_ref.dtype)


# ----------------------------- Pallas wrappers ----------------------------- #

def _pad_lanes(a, n=LANE):
    """Zero-pad the last dim of `a` up to n columns."""
    pad = n - a.shape[-1]
    if pad == 0:
        return a
    return jnp.pad(a, [(0, 0)] * (a.ndim - 1) + [(0, pad)])


def _im2col_pool_quadrants(x, k):
    """NHWC im2col with pool-friendly row ordering.

    x: (B, H, W, C) -> patches (B, 4*PH*PW, k*k*C).  Within each image, rows
    are ordered (quadrant=(i,j), ph, pw); quadrant (i, j) holds the patch of
    conv-output position (2*ph+i, 2*pw+j).  Column order is (kh, kw, c),
    matching the weight matrix built in conv_relu_pool.
    """
    B, H, W, C = x.shape
    OH, OW = H - k + 1, W - k + 1
    assert OH % 2 == 0 and OW % 2 == 0
    PH, PW = OH // 2, OW // 2
    K = k * k * C
    cols = [x[:, di:di + OH, dj:dj + OW, :] for di in range(k) for dj in range(k)]
    p = jnp.concatenate(cols, axis=-1)                                # (B,OH,OW,K)
    p = p.reshape(B, PH, 2, PW, 2, K).transpose(0, 2, 4, 1, 3, 5)     # (B,2,2,PH,PW,K)
    return p.reshape(B, 4 * PH * PW, K), PH, PW


def conv_relu_pool(x, w, b):
    """max_pool2d(relu(conv2d(x)), 2) with PyTorch semantics (stride 1, no pad).

    x: (B, H, W, Cin) NHWC; w: (Cout, Cin, k, k) PyTorch layout; b: (Cout,).
    Returns (B, PH, PW, Cout) NHWC.
    """
    B = x.shape[0]
    Cout, Cin, k, _ = w.shape
    patches, PH, PW = _im2col_pool_quadrants(x, k)
    K = k * k * Cin
    PP = PH * PW

    # (kh, kw, ci) row order matches the patch column order; pad out-ch to 128.
    wmat = _pad_lanes(jnp.transpose(w, (2, 3, 1, 0)).reshape(K, Cout))   # (K, 128)
    bvec = _pad_lanes(b.reshape(1, Cout))                                # (1, 128)

    out = pl.pallas_call(
        functools.partial(_conv_relu_pool_kernel, pp=PP),
        out_shape=jax.ShapeDtypeStruct((B, PP, LANE), jnp.float32),
        grid=(B,),
        in_specs=[
            pl.BlockSpec((None, 4 * PP, K), lambda i: (i, 0, 0)),
            pl.BlockSpec((K, LANE), lambda i: (0, 0)),
            pl.BlockSpec((1, LANE), lambda i: (0, 0)),
        ],
        out_specs=pl.BlockSpec((None, PP, LANE), lambda i: (i, 0, 0)),
        compiler_params=pltpu.CompilerParams(
            dimension_semantics=("parallel",)),    # both TensorCores on v7x
    )(patches, wmat, bvec)

    return out[..., :Cout].reshape(B, PH, PW, Cout)


def mlp_head(params, x):
    """Fused fc1/fc2/fc3 head.  x: (B, fc1_in) f32 -> (B, NUM_CLASSES)."""
    B, K1 = x.shape
    # Zero-pad every weight/bias to 128 lanes (and 128 rows where the input is
    # itself lane-padded) so stores and intermediate matmuls are lane-dense.
    w1 = _pad_lanes(params["fc1_w"])                                       # (K1,128)
    b1 = _pad_lanes(params["fc1_b"].reshape(1, -1))
    w2 = _pad_lanes(jnp.pad(params["fc2_w"],
                            ((0, LANE - params["fc2_w"].shape[0]), (0, 0))))  # (128,128)
    b2 = _pad_lanes(params["fc2_b"].reshape(1, -1))
    w3 = _pad_lanes(jnp.pad(params["fc3_w"],
                            ((0, LANE - params["fc3_w"].shape[0]), (0, 0))))  # (128,128)
    b3 = _pad_lanes(params["fc3_b"].reshape(1, -1))

    out = pl.pallas_call(
        _mlp_kernel,
        out_shape=jax.ShapeDtypeStruct((B, LANE), jnp.float32),
        grid=(1,),
        in_specs=[
            pl.BlockSpec((B, K1), lambda i: (0, 0)),
            pl.BlockSpec((K1, LANE), lambda i: (0, 0)),
            pl.BlockSpec((1, LANE), lambda i: (0, 0)),
            pl.BlockSpec((LANE, LANE), lambda i: (0, 0)),
            pl.BlockSpec((1, LANE), lambda i: (0, 0)),
            pl.BlockSpec((LANE, LANE), lambda i: (0, 0)),
            pl.BlockSpec((1, LANE), lambda i: (0, 0)),
        ],
        out_specs=pl.BlockSpec((B, LANE), lambda i: (0, 0)),
        compiler_params=pltpu.CompilerParams(
            dimension_semantics=("arbitrary",)),
    )(x, w1, b1, w2, b2, w3, b3)
    return out[:, :NUM_CLASSES]


# ------------------------------- model glue -------------------------------- #

def init_params(key, in_hw):
    """Deterministic init; fc weights stored transposed as (in, out)."""
    H, W = in_hw
    h1, w1 = (H - 4) // 2, (W - 4) // 2          # after conv1 + pool
    h2, w2 = (h1 - 4) // 2, (w1 - 4) // 2        # after conv2 + pool
    fc1_in = 60 * h2 * w2                        # == 60*53*53 when H=W=224

    def unif(k, shape, fan_in):
        bound = 1.0 / jnp.sqrt(fan_in)
        return jax.random.uniform(k, shape, jnp.float32, -bound, bound)

    ks = jax.random.split(key, 10)
    return {
        "conv1_w": unif(ks[0], (20, 3, 5, 5), 3 * 25),
        "conv1_b": unif(ks[1], (20,), 3 * 25),
        "conv2_w": unif(ks[2], (60, 20, 5, 5), 20 * 25),
        "conv2_b": unif(ks[3], (60,), 20 * 25),
        "fc1_w":   unif(ks[4], (fc1_in, 120), fc1_in),
        "fc1_b":   unif(ks[5], (120,), fc1_in),
        "fc2_w":   unif(ks[6], (120, 84), 120),
        "fc2_b":   unif(ks[7], (84,), 120),
        "fc3_w":   unif(ks[8], (84, NUM_CLASSES), 84),
        "fc3_b":   unif(ks[9], (NUM_CLASSES,), 84),
    }


def net_forward(params, x):
    """x: (B, 3, H, W) NCHW, as in the PyTorch module."""
    B = x.shape[0]
    x = jnp.transpose(x, (0, 2, 3, 1))                                 # NHWC, once
    # x = max_pool2d(relu(conv1(x)), 2)
    x = conv_relu_pool(x, params["conv1_w"], params["conv1_b"])        # (B,14,14,20)
    # x = max_pool2d(relu(conv2(x)), 2)
    x = conv_relu_pool(x, params["conv2_w"], params["conv2_b"])        # (B, 5, 5,60)
    # x = x.view(x.size(0), -1)  -- PyTorch flattens NCHW order
    x = jnp.transpose(x, (0, 3, 1, 2)).reshape(B, -1)                  # (B, 60*5*5)
    # x = relu(fc1(x)); x = relu(fc2(x)); x = fc3(x)   (single fused kernel)
    return mlp_head(params, x)


if __name__ == "__main__":
    key = jax.random.PRNGKey(0)
    k_param, k_x = jax.random.split(key)

    B, C, H, W = 2, 3, 32, 32      # small NCHW input (original module: 3x224x224)
    x = jax.random.normal(k_x, (B, C, H, W), jnp.float32)
    params = init_params(k_param, (H, W))

    out = jax.jit(net_forward)(params, x)
    out = jax.block_until_ready(out)
    assert out.shape == (B, NUM_CLASSES) and out.dtype == jnp.float32
    print("KERNEL_OK")
</pallas_src>

<mosaic_0001>
module attributes {stable_mosaic.version = 11 : i64} {
  func.func @_conv_relu_pool_kernel(%arg0: i32, %arg1: memref<1x784x75xf32, #tpu.memory_space<vmem>>, %arg2: memref<75x128xf32, #tpu.memory_space<vmem>>, %arg3: memref<1x128xf32, #tpu.memory_space<vmem>>, %arg4: memref<1x196x128xf32, #tpu.memory_space<vmem>>) attributes {dimension_semantics = [#tpu.dimension_semantics<parallel>], iteration_bounds = array<i64: 2>, scalar_prefetch = 0 : i64, scratch_operands = 0 : i64, tpu.core_type = #tpu.core_type<tc>, window_params = [{transform_indices = @transform_0, window_bounds = array<i64: 1, 784, 75>}, {pipeline_mode = #tpu.pipeline_mode<synchronous>, transform_indices = @transform_1, window_bounds = array<i64: 75, 128>}, {pipeline_mode = #tpu.pipeline_mode<synchronous>, transform_indices = @transform_2, window_bounds = array<i64: 1, 128>}, {transform_indices = @transform_3, window_bounds = array<i64: 1, 196, 128>}]} {
    %c0 = arith.constant 0 : index
    %c0_0 = arith.constant 0 : index
    %0 = vector.load %arg2[%c0, %c0_0] : memref<75x128xf32, #tpu.memory_space<vmem>>, vector<75x128xf32>
    %c0_1 = arith.constant 0 : index
    %c0_2 = arith.constant 0 : index
    %1 = vector.load %arg3[%c0_1, %c0_2] : memref<1x128xf32, #tpu.memory_space<vmem>>, vector<1x128xf32>
    %c0_3 = arith.constant 0 : index
    %c0_4 = arith.constant 0 : index
    %c0_5 = arith.constant 0 : index
    %2 = vector.load %arg1[%c0_3, %c0_4, %c0_5] : memref<1x784x75xf32, #tpu.memory_space<vmem>>, vector<1x196x75xf32>
    %3 = vector.shape_cast %2 : vector<1x196x75xf32> to vector<196x75xf32>
    %cst = arith.constant dense<0.000000e+00> : vector<196x128xf32>
    %4 = tpu.matmul %3, %0, %cst {dimension_numbers = #tpu.dot_dimension_numbers<[1], [0], [0], [1], [0, 0, 1, 1], [], []>} : vector<196x75xf32>, vector<75x128xf32>, vector<196x128xf32> -> vector<196x128xf32>
    %5 = vector.broadcast %1 : vector<1x128xf32> to vector<196x128xf32>
    %6 = arith.addf %4, %5 : vector<196x128xf32>
    %cst_6 = arith.constant 0.000000e+00 : f32
    %7 = vector.broadcast %cst_6 : f32 to vector<196x128xf32>
    %8 = arith.maximumf %6, %7 : vector<196x128xf32>
    %c0_7 = arith.constant 0 : index
    %c196 = arith.constant 196 : index
    %c0_8 = arith.constant 0 : index
    %9 = vector.load %arg1[%c0_7, %c196, %c0_8] : memref<1x784x75xf32, #tpu.memory_space<vmem>>, vector<1x196x75xf32>
    %10 = vector.shape_cast %9 : vector<1x196x75xf32> to vector<196x75xf32>
    %cst_9 = arith.constant dense<0.000000e+00> : vector<196x128xf32>
    %11 = tpu.matmul %10, %0, %cst_9 {dimension_numbers = #tpu.dot_dimension_numbers<[1], [0], [0], [1], [0, 0, 1, 1], [], []>} : vector<196x75xf32>, vector<75x128xf32>, vector<196x128xf32> -> vector<196x128xf32>
    %12 = vector.broadcast %1 : vector<1x128xf32> to vector<196x128xf32>
    %13 = arith.addf %11, %12 : vector<196x128xf32>
    %cst_10 = arith.constant 0.000000e+00 : f32
    %14 = vector.broadcast %cst_10 : f32 to vector<196x128xf32>
    %15 = arith.maximumf %13, %14 : vector<196x128xf32>
    %16 = arith.maximumf %8, %15 : vector<196x128xf32>
    %c0_11 = arith.constant 0 : index
    %c392 = arith.constant 392 : index
    %c0_12 = arith.constant 0 : index
    %17 = vector.load %arg1[%c0_11, %c392, %c0_12] : memref<1x784x75xf32, #tpu.memory_space<vmem>>, vector<1x196x75xf32>
    %18 = vector.shape_cast %17 : vector<1x196x75xf32> to vector<196x75xf32>
    %cst_13 = arith.constant dense<0.000000e+00> : vector<196x128xf32>
    %19 = tpu.matmul %18, %0, %cst_13 {dimension_numbers = #tpu.dot_dimension_numbers<[1], [0], [0], [1], [0, 0, 1, 1], [], []>} : vector<196x75xf32>, vector<75x128xf32>, vector<196x128xf32> -> vector<196x128xf32>
    %20 = vector.broadcast %1 : vector<1x128xf32> to vector<196x128xf32>
    %21 = arith.addf %19, %20 : vector<196x128xf32>
    %cst_14 = arith.constant 0.000000e+00 : f32
    %22 = vector.broadcast %cst_14 : f32 to vector<196x128xf32>
    %23 = arith.maximumf %21, %22 : vector<196x128xf32>
    %24 = arith.maximumf %16, %23 : vector<196x128xf32>
    %c0_15 = arith.constant 0 : index
    %c588 = arith.constant 588 : index
    %c0_16 = arith.constant 0 : index
    %25 = vector.load %arg1[%c0_15, %c588, %c0_16] : memref<1x784x75xf32, #tpu.memory_space<vmem>>, vector<1x196x75xf32>
    %26 = vector.shape_cast %25 : vector<1x196x75xf32> to vector<196x75xf32>
    %cst_17 = arith.constant dense<0.000000e+00> : vector<196x128xf32>
    %27 = tpu.matmul %26, %0, %cst_17 {dimension_numbers = #tpu.dot_dimension_numbers<[1], [0], [0], [1], [0, 0, 1, 1], [], []>} : vector<196x75xf32>, vector<75x128xf32>, vector<196x128xf32> -> vector<196x128xf32>
    %28 = vector.broadcast %1 : vector<1x128xf32> to vector<196x128xf32>
    %29 = arith.addf %27, %28 : vector<196x128xf32>
    %cst_18 = arith.constant 0.000000e+00 : f32
    %30 = vector.broadcast %cst_18 : f32 to vector<196x128xf32>
    %31 = arith.maximumf %29, %30 : vector<196x128xf32>
    %32 = arith.maximumf %24, %31 : vector<196x128xf32>
    %c0_19 = arith.constant 0 : index
    %c0_20 = arith.constant 0 : index
    %c0_21 = arith.constant 0 : index
    %33 = vector.load %arg4[%c0_19, %c0_20, %c0_21] : memref<1x196x128xf32, #tpu.memory_space<vmem>>, vector<1x196x128xf32>
    %34 = vector.shape_cast %33 : vector<1x196x128xf32> to vector<196x128xf32>
    %35 = vector.shape_cast %32 : vector<196x128xf32> to vector<1x196x128xf32>
    tpu.vector_store %arg4[%c0_19, %c0_20, %c0_21], %35 {strides = array<i32>} : memref<1x196x128xf32, #tpu.memory_space<vmem>>, vector<1x196x128xf32>,
    return
  }
  func.func @transform_0(%arg0: i32) -> (i32, i32, i32) {
    %c0_i32 = arith.constant 0 : i32
    %c0_i32_0 = arith.constant 0 : i32
    %c0_i32_1 = arith.constant 0 : i32
    return %arg0, %c0_i32, %c0_i32_0 : i32, i32, i32
  }
  func.func @transform_1(%arg0: i32) -> (i32, i32) {
    %c0_i32 = arith.constant 0 : i32
    %c0_i32_0 = arith.constant 0 : i32
    %c0_i32_1 = arith.constant 0 : i32
    return %c0_i32, %c0_i32_0 : i32, i32
  }
  func.func @transform_2(%arg0: i32) -> (i32, i32) {
    %c0_i32 = arith.constant 0 : i32
    %c0_i32_0 = arith.constant 0 : i32
    %c0_i32_1 = arith.constant 0 : i32
    return %c0_i32, %c0_i32_0 : i32, i32
  }
  func.func @transform_3(%arg0: i32) -> (i32, i32, i32) {
    %c0_i32 = arith.constant 0 : i32
    %c0_i32_0 = arith.constant 0 : i32
    %c0_i32_1 = arith.constant 0 : i32
    return %arg0, %c0_i32, %c0_i32_0 : i32, i32, i32
  }
}

module attributes {stable_mosaic.version = 11 : i64} {
  func.func @_conv_relu_pool_kernel(%arg0: i32, %arg1: memref<1x100x500xf32, #tpu.memory_space<vmem>>, %arg2: memref<500x128xf32, #tpu.memory_space<vmem>>, %arg3: memref<1x128xf32, #tpu.memory_space<vmem>>, %arg4: memref<1x25x128xf32, #tpu.memory_space<vmem>>) attributes {dimension_semantics = [#tpu.dimension_semantics<parallel>], iteration_bounds = array<i64: 2>, scalar_prefetch = 0 : i64, scratch_operands = 0 : i64, tpu.core_type = #tpu.core_type<tc>, window_params = [{transform_indices = @transform_0, window_bounds = array<i64: 1, 100, 500>}, {pipeline_mode = #tpu.pipeline_mode<synchronous>, transform_indices = @transform_1, window_bounds = array<i64: 500, 128>}, {pipeline_mode = #tpu.pipeline_mode<synchronous>, transform_indices = @transform_2, window_bounds = array<i64: 1, 128>}, {transform_indices = @transform_3, window_bounds = array<i64: 1, 25, 128>}]} {
    %c0 = arith.constant 0 : index
    %c0_0 = arith.constant 0 : index
    %0 = vector.load %arg2[%c0, %c0_0] : memref<500x128xf32, #tpu.memory_space<vmem>>, vector<500x128xf32>
    %c0_1 = arith.constant 0 : index
    %c0_2 = arith.constant 0 : index
    %1 = vector.load %arg3[%c0_1, %c0_2] : memref<1x128xf32, #tpu.memory_space<vmem>>, vector<1x128xf32>
    %c0_3 = arith.constant 0 : index
    %c0_4 = arith.constant 0 : index
    %c0_5 = arith.constant 0 : index
    %2 = vector.load %arg1[%c0_3, %c0_4, %c0_5] : memref<1x100x500xf32, #tpu.memory_space<vmem>>, vector<1x25x500xf32>
    %3 = vector.shape_cast %2 : vector<1x25x500xf32> to vector<25x500xf32>
    %cst = arith.constant dense<0.000000e+00> : vector<25x128xf32>
    %4 = tpu.matmul %3, %0, %cst {dimension_numbers = #tpu.dot_dimension_numbers<[1], [0], [0], [1], [0, 0, 1, 1], [], []>} : vector<25x500xf32>, vector<500x128xf32>, vector<25x128xf32> -> vector<25x128xf32>
    %5 = vector.broadcast %1 : vector<1x128xf32> to vector<25x128xf32>
    %6 = arith.addf %4, %5 : vector<25x128xf32>
    %cst_6 = arith.constant 0.000000e+00 : f32
    %7 = vector.broadcast %cst_6 : f32 to vector<25x128xf32>
    %8 = arith.maximumf %6, %7 : vector<25x128xf32>
    %c0_7 = arith.constant 0 : index
    %c25 = arith.constant 25 : index
    %c0_8 = arith.constant 0 : index
    %9 = vector.load %arg1[%c0_7, %c25, %c0_8] : memref<1x100x500xf32, #tpu.memory_space<vmem>>, vector<1x25x500xf32>
    %10 = vector.shape_cast %9 : vector<1x25x500xf32> to vector<25x500xf32>
    %cst_9 = arith.constant dense<0.000000e+00> : vector<25x128xf32>
    %11 = tpu.matmul %10, %0, %cst_9 {dimension_numbers = #tpu.dot_dimension_numbers<[1], [0], [0], [1], [0, 0, 1, 1], [], []>} : vector<25x500xf32>, vector<500x128xf32>, vector<25x128xf32> -> vector<25x128xf32>
    %12 = vector.broadcast %1 : vector<1x128xf32> to vector<25x128xf32>
    %13 = arith.addf %11, %12 : vector<25x128xf32>
    %cst_10 = arith.constant 0.000000e+00 : f32
    %14 = vector.broadcast %cst_10 : f32 to vector<25x128xf32>
    %15 = arith.maximumf %13, %14 : vector<25x128xf32>
    %16 = arith.maximumf %8, %15 : vector<25x128xf32>
    %c0_11 = arith.constant 0 : index
    %c50 = arith.constant 50 : index
    %c0_12 = arith.constant 0 : index
    %17 = vector.load %arg1[%c0_11, %c50, %c0_12] : memref<1x100x500xf32, #tpu.memory_space<vmem>>, vector<1x25x500xf32>
    %18 = vector.shape_cast %17 : vector<1x25x500xf32> to vector<25x500xf32>
    %cst_13 = arith.constant dense<0.000000e+00> : vector<25x128xf32>
    %19 = tpu.matmul %18, %0, %cst_13 {dimension_numbers = #tpu.dot_dimension_numbers<[1], [0], [0], [1], [0, 0, 1, 1], [], []>} : vector<25x500xf32>, vector<500x128xf32>, vector<25x128xf32> -> vector<25x128xf32>
    %20 = vector.broadcast %1 : vector<1x128xf32> to vector<25x128xf32>
    %21 = arith.addf %19, %20 : vector<25x128xf32>
    %cst_14 = arith.constant 0.000000e+00 : f32
    %22 = vector.broadcast %cst_14 : f32 to vector<25x128xf32>
    %23 = arith.maximumf %21, %22 : vector<25x128xf32>
    %24 = arith.maximumf %16, %23 : vector<25x128xf32>
    %c0_15 = arith.constant 0 : index
    %c75 = arith.constant 75 : index
    %c0_16 = arith.constant 0 : index
    %25 = vector.load %arg1[%c0_15, %c75, %c0_16] : memref<1x100x500xf32, #tpu.memory_space<vmem>>, vector<1x25x500xf32>
    %26 = vector.shape_cast %25 : vector<1x25x500xf32> to vector<25x500xf32>
    %cst_17 = arith.constant dense<0.000000e+00> : vector<25x128xf32>
    %27 = tpu.matmul %26, %0, %cst_17 {dimension_numbers = #tpu.dot_dimension_numbers<[1], [0], [0], [1], [0, 0, 1, 1], [], []>} : vector<25x500xf32>, vector<500x128xf32>, vector<25x128xf32> -> vector<25x128xf32>
    %28 = vector.broadcast %1 : vector<1x128xf32> to vector<25x128xf32>
    %29 = arith.addf %27, %28 : vector<25x128xf32>
    %cst_18 = arith.constant 0.000000e+00 : f32
    %30 = vector.broadcast %cst_18 : f32 to vector<25x128xf32>
    %31 = arith.maximumf %29, %30 : vector<25x128xf32>
    %32 = arith.maximumf %24, %31 : vector<25x128xf32>
    %c0_19 = arith.constant 0 : index
    %c0_20 = arith.constant 0 : index
    %c0_21 = arith.constant 0 : index
    %33 = vector.load %arg4[%c0_19, %c0_20, %c0_21] : memref<1x25x128xf32, #tpu.memory_space<vmem>>, vector<1x25x128xf32>
    %34 = vector.shape_cast %33 : vector<1x25x128xf32> to vector<25x128xf32>
    %35 = vector.shape_cast %32 : vector<25x128xf32> to vector<1x25x128xf32>
    tpu.vector_store %arg4[%c0_19, %c0_20, %c0_21], %35 {strides = array<i32>} : memref<1x25x128xf32, #tpu.memory_space<vmem>>, vector<1x25x128xf32>,
    return
  }
  func.func @transform_0(%arg0: i32) -> (i32, i32, i32) {
    %c0_i32 = arith.constant 0 : i32
    %c0_i32_0 = arith.constant 0 : i32
    %c0_i32_1 = arith.constant 0 : i32
    return %arg0, %c0_i32, %c0_i32_0 : i32, i32, i32
  }
  func.func @transform_1(%arg0: i32) -> (i32, i32) {
    %c0_i32 = arith.constant 0 : i32
    %c0_i32_0 = arith.constant 0 : i32
    %c0_i32_1 = arith.constant 0 : i32
    return %c0_i32, %c0_i32_0 : i32, i32
  }
  func.func @transform_2(%arg0: i32) -> (i32, i32) {
    %c0_i32 = arith.constant 0 : i32
    %c0_i32_0 = arith.constant 0 : i32
    %c0_i32_1 = arith.constant 0 : i32
    return %c0_i32, %c0_i32_0 : i32, i32
  }
  func.func @transform_3(%arg0: i32) -> (i32, i32, i32) {
    %c0_i32 = arith.constant 0 : i32
    %c0_i32_0 = arith.constant 0 : i32
    %c0_i32_1 = arith.constant 0 : i32
    return %arg0, %c0_i32, %c0_i32_0 : i32, i32, i32
  }
}

module attributes {stable_mosaic.version = 11 : i64} {
  func.func @_mlp_kernel(%arg0: i32, %arg1: memref<2x1500xf32, #tpu.memory_space<vmem>>, %arg2: memref<1500x128xf32, #tpu.memory_space<vmem>>, %arg3: memref<1x128xf32, #tpu.memory_space<vmem>>, %arg4: memref<128x128xf32, #tpu.memory_space<vmem>>, %arg5: memref<1x128xf32, #tpu.memory_space<vmem>>, %arg6: memref<128x128xf32, #tpu.memory_space<vmem>>, %arg7: memref<1x128xf32, #tpu.memory_space<vmem>>, %arg8: memref<2x128xf32, #tpu.memory_space<vmem>>) attributes {dimension_semantics = [#tpu.dimension_semantics<arbitrary>], iteration_bounds = array<i64: 1>, scalar_prefetch = 0 : i64, scratch_operands = 0 : i64, tpu.core_type = #tpu.core_type<tc>, window_params = [{pipeline_mode = #tpu.pipeline_mode<synchronous>, transform_indices = @transform_0, window_bounds = array<i64: 2, 1500>}, {pipeline_mode = #tpu.pipeline_mode<synchronous>, transform_indices = @transform_1, window_bounds = array<i64: 1500, 128>}, {pipeline_mode = #tpu.pipeline_mode<synchronous>, transform_indices = @transform_2, window_bounds = array<i64: 1, 128>}, {pipeline_mode = #tpu.pipeline_mode<synchronous>, transform_indices = @transform_3, window_bounds = array<i64: 128, 128>}, {pipeline_mode = #tpu.pipeline_mode<synchronous>, transform_indices = @transform_4, window_bounds = array<i64: 1, 128>}, {pipeline_mode = #tpu.pipeline_mode<synchronous>, transform_indices = @transform_5, window_bounds = array<i64: 128, 128>}, {pipeline_mode = #tpu.pipeline_mode<synchronous>, transform_indices = @transform_6, window_bounds = array<i64: 1, 128>}, {pipeline_mode = #tpu.pipeline_mode<synchronous>, transform_indices = @transform_7, window_bounds = array<i64: 2, 128>}]} {
    %c0 = arith.constant 0 : index
    %c0_0 = arith.constant 0 : index
    %0 = vector.load %arg1[%c0, %c0_0] : memref<2x1500xf32, #tpu.memory_space<vmem>>, vector<2x1500xf32>
    %c0_1 = arith.constant 0 : index
    %c0_2 = arith.constant 0 : index
    %1 = vector.load %arg2[%c0_1, %c0_2] : memref<1500x128xf32, #tpu.memory_space<vmem>>, vector<1500x128xf32>
    %cst = arith.constant dense<0.000000e+00> : vector<2x128xf32>
    %2 = tpu.matmul %0, %1, %cst {dimension_numbers = #tpu.dot_dimension_numbers<[1], [0], [0], [1], [0, 0, 1, 1], [], []>} : vector<2x1500xf32>, vector<1500x128xf32>, vector<2x128xf32> -> vector<2x128xf32>
    %c0_3 = arith.constant 0 : index
    %c0_4 = arith.constant 0 : index
    %3 = vector.load %arg3[%c0_3, %c0_4] : memref<1x128xf32, #tpu.memory_space<vmem>>, vector<1x128xf32>
    %4 = vector.broadcast %3 : vector<1x128xf32> to vector<2x128xf32>
    %5 = arith.addf %2, %4 : vector<2x128xf32>
    %cst_5 = arith.constant 0.000000e+00 : f32
    %6 = vector.broadcast %cst_5 : f32 to vector<2x128xf32>
    %7 = arith.maximumf %5, %6 : vector<2x128xf32>
    %c0_6 = arith.constant 0 : index
    %c0_7 = arith.constant 0 : index
    %8 = vector.load %arg4[%c0_6, %c0_7] : memref<128x128xf32, #tpu.memory_space<vmem>>, vector<128x128xf32>
    %cst_8 = arith.constant dense<0.000000e+00> : vector<2x128xf32>
    %9 = tpu.matmul %7, %8, %cst_8 {dimension_numbers = #tpu.dot_dimension_numbers<[1], [0], [0], [1], [0, 0, 1, 1], [], []>} : vector<2x128xf32>, vector<128x128xf32>, vector<2x128xf32> -> vector<2x128xf32>
    %c0_9 = arith.constant 0 : index
    %c0_10 = arith.constant 0 : index
    %10 = vector.load %arg5[%c0_9, %c0_10] : memref<1x128xf32, #tpu.memory_space<vmem>>, vector<1x128xf32>
    %11 = vector.broadcast %10 : vector<1x128xf32> to vector<2x128xf32>
    %12 = arith.addf %9, %11 : vector<2x128xf32>
    %cst_11 = arith.constant 0.000000e+00 : f32
    %13 = vector.broadcast %cst_11 : f32 to vector<2x128xf32>
    %14 = arith.maximumf %12, %13 : vector<2x128xf32>
    %c0_12 = arith.constant 0 : index
    %c0_13 = arith.constant 0 : index
    %15 = vector.load %arg6[%c0_12, %c0_13] : memref<128x128xf32, #tpu.memory_space<vmem>>, vector<128x128xf32>
    %cst_14 = arith.constant dense<0.000000e+00> : vector<2x128xf32>
    %16 = tpu.matmul %14, %15, %cst_14 {dimension_numbers = #tpu.dot_dimension_numbers<[1], [0], [0], [1], [0, 0, 1, 1], [], []>} : vector<2x128xf32>, vector<128x128xf32>, vector<2x128xf32> -> vector<2x128xf32>
    %c0_15 = arith.constant 0 : index
    %c0_16 = arith.constant 0 : index
    %17 = vector.load %arg7[%c0_15, %c0_16] : memref<1x128xf32, #tpu.memory_space<vmem>>, vector<1x128xf32>
    %18 = vector.broadcast %17 : vector<1x128xf32> to vector<2x128xf32>
    %19 = arith.addf %16, %18 : vector<2x128xf32>
    %c0_17 = arith.constant 0 : index
    %c0_18 = arith.constant 0 : index
    %20 = vector.load %arg8[%c0_17, %c0_18] : memref<2x128xf32, #tpu.memory_space<vmem>>, vector<2x128xf32>
    tpu.vector_store %arg8[%c0_17, %c0_18], %19 {strides = array<i32>} : memref<2x128xf32, #tpu.memory_space<vmem>>, vector<2x128xf32>,
    return
  }
  func.func @transform_0(%arg0: i32) -> (i32, i32) {
    %c0_i32 = arith.constant 0 : i32
    %c0_i32_0 = arith.constant 0 : i32
    %c0_i32_1 = arith.constant 0 : i32
    return %c0_i32, %c0_i32_0 : i32, i32
  }
  func.func @transform_1(%arg0: i32) -> (i32, i32) {
    %c0_i32 = arith.constant 0 : i32
    %c0_i32_0 = arith.constant 0 : i32
    %c0_i32_1 = arith.constant 0 : i32
    return %c0_i32, %c0_i32_0 : i32, i32
  }
  func.func @transform_2(%arg0: i32) -> (i32, i32) {
    %c0_i32 = arith.constant 0 : i32
    %c0_i32_0 = arith.constant 0 : i32
    %c0_i32_1 = arith.constant 0 : i32
    return %c0_i32, %c0_i32_0 : i32, i32
  }
  func.func @transform_3(%arg0: i32) -> (i32, i32) {
    %c0_i32 = arith.constant 0 : i32
    %c0_i32_0 = arith.constant 0 : i32
    %c0_i32_1 = arith.constant 0 : i32
    return %c0_i32, %c0_i32_0 : i32, i32
  }
  func.func @transform_4(%arg0: i32) -> (i32, i32) {
    %c0_i32 = arith.constant 0 : i32
    %c0_i32_0 = arith.constant 0 : i32
    %c0_i32_1 = arith.constant 0 : i32
    return %c0_i32, %c0_i32_0 : i32, i32
  }
  func.func @transform_5(%arg0: i32) -> (i32, i32) {
    %c0_i32 = arith.constant 0 : i32
    %c0_i32_0 = arith.constant 0 : i32
    %c0_i32_1 = arith.constant 0 : i32
    return %c0_i32, %c0_i32_0 : i32, i32
  }
  func.func @transform_6(%arg0: i32) -> (i32, i32) {
    %c0_i32 = arith.constant 0 : i32
    %c0_i32_0 = arith.constant 0 : i32
    %c0_i32_1 = arith.constant 0 : i32
    return %c0_i32, %c0_i32_0 : i32, i32
  }
  func.func @transform_7(%arg0: i32) -> (i32, i32) {
    %c0_i32 = arith.constant 0 : i32
    %c0_i32_0 = arith.constant 0 : i32
    %c0_i32_1 = arith.constant 0 : i32
    return %c0_i32, %c0_i32_0 : i32, i32
  }
}

</mosaic_0001>

<llo_original>
// kernel: net_forward.3
$region0: #{net_forward.3}
  #allocation0 [shape = 'u32[]', space=smem, size = 0x4, offset = 0x4, fixed_abs, tag = 'smem constant byte address 0x4 - core index']
  #allocation1 [shape = 'u32[144,128]{1,0:T(1,128)}', space=vmem, size = 0x12000, scoped, tag = 'internal scratch']
  %s0 = inlined_call_operand.vmem [shape: f32[2,784,75], index: 0, kind: input, shape index: {}]
  %s1 = inlined_call_operand.vmem [shape: f32[75,128], index: 1, kind: input, shape index: {}]
  %s2 = inlined_call_operand.vmem [shape: f32[1,128], index: 2, kind: input, shape index: {}]
  %s3 = inlined_call_operand.vmem [shape: f32[2,196,128], index: 3, kind: output, shape index: {}]
  %s4 = sld [smem:[#allocation0]]
  $region45: #{net_forward.3} parent=0
    _
  %s6 = ssub.s32 1, %s4
  %s7 = scalar_select 0, %s6, %s4
  loop: start=0, step=1, limit=4
  $region2: #{net_forward.3} parent=0 // loop_pre_header
    _
  $region3: #{net_forward.3} parent=0 // loop_header
    %s9 = sphi 0, %s13
    %p10 = scmp.ge.s32.totalorder %s9, 4
    %s19 = sphi 0, %s21
    %s22 = sphi 0, %s19
    %s23 = sphi 0, %s22
    %s39 = sphi 0, %s23
    %s43 = sphi 0, %s43
    %s45 = sphi 0, %s43
    %s46 = sphi 0, %s45
    %s60 = sphi 0, %s46
    %s64 = sphi 0, %s64
    %s66 = sphi 0, %s64
    %s67 = sphi 0, %s66
    %s81 = sphi 0, %s67
    %s87 = sphi 0, %s89
    %s90 = sphi 0, %s87
    %s91 = sphi 0, %s90
    %s107 = sphi 0, %s91
  $region4: #{net_forward.3} parent=0 // loop_header_branch
    %12 = sbr.rel (%p10) target = $region8
  $region5: #{net_forward.3} parent=0 // loop_body
    %s14 = ssub.s32 %s9, 1
    %s15 = ssub.s32 %s9, 2
    %s16 = sadd.s32 %s9, 1
    %s17 = ssub.s32 %s9, %s16
    %p18 = scmp.eq.s32.totalorder %s17, 0
    %s20 = sadd.s32 %s19, 1
    %s21 = scalar_select %p18, %s19, %s20
    %p24 = pneg %p18
    %p25 = scmp.eq.s32.totalorder %s9, 1
    %p26 = por %p24, %p25
    %p27 = scmp.ne.s32.totalorder %s19, %s22
    %p28 = scmp.eq.s32.totalorder %s9, 0
    %p29 = por %p27, %p28
    %p30 = scmp.ne.s32.totalorder %s19, %s22
    %p31 = scmp.eq.s32.totalorder %s14, 1
    %p32 = por %p30, %p31
    %p33 = scmp.ne.s32.totalorder %s22, %s23
    %p34 = scmp.eq.s32.totalorder %s14, 0
    %p35 = por %p33, %p34
    %p36 = scmp.ne.s32.totalorder %s22, %s23
    %p37 = scmp.eq.s32.totalorder %s15, 1
    %p38 = por %p36, %p37
    %p40 = scmp.ne.s32.totalorder %s23, %s39
    %p41 = scmp.eq.s32.totalorder %s15, 0
    %p42 = por %p40, %p41
    %s44 = sadd.s32 %s43, 1
    %p47 = scmp.eq.s32.totalorder %s9, 1
    %p48 = scmp.ne.s32.totalorder %s43, %s45
    %p49 = scmp.eq.s32.totalorder %s9, 0
    %p50 = por %p48, %p49
    %p51 = scmp.ne.s32.totalorder %s43, %s45
    %p52 = scmp.eq.s32.totalorder %s14, 1
    %p53 = por %p51, %p52
    %p54 = scmp.ne.s32.totalorder %s45, %s46
    %p55 = scmp.eq.s32.totalorder %s14, 0
    %p56 = por %p54, %p55
    %p57 = scmp.ne.s32.totalorder %s45, %s46
    %p58 = scmp.eq.s32.totalorder %s15, 1
    %p59 = por %p57, %p58
    %p61 = scmp.ne.s32.totalorder %s46, %s60
    %p62 = scmp.eq.s32.totalorder %s15, 0
    %p63 = por %p61, %p62
    %s65 = sadd.s32 %s64, 1
    %p68 = scmp.eq.s32.totalorder %s9, 1
    %p69 = scmp.ne.s32.totalorder %s64, %s66
    %p70 = scmp.eq.s32.totalorder %s9, 0
    %p71 = por %p69, %p70
    %p72 = scmp.ne.s32.totalorder %s64, %s66
    %p73 = scmp.eq.s32.totalorder %s14, 1
    %p74 = por %p72, %p73
    %p75 = scmp.ne.s32.totalorder %s66, %s67
    %p76 = scmp.eq.s32.totalorder %s14, 0
    %p77 = por %p75, %p76
    %p78 = scmp.ne.s32.totalorder %s66, %s67
    %p79 = scmp.eq.s32.totalorder %s15, 1
    %p80 = por %p78, %p79
    %p82 = scmp.ne.s32.totalorder %s67, %s81
    %p83 = scmp.eq.s32.totalorder %s15, 0
    %p84 = por %p82, %p83
    %s85 = ssub.s32 %s9, %s16
    %p86 = scmp.eq.s32.totalorder %s85, 0
    %s88 = sadd.s32 %s87, 1
    %s89 = scalar_select %p86, %s87, %s88
    %p92 = pneg %p86
    %p93 = scmp.eq.s32.totalorder %s9, 1
    %p94 = por %p92, %p93
    %p95 = scmp.ne.s32.totalorder %s87, %s90
    %p96 = scmp.eq.s32.totalorder %s9, 0
    %p97 = por %p95, %p96
    %p98 = scmp.ne.s32.totalorder %s87, %s90
    %p99 = scmp.eq.s32.totalorder %s14, 1
    %p100 = por %p98, %p99
    %p101 = scmp.ne.s32.totalorder %s90, %s91
    %p102 = scmp.eq.s32.totalorder %s14, 0
    %p103 = por %p101, %p102
    %p104 = scmp.ne.s32.totalorder %s90, %s91
    %p105 = scmp.eq.s32.totalorder %s15, 1
    %p106 = por %p104, %p105
    %p108 = scmp.ne.s32.totalorder %s91, %s107
    %p109 = scmp.eq.s32.totalorder %s15, 0
    %p110 = por %p108, %p109
    %p111 = scmp.le.s32.totalorder 1, %s9
    %p112 = scmp.lt.s32.totalorder %s9, 3
    %p113 = pnand %p111, %p112
    %p114 = pneg %p113
    // Predicated region
    $region9: #{net_forward.3} parent=5 // pred_check
      _
    $region10: #{net_forward.3} parent=5 // pred_check_branch
      %116 = sbr.rel (%p113) target = $region12
    $region11: #{net_forward.3} parent=5 // pred_region
      %s117 = ssub.s32 %s9, 1
      // Predicated region
      $region13: #{net_forward.3} parent=11 // pred_check
        %p118 = pneg %p56
      $region14: #{net_forward.3} parent=11 // pred_check_branch
        %120 = sbr.rel (%p118) target = $region16
      $region15: #{net_forward.3} parent=11 // pred_region
        _
      $region16: #{net_forward.3} parent=11 // pred_fallthru
        _
      // Predicated region
      $region17: #{net_forward.3} parent=11 // pred_check
        %p121 = pneg %p77
      $region18: #{net_forward.3} parent=11 // pred_check_branch
        %123 = sbr.rel (%p121) target = $region20
      $region19: #{net_forward.3} parent=11 // pred_region
        _
      $region20: #{net_forward.3} parent=11 // pred_fallthru
        _
    $region12: #{net_forward.3} parent=5 // pred_fallthru
      _
    %p124 = scmp.lt.s32.totalorder %s9, 2
    // Predicated region
    $region21: #{net_forward.3} parent=5 // pred_check
      %p125 = pneg %p124
    $region22: #{net_forward.3} parent=5 // pred_check_branch
      %127 = sbr.rel (%p125) target = $region24
    $region23: #{net_forward.3} parent=5 // pred_region
      // Predicated region
      $region25: #{net_forward.3} parent=23 // pred_check
        %p128 = pneg %p29
      $region26: #{net_forward.3} parent=23 // pred_check_branch
        %130 = sbr.rel (%p128) target = $region28
      $region27: #{net_forward.3} parent=23 // pred_region
        %p131 = scmp.lt.s32.totalorder %s9, 1
        %s132 = scalar_select %p131, %s9, 1
        %s133 = smul.addr %s132, 98
        %s134 = smul.addr %s133, 8
        %s135 = scalar_lea.vmem %s0, %s134
      $region28: #{net_forward.3} parent=23 // pred_fallthru
        _
    $region24: #{net_forward.3} parent=5 // pred_fallthru
      _
    %p136 = scmp.le.s32.totalorder 1, %s9
    %p137 = scmp.lt.s32.totalorder %s9, 3
    %p138 = pnand %p136, %p137
    %p139 = pneg %p138
    // Predicated region
    $region29: #{net_forward.3} parent=5 // pred_check
      _
    $region30: #{net_forward.3} parent=5 // pred_check_branch
      %141 = sbr.rel (%p138) target = $region32
    $region31: #{net_forward.3} parent=5 // pred_region
      %s142 = ssub.s32 %s9, 1
      %p143 = scmp.lt.s32.totalorder %s14, 1
      %s144 = scalar_select %p143, %s14, 1
      %s145 = smul.addr %s144, 98
      %s146 = smul.addr %s145, 8
      %s147 = scalar_lea.vmem %s0, %s146
      %p148 = pneg %p35
      %p149 = pneg %p32
      %p150 = pneg %p56
      %p151 = pneg %p53
      %p152 = pneg %p77
      %p153 = pneg %p74
      %p154 = pneg %p103
      %p155 = pneg %p100
      %p156 = scmp.lt.s32.totalorder %s14, 1
      %s157 = scalar_select %p156, %s14, 1
      %s158 = smul.addr %s157, 25
      %s159 = smul.addr %s158, 8
      %s160 = scalar_lea.vmem %s3, %s159
      %p161 = scmp.lt.s32.totalorder %s14, 1
      %s162 = scalar_select %p161, %s14, 1
      %s163 = smul.addr %s162, 98
      %s164 = smul.addr %s163, 8
      %s165 = scalar_lea.vmem %s0, %s164
      %p166 = scmp.lt.s32.totalorder %s14, 1
      %s167 = scalar_select %p166, %s14, 1
      %s168 = smul.addr %s167, 25
      %s169 = smul.addr %s168, 8
      %s170 = scalar_lea.vmem %s3, %s169
      %v171 = vld [vmem:[%s1] sm:$0xff]
      %v172 = vld [vmem:[%s1 + $0x8] sm:$0xff]
      %v173 = vld [vmem:[%s1 + $0x10] sm:$0xff]
      %v174 = vld [vmem:[%s1 + $0x18] sm:$0xff]
      %v175 = vld [vmem:[%s1 + $0x20] sm:$0xff]
      %v176 = vld [vmem:[%s1 + $0x28] sm:$0xff]
      %v177 = vld [vmem:[%s1 + $0x30] sm:$0xff]
      %v178 = vld [vmem:[%s1 + $0x38] sm:$0xff]
      %v179 = vld [vmem:[%s1 + $0x40] sm:$0xff]
      %v180 = vld [vmem:[%s1 + $0x48] sm:$0x7]
      %v181 = vld [vmem:[%s2] sm:$0x1]
      %v182 = vld [vmem:[%s165] sm:$0xff]
      %v183 = vld [vmem:[%s165 + $0x8] sm:$0xff]
      %v184 = vld [vmem:[%s165 + $0x10] sm:$0xff]
      %v185 = vld [vmem:[%s165 + $0x18] sm:$0xff]
      %v186 = vld [vmem:[%s165 + $0x20] sm:$0xff]
      %v187 = vld [vmem:[%s165 + $0x28] sm:$0xff]
      %v188 = vld [vmem:[%s165 + $0x30] sm:$0xff]
      %v189 = vld [vmem:[%s165 + $0x38] sm:$0xff]
      %v190 = vld [vmem:[%s165 + $0x40] sm:$0xff]
      %v191 = vld [vmem:[%s165 + $0x48] sm:$0xff]
      %v192 = vld [vmem:[%s165 + $0x50] sm:$0xff]
      %v193 = vld [vmem:[%s165 + $0x58] sm:$0xff]
      %v194 = vld [vmem:[%s165 + $0x60] sm:$0xff]
      %v195 = vld [vmem:[%s165 + $0x68] sm:$0xff]
      %v196 = vld [vmem:[%s165 + $0x70] sm:$0xff]
      %v197 = vld [vmem:[%s165 + $0x78] sm:$0xff]
      %v198 = vld [vmem:[%s165 + $0x80] sm:$0xff]
      %v199 = vld [vmem:[%s165 + $0x88] sm:$0xff]
      %v200 = vld [vmem:[%s165 + $0x90] sm:$0xff]
      %v201 = vld [vmem:[%s165 + $0x98] sm:$0xff]
      %v202 = vld [vmem:[%s165 + $0xa0] sm:$0xff]
      %v203 = vld [vmem:[%s165 + $0xa8] sm:$0xff]
      %v204 = vld [vmem:[%s165 + $0xb0] sm:$0xff]
      %v205 = vld [vmem:[%s165 + $0xb8] sm:$0xff]
      %v206 = vld [vmem:[%s165 + $0xc0] sm:$0xf]
      %v208 = vlaneseq
      %v209 = vshrl.u32 %v208, 7
      %v210 = vsub.s32 0, %v209
      %v211 = vrot.slane %v181, %v210
      %vm213 = vcmask 613376
      %v215 = vsel %vm213, %v182, 0
      %v218 = vsel %vm213, %v183, 0
      %v221 = vsel %vm213, %v184, 0
      %v224 = vsel %vm213, %v185, 0
      %v227 = vsel %vm213, %v186, 0
      %v230 = vsel %vm213, %v187, 0
      %v233 = vsel %vm213, %v188, 0
      %v236 = vsel %vm213, %v189, 0
      %v239 = vsel %vm213, %v190, 0
      %v242 = vsel %vm213, %v191, 0
      %v245 = vsel %vm213, %v192, 0
      %v248 = vsel %vm213, %v193, 0
      %v251 = vsel %vm213, %v194, 0
      %v254 = vsel %vm213, %v195, 0
      %v257 = vsel %vm213, %v196, 0
      %v260 = vsel %vm213, %v197, 0
      %v263 = vsel %vm213, %v198, 0
      %v266 = vsel %vm213, %v199, 0
      %v269 = vsel %vm213, %v200, 0
      %v272 = vsel %vm213, %v201, 0
      %v275 = vsel %vm213, %v202, 0
      %v278 = vsel %vm213, %v203, 0
      %v281 = vsel %vm213, %v204, 0
      %v284 = vsel %vm213, %v205, 0
      %v287 = vsel %vm213, %v206, 0
      %vm289 = vcmask 1042432
      %v291 = vsel %vm289, %v180, 0
      %293 = vmatprep.subr.mxu0 0.0
      %294 = vmatpush1.msra.mxu0 %v171
      %295 = vmatprep.subr.mxu0 0.0
      %296 = vmatpush1.msra.mxu0 %v172
      %297 = vmatprep.subr.mxu0 0.0
      %298 = vmatpush1.msra.mxu0 %v173
      %299 = vmatprep.subr.mxu0 0.0
      %300 = vmatpush1.msra.mxu0 %v174
      %301 = vmatprep.subr.mxu0 0.0
      %302 = vmatpush1.msra.mxu0 %v175
      %303 = vmatprep.subr.mxu0 0.0
      %304 = vmatpush1.msra.mxu0 %v176
      %305 = vmatprep.subr.mxu0 0.0
      %306 = vmatpush1.msra.mxu0 %v177
      %307 = vmatprep.subr.mxu0 0.0
      %308 = vmatpush1.msra.mxu0 %v178
      %309 = vmatprep.subr.mxu0 0.0
      %310 = vmatpush1.msra.mxu0 %v179
      %311 = vmatprep.subr.mxu0 0.0
      %312 = vmatpush1.msra.mxu0 %v291
      %313 = vmatprep.subr.mxu0 0.0
      %314 = vmatpush1.msra.mxu0 0.0
      %315 = vmatprep.subr.mxu0 0.0
      %316 = vmatpush1.msra.mxu0 0.0
      %317 = vmatprep.subr.mxu0 0.0
      %318 = vmatpush1.msra.mxu0 0.0
      %319 = vmatprep.subr.mxu0 0.0
      %320 = vmatpush1.msra.mxu0 0.0
      %321 = vmatprep.subr.mxu0 0.0
      %322 = vmatpush1.msra.mxu0 0.0
      %323 = vmatprep.subr.mxu0 0.0
      %324 = vmatpush1.msra.mxu0 0.0
      %325 = vmatprep.subr.mxu0 0.0
      %326 = vmatpush1.msra.mxu0 0.0
      %327 = vmatprep.subr.mxu0 0.0
      %328 = vmatpush1.msra.mxu0 0.0
      %329 = vmatprep.subr.mxu0 0.0
      %330 = vmatpush1.msra.mxu0 0.0
      %331 = vmatprep.subr.mxu0 0.0
      %332 = vmatpush1.msra.mxu0 0.0
      %333 = vmatprep.subr.mxu0 0.0
      %334 = vmatpush1.msra.mxu0 0.0
      %335 = vmatprep.subr.mxu0 0.0
      %336 = vmatpush1.msra.mxu0 0.0
      %337 = vmatprep.subr.mxu0 0.0
      %338 = vmatpush1.msra.mxu0 0.0
      %339 = vmatprep.subr.mxu0 0.0
      %340 = vmatpush1.msra.mxu0 0.0
      %341 = vmatprep.subr.mxu0 0.0
      %342 = vmatpush1.msra.mxu0 0.0
      %343 = vmatprep.subr.mxu0 0.0
      %344 = vmatpush1.msra.mxu0 0.0
      %345 = vmatprep.subr.mxu0 0.0
      %346 = vmatpush1.msra.mxu0 0.0
      %347 = vmatprep.subr.mxu0 0.0
      %348 = vmatpush1.msra.mxu0 0.0
      %349 = vmatprep.subr.mxu0 0.0
      %350 = vmatpush1.msra.mxu0 0.0
      %351 = vmatprep.subr.mxu0 0.0
      %352 = vmatpush1.msra.mxu0 0.0
      %353 = vmatprep.subr.mxu0 0.0
      %354 = vmatpush1.msra.mxu0 0.0
      %355 = vmatprep.subr.mxu0 0.0
      %356 = vmatpush1.msra.mxu0 0.0
      %357 = vmatprep.mubr.f32.mxu0 0.0
      %358 = vmatmul.mubr.f32.gmra.mrb[0].mxu0 %v215
      %v359 = vpop.f32.mrb[0].mxu0
      %v360 = vadd.f32 %v211, %v359
      %v361 = vpop.f32.mrb[0].mxu0
      %362 = vmatprep.mubr.f32.mxu0 0.0
      %363 = vmatmul.mubr.f32.gmra.mrb[0].mxu0 %v218
      %v364 = vpop.f32.mrb[0].mxu0
      %v365 = vadd.f32 %v211, %v364
      %v366 = vpop.f32.mrb[0].mxu0
      %367 = vmatprep.mubr.f32.mxu0 0.0
      %368 = vmatmul.mubr.f32.gmra.mrb[0].mxu0 %v221
      %v369 = vpop.f32.mrb[0].mxu0
      %v370 = vadd.f32 %v211, %v369
      %v371 = vpop.f32.mrb[0].mxu0
      %372 = vmatprep.mubr.f32.mxu0 0.0
      %373 = vmatmul.mubr.f32.gmra.mrb[0].mxu0 %v224
      %v374 = vpop.f32.mrb[0].mxu0
      %v375 = vadd.f32 %v211, %v374
      %v376 = vpop.f32.mrb[0].mxu0
      %377 = vmatprep.mubr.f32.mxu0 0.0
      %378 = vmatmul.mubr.f32.gmra.mrb[0].mxu0 %v227
      %v379 = vpop.f32.mrb[0].mxu0
      %v380 = vadd.f32 %v211, %v379
      %v381 = vpop.f32.mrb[0].mxu0
      %382 = vmatprep.mubr.f32.mxu0 0.0
      %383 = vmatmul.mubr.f32.gmra.mrb[0].mxu0 %v230
      %v384 = vpop.f32.mrb[0].mxu0
      %v385 = vadd.f32 %v211, %v384
      %v386 = vpop.f32.mrb[0].mxu0
      %387 = vmatprep.mubr.f32.mxu0 0.0
      %388 = vmatmul.mubr.f32.gmra.mrb[0].mxu0 %v233
      %v389 = vpop.f32.mrb[0].mxu0
      %v390 = vadd.f32 %v211, %v389
      %v391 = vpop.f32.mrb[0].mxu0
      %392 = vmatprep.mubr.f32.mxu0 0.0
      %393 = vmatmul.mubr.f32.gmra.mrb[0].mxu0 %v236
      %v394 = vpop.f32.mrb[0].mxu0
      %v395 = vadd.f32 %v211, %v394
      %v396 = vpop.f32.mrb[0].mxu0
      %397 = vmatprep.mubr.f32.mxu0 0.0
      %398 = vmatmul.mubr.f32.gmra.mrb[0].mxu0 %v239
      %v399 = vpop.f32.mrb[0].mxu0
      %v400 = vadd.f32 %v211, %v399
      %v401 = vpop.f32.mrb[0].mxu0
      %402 = vmatprep.mubr.f32.mxu0 0.0
      %403 = vmatmul.mubr.f32.gmra.mrb[0].mxu0 %v242
      %v404 = vpop.f32.mrb[0].mxu0
      %v405 = vadd.f32 %v211, %v404
      %v406 = vpop.f32.mrb[0].mxu0
      %407 = vmatprep.mubr.f32.mxu0 0.0
      %408 = vmatmul.mubr.f32.gmra.mrb[0].mxu0 %v245
      %v409 = vpop.f32.mrb[0].mxu0
      %v410 = vadd.f32 %v211, %v409
      %v411 = vpop.f32.mrb[0].mxu0
      %412 = vmatprep.mubr.f32.mxu0 0.0
      %413 = vmatmul.mubr.f32.gmra.mrb[0].mxu0 %v248
      %v414 = vpop.f32.mrb[0].mxu0
      %v415 = vadd.f32 %v211, %v414
      %v416 = vpop.f32.mrb[0].mxu0
      %417 = vmatprep.mubr.f32.mxu0 0.0
      %418 = vmatmul.mubr.f32.gmra.mrb[0].mxu0 %v251
      %v419 = vpop.f32.mrb[0].mxu0
      %v420 = vadd.f32 %v211, %v419
      %v421 = vpop.f32.mrb[0].mxu0
      %422 = vmatprep.mubr.f32.mxu0 0.0
      %423 = vmatmul.mubr.f32.gmra.mrb[0].mxu0 %v254
      %v424 = vpop.f32.mrb[0].mxu0
      %v425 = vadd.f32 %v211, %v424
      %v426 = vpop.f32.mrb[0].mxu0
      %427 = vmatprep.mubr.f32.mxu0 0.0
      %428 = vmatmul.mubr.f32.gmra.mrb[0].mxu0 %v257
      %v429 = vpop.f32.mrb[0].mxu0
      %v430 = vadd.f32 %v211, %v429
      %v431 = vpop.f32.mrb[0].mxu0
      %432 = vmatprep.mubr.f32.mxu0 0.0
      %433 = vmatmul.mubr.f32.gmra.mrb[0].mxu0 %v260
      %v434 = vpop.f32.mrb[0].mxu0
      %v435 = vadd.f32 %v211, %v434
      %v436 = vpop.f32.mrb[0].mxu0
      %437 = vmatprep.mubr.f32.mxu0 0.0
      %438 = vmatmul.mubr.f32.gmra.mrb[0].mxu0 %v263
      %v439 = vpop.f32.mrb[0].mxu0
      %v440 = vadd.f32 %v211, %v439
      %v441 = vpop.f32.mrb[0].mxu0
      %442 = vmatprep.mubr.f32.mxu0 0.0
      %443 = vmatmul.mubr.f32.gmra.mrb[0].mxu0 %v266
      %v444 = vpop.f32.mrb[0].mxu0
      %v445 = vadd.f32 %v211, %v444
      %v446 = vpop.f32.mrb[0].mxu0
      %447 = vmatprep.mubr.f32.mxu0 0.0
      %448 = vmatmul.mubr.f32.gmra.mrb[0].mxu0 %v269
      %v449 = vpop.f32.mrb[0].mxu0
      %v450 = vadd.f32 %v211, %v449
      %v451 = vpop.f32.mrb[0].mxu0
      %452 = vmatprep.mubr.f32.mxu0 0.0
      %453 = vmatmul.mubr.f32.gmra.mrb[0].mxu0 %v272
      %v454 = vpop.f32.mrb[0].mxu0
      %v455 = vadd.f32 %v211, %v454
      %v456 = vpop.f32.mrb[0].mxu0
      %457 = vmatprep.mubr.f32.mxu0 0.0
      %458 = vmatmul.mubr.f32.gmra.mrb[0].mxu0 %v275
      %v459 = vpop.f32.mrb[0].mxu0
      %v460 = vadd.f32 %v211, %v459
      %v461 = vpop.f32.mrb[0].mxu0
      %462 = vmatprep.mubr.f32.mxu0 0.0
      %463 = vmatmul.mubr.f32.gmra.mrb[0].mxu0 %v278
      %v464 = vpop.f32.mrb[0].mxu0
      %v465 = vadd.f32 %v211, %v464
      %v466 = vpop.f32.mrb[0].mxu0
      %467 = vmatprep.mubr.f32.mxu0 0.0
      %468 = vmatmul.mubr.f32.gmra.mrb[0].mxu0 %v281
      %v469 = vpop.f32.mrb[0].mxu0
      %v470 = vadd.f32 %v211, %v469
      %v471 = vpop.f32.mrb[0].mxu0
      %472 = vmatprep.mubr.f32.mxu0 0.0
      %473 = vmatmul.mubr.f32.gmra.mrb[0].mxu0 %v284
      %v474 = vpop.f32.mrb[0].mxu0
      %v475 = vadd.f32 %v211, %v474
      %v476 = vpop.f32.mrb[0].mxu0
      %477 = vmatprep.mubr.f32.mxu0 0.0
      %478 = vmatmul.mubr.f32.gmra.mrb[0].mxu0 %v287
      %v479 = vpop.f32.mrb[0].mxu0
      %v480 = vadd.f32 %v211, %v479
      %v481 = vpop.f32.mrb[0].mxu0
      %482 = vdwg.mxu0
      %v483 = vmax.f32 %v360, 0.0
      %v484 = vmax.f32 %v365, 0.0
      %v485 = vmax.f32 %v370, 0.0
      %v486 = vmax.f32 %v375, 0.0
      %v487 = vmax.f32 %v380, 0.0
      %v488 = vmax.f32 %v385, 0.0
      %v489 = vmax.f32 %v390, 0.0
      %v490 = vmax.f32 %v395, 0.0
      %v491 = vmax.f32 %v400, 0.0
      %v492 = vmax.f32 %v405, 0.0
      %v493 = vmax.f32 %v410, 0.0
      %v494 = vmax.f32 %v415, 0.0
      %v495 = vmax.f32 %v420, 0.0
      %v496 = vmax.f32 %v425, 0.0
      %v497 = vmax.f32 %v430, 0.0
      %v498 = vmax.f32 %v435, 0.0
      %v499 = vmax.f32 %v440, 0.0
      %v500 = vmax.f32 %v445, 0.0
      %v501 = vmax.f32 %v450, 0.0
      %v502 = vmax.f32 %v455, 0.0
      %v503 = vmax.f32 %v460, 0.0
      %v504 = vmax.f32 %v465, 0.0
      %v505 = vmax.f32 %v470, 0.0
      %v506 = vmax.f32 %v475, 0.0
      %v507 = vmax.f32 %v480, 0.0
      %v508 = vld [vmem:[%s165 + $0xc4] sm:$0xff]
      %v509 = vld [vmem:[%s165 + $0xcc] sm:$0xff]
      %v510 = vld [vmem:[%s165 + $0xd4] sm:$0xff]
      %v511 = vld [vmem:[%s165 + $0xdc] sm:$0xff]
      %v512 = vld [vmem:[%s165 + $0xe4] sm:$0xff]
      %v513 = vld [vmem:[%s165 + $0xec] sm:$0xff]
      %v514 = vld [vmem:[%s165 + $0xf4] sm:$0xff]
      %v515 = vld [vmem:[%s165 + $0xfc] sm:$0xff]
      %v516 = vld [vmem:[%s165 + $0x104] sm:$0xff]
      %v517 = vld [vmem:[%s165 + $0x10c] sm:$0xff]
      %v518 = vld [vmem:[%s165 + $0x114] sm:$0xff]
      %v519 = vld [vmem:[%s165 + $0x11c] sm:$0xff]
      %v520 = vld [vmem:[%s165 + $0x124] sm:$0xff]
      %v521 = vld [vmem:[%s165 + $0x12c] sm:$0xff]
      %v522 = vld [vmem:[%s165 + $0x134] sm:$0xff]
      %v523 = vld [vmem:[%s165 + $0x13c] sm:$0xff]
      %v524 = vld [vmem:[%s165 + $0x144] sm:$0xff]
      %v525 = vld [vmem:[%s165 + $0x14c] sm:$0xff]
      %v526 = vld [vmem:[%s165 + $0x154] sm:$0xff]
      %v527 = vld [vmem:[%s165 + $0x15c] sm:$0xff]
      %v528 = vld [vmem:[%s165 + $0x164] sm:$0xff]
      %v529 = vld [vmem:[%s165 + $0x16c] sm:$0xff]
      %v530 = vld [vmem:[%s165 + $0x174] sm:$0xff]
      %v531 = vld [vmem:[%s165 + $0x17c] sm:$0xff]
      %v532 = vld [vmem:[%s165 + $0x184] sm:$0xf]
      %v534 = vsel %vm213, %v508, 0
      %v537 = vsel %vm213, %v509, 0
      %v540 = vsel %vm213, %v510, 0
      %v543 = vsel %vm213, %v511, 0
      %v546 = vsel %vm213, %v512, 0
      %v549 = vsel %vm213, %v513, 0
      %v552 = vsel %vm213, %v514, 0
      %v555 = vsel %vm213, %v515, 0
      %v558 = vsel %vm213, %v516, 0
      %v561 = vsel %vm213, %v517, 0
      %v564 = vsel %vm213, %v518, 0
      %v567 = vsel %vm213, %v519, 0
      %v570 = vsel %vm213, %v520, 0
      %v573 = vsel %vm213, %v521, 0
      %v576 = vsel %vm213, %v522, 0
      %v579 = vsel %vm213, %v523, 0
      %v582 = vsel %vm213, %v524, 0
      %v585 = vsel %vm213, %v525, 0
      %v588 = vsel %vm213, %v526, 0
      %v591 = vsel %vm213, %v527, 0
      %v594 = vsel %vm213, %v528, 0
      %v597 = vsel %vm213, %v529, 0
      %v600 = vsel %vm213, %v530, 0
      %v603 = vsel %vm213, %v531, 0
      %v606 = vsel %vm213, %v532, 0
      %608 = vmatprep.subr.mxu0 0.0
      %609 = vmatpush1.msra.mxu0 %v171
      %610 = vmatprep.subr.mxu0 0.0
      %611 = vmatpush1.msra.mxu0 %v172
      %612 = vmatprep.subr.mxu0 0.0
      %613 = vmatpush1.msra.mxu0 %v173
      %614 = vmatprep.subr.mxu0 0.0
      %615 = vmatpush1.msra.mxu0 %v174
      %616 = vmatprep.subr.mxu0 0.0
      %617 = vmatpush1.msra.mxu0 %v175
      %618 = vmatprep.subr.mxu0 0.0
      %619 = vmatpush1.msra.mxu0 %v176
      %620 = vmatprep.subr.mxu0 0.0
      %621 = vmatpush1.msra.mxu0 %v177
      %622 = vmatprep.subr.mxu0 0.0
      %623 = vmatpush1.msra.mxu0 %v178
      %624 = vmatprep.subr.mxu0 0.0
      %625 = vmatpush1.msra.mxu0 %v179
      %626 = vmatprep.subr.mxu0 0.0
      %627 = vmatpush1.msra.mxu0 %v291
      %628 = vmatprep.subr.mxu0 0.0
      %629 = vmatpush1.msra.mxu0 0.0
      %630 = vmatprep.subr.mxu0 0.0
      %631 = vmatpush1.msra.mxu0 0.0
      %632 = vmatprep.subr.mxu0 0.0
      %633 = vmatpush1.msra.mxu0 0.0
      %634 = vmatprep.subr.mxu0 0.0
      %635 = vmatpush1.msra.mxu0 0.0
      %636 = vmatprep.subr.mxu0 0.0
      %637 = vmatpush1.msra.mxu0 0.0
      %638 = vmatprep.subr.mxu0 0.0
      %639 = vmatpush1.msra.mxu0 0.0
      %640 = vmatprep.subr.mxu0 0.0
      %641 = vmatpush1.msra.mxu0 0.0
      %642 = vmatprep.subr.mxu0 0.0
      %643 = vmatpush1.msra.mxu0 0.0
      %644 = vmatprep.subr.mxu0 0.0
      %645 = vmatpush1.msra.mxu0 0.0
      %646 = vmatprep.subr.mxu0 0.0
      %647 = vmatpush1.msra.mxu0 0.0
      %648 = vmatprep.subr.mxu0 0.0
      %649 = vmatpush1.msra.mxu0 0.0
      %650 = vmatprep.subr.mxu0 0.0
      %651 = vmatpush1.msra.mxu0 0.0
      %652 = vmatprep.subr.mxu0 0.0
      %653 = vmatpush1.msra.mxu0 0.0
      %654 = vmatprep.subr.mxu0 0.0
      %655 = vmatpush1.msra.mxu0 0.0
      %656 = vmatprep.subr.mxu0 0.0
      %657 = vmatpush1.msra.mxu0 0.0
      %658 = vmatprep.subr.mxu0 0.0
      %659 = vmatpush1.msra.mxu0 0.0
      %660 = vmatprep.subr.mxu0 0.0
      %661 = vmatpush1.msra.mxu0 0.0
      %662 = vmatprep.subr.mxu0 0.0
      %663 = vmatpush1.msra.mxu0 0.0
      %664 = vmatprep.subr.mxu0 0.0
      %665 = vmatpush1.msra.mxu0 0.0
      %666 = vmatprep.subr.mxu0 0.0
      %667 = vmatpush1.msra.mxu0 0.0
      %668 = vmatprep.subr.mxu0 0.0
      %669 = vmatpush1.msra.mxu0 0.0
      %670 = vmatprep.subr.mxu0 0.0
      %671 = vmatpush1.msra.mxu0 0.0
      %672 = vmatprep.mubr.f32.mxu0 0.0
      %673 = vmatmul.mubr.f32.gmra.mrb[0].mxu0 %v534
      %v674 = vpop.f32.mrb[0].mxu0
      %v675 = vadd.f32 %v211, %v674
      %v676 = vpop.f32.mrb[0].mxu0
      %677 = vmatprep.mubr.f32.mxu0 0.0
      %678 = vmatmul.mubr.f32.gmra.mrb[0].mxu0 %v537
      %v679 = vpop.f32.mrb[0].mxu0
      %v680 = vadd.f32 %v211, %v679
      %v681 = vpop.f32.mrb[0].mxu0
      %682 = vmatprep.mubr.f32.mxu0 0.0
      %683 = vmatmul.mubr.f32.gmra.mrb[0].mxu0 %v540
      %v684 = vpop.f32.mrb[0].mxu0
      %v685 = vadd.f32 %v211, %v684
      %v686 = vpop.f32.mrb[0].mxu0
      %687 = vmatprep.mubr.f32.mxu0 0.0
      %688 = vmatmul.mubr.f32.gmra.mrb[0].mxu0 %v543
      %v689 = vpop.f32.mrb[0].mxu0
      %v690 = vadd.f32 %v211, %v689
      %v691 = vpop.f32.mrb[0].mxu0
      %692 = vmatprep.mubr.f32.mxu0 0.0
      %693 = vmatmul.mubr.f32.gmra.mrb[0].mxu0 %v546
      %v694 = vpop.f32.mrb[0].mxu0
      %v695 = vadd.f32 %v211, %v694
      %v696 = vpop.f32.mrb[0].mxu0
      %697 = vmatprep.mubr.f32.mxu0 0.0
      %698 = vmatmul.mubr.f32.gmra.mrb[0].mxu0 %v549
      %v699 = vpop.f32.mrb[0].mxu0
      %v700 = vadd.f32 %v211, %v699
      %v701 = vpop.f32.mrb[0].mxu0
      %702 = vmatprep.mubr.f32.mxu0 0.0
      %703 = vmatmul.mubr.f32.gmra.mrb[0].mxu0 %v552
      %v704 = vpop.f32.mrb[0].mxu0
      %v705 = vadd.f32 %v211, %v704
      %v706 = vpop.f32.mrb[0].mxu0
      %707 = vmatprep.mubr.f32.mxu0 0.0
      %708 = vmatmul.mubr.f32.gmra.mrb[0].mxu0 %v555
      %v709 = vpop.f32.mrb[0].mxu0
      %v710 = vadd.f32 %v211, %v709
      %v711 = vpop.f32.mrb[0].mxu0
      %712 = vmatprep.mubr.f32.mxu0 0.0
      %713 = vmatmul.mubr.f32.gmra.mrb[0].mxu0 %v558
      %v714 = vpop.f32.mrb[0].mxu0
      %v715 = vadd.f32 %v211, %v714
      %v716 = vpop.f32.mrb[0].mxu0
      %717 = vmatprep.mubr.f32.mxu0 0.0
      %718 = vmatmul.mubr.f32.gmra.mrb[0].mxu0 %v561
      %v719 = vpop.f32.mrb[0].mxu0
      %v720 = vadd.f32 %v211, %v719
      %v721 = vpop.f32.mrb[0].mxu0
      %722 = vmatprep.mubr.f32.mxu0 0.0
      %723 = vmatmul.mubr.f32.gmra.mrb[0].mxu0 %v564
      %v724 = vpop.f32.mrb[0].mxu0
      %v725 = vadd.f32 %v211, %v724
      %v726 = vpop.f32.mrb[0].mxu0
      %727 = vmatprep.mubr.f32.mxu0 0.0
      %728 = vmatmul.mubr.f32.gmra.mrb[0].mxu0 %v567
      %v729 = vpop.f32.mrb[0].mxu0
      %v730 = vadd.f32 %v211, %v729
      %v731 = vpop.f32.mrb[0].mxu0
      %732 = vmatprep.mubr.f32.mxu0 0.0
      %733 = vmatmul.mubr.f32.gmra.mrb[0].mxu0 %v570
      %v734 = vpop.f32.mrb[0].mxu0
      %v735 = vadd.f32 %v211, %v734
      %v736 = vpop.f32.mrb[0].mxu0
      %737 = vmatprep.mubr.f32.mxu0 0.0
      %738 = vmatmul.mubr.f32.gmra.mrb[0].mxu0 %v573
      %v739 = vpop.f32.mrb[0].mxu0
      %v740 = vadd.f32 %v211, %v739
      %v741 = vpop.f32.mrb[0].mxu0
      %742 = vmatprep.mubr.f32.mxu0 0.0
      %743 = vmatmul.mubr.f32.gmra.mrb[0].mxu0 %v576
      %v744 = vpop.f32.mrb[0].mxu0
      %v745 = vadd.f32 %v211, %v744
      %v746 = vpop.f32.mrb[0].mxu0
      %747 = vmatprep.mubr.f32.mxu0 0.0
      %748 = vmatmul.mubr.f32.gmra.mrb[0].mxu0 %v579
      %v749 = vpop.f32.mrb[0].mxu0
      %v750 = vadd.f32 %v211, %v749
      %v751 = vpop.f32.mrb[0].mxu0
      %752 = vmatprep.mubr.f32.mxu0 0.0
      %753 = vmatmul.mubr.f32.gmra.mrb[0].mxu0 %v582
      %v754 = vpop.f32.mrb[0].mxu0
      %v755 = vadd.f32 %v211, %v754
      %v756 = vpop.f32.mrb[0].mxu0
      %757 = vmatprep.mubr.f32.mxu0 0.0
      %758 = vmatmul.mubr.f32.gmra.mrb[0].mxu0 %v585
      %v759 = vpop.f32.mrb[0].mxu0
      %v760 = vadd.f32 %v211, %v759
      %v761 = vpop.f32.mrb[0].mxu0
      %762 = vmatprep.mubr.f32.mxu0 0.0
      %763 = vmatmul.mubr.f32.gmra.mrb[0].mxu0 %v588
      %v764 = vpop.f32.mrb[0].mxu0
      %v765 = vadd.f32 %v211, %v764
      %v766 = vpop.f32.mrb[0].mxu0
      %767 = vmatprep.mubr.f32.mxu0 0.0
      %768 = vmatmul.mubr.f32.gmra.mrb[0].mxu0 %v591
      %v769 = vpop.f32.mrb[0].mxu0
      %v770 = vadd.f32 %v211, %v769
      %v771 = vpop.f32.mrb[0].mxu0
      %772 = vmatprep.mubr.f32.mxu0 0.0
      %773 = vmatmul.mubr.f32.gmra.mrb[0].mxu0 %v594
      %v774 = vpop.f32.mrb[0].mxu0
      %v775 = vadd.f32 %v211, %v774
      %v776 = vpop.f32.mrb[0].mxu0
      %777 = vmatprep.mubr.f32.mxu0 0.0
      %778 = vmatmul.mubr.f32.gmra.mrb[0].mxu0 %v597
      %v779 = vpop.f32.mrb[0].mxu0
      %v780 = vadd.f32 %v211, %v779
      %v781 = vpop.f32.mrb[0].mxu0
      %782 = vmatprep.mubr.f32.mxu0 0.0
      %783 = vmatmul.mubr.f32.gmra.mrb[0].mxu0 %v600
      %v784 = vpop.f32.mrb[0].mxu0
      %v785 = vadd.f32 %v211, %v784
      %v786 = vpop.f32.mrb[0].mxu0
      %787 = vmatprep.mubr.f32.mxu0 0.0
      %788 = vmatmul.mubr.f32.gmra.mrb[0].mxu0 %v603
      %v789 = vpop.f32.mrb[0].mxu0
      %v790 = vadd.f32 %v211, %v789
      %v791 = vpop.f32.mrb[0].mxu0
      %792 = vmatprep.mubr.f32.mxu0 0.0
      %793 = vmatmul.mubr.f32.gmra.mrb[0].mxu0 %v606
      %v794 = vpop.f32.mrb[0].mxu0
      %v795 = vadd.f32 %v211, %v794
      %v796 = vpop.f32.mrb[0].mxu0
      %797 = vdwg.mxu0
      %v798 = vmax.f32 %v675, 0.0
      %v799 = vmax.f32 %v680, 0.0
      %v800 = vmax.f32 %v685, 0.0
      %v801 = vmax.f32 %v690, 0.0
      %v802 = vmax.f32 %v695, 0.0
      %v803 = vmax.f32 %v700, 0.0
      %v804 = vmax.f32 %v705, 0.0
      %v805 = vmax.f32 %v710, 0.0
      %v806 = vmax.f32 %v715, 0.0
      %v807 = vmax.f32 %v720, 0.0
      %v808 = vmax.f32 %v725, 0.0
      %v809 = vmax.f32 %v730, 0.0
      %v810 = vmax.f32 %v735, 0.0
      %v811 = vmax.f32 %v740, 0.0
      %v812 = vmax.f32 %v745, 0.0
      %v813 = vmax.f32 %v750, 0.0
      %v814 = vmax.f32 %v755, 0.0
      %v815 = vmax.f32 %v760, 0.0
      %v816 = vmax.f32 %v765, 0.0
      %v817 = vmax.f32 %v770, 0.0
      %v818 = vmax.f32 %v775, 0.0
      %v819 = vmax.f32 %v780, 0.0
      %v820 = vmax.f32 %v785, 0.0
      %v821 = vmax.f32 %v790, 0.0
      %v822 = vmax.f32 %v795, 0.0
      %v823 = vmax.f32 %v483, %v798
      %v824 = vmax.f32 %v484, %v799
      %v825 = vmax.f32 %v485, %v800
      %v826 = vmax.f32 %v486, %v801
      %v827 = vmax.f32 %v487, %v802
      %v828 = vmax.f32 %v488, %v803
      %v829 = vmax.f32 %v489, %v804
      %v830 = vmax.f32 %v490, %v805
      %v831 = vmax.f32 %v491, %v806
      %v832 = vmax.f32 %v492, %v807
      %v833 = vmax.f32 %v493, %v808
      %v834 = vmax.f32 %v494, %v809
      %v835 = vmax.f32 %v495, %v810
      %v836 = vmax.f32 %v496, %v811
      %v837 = vmax.f32 %v497, %v812
      %v838 = vmax.f32 %v498, %v813
      %v839 = vmax.f32 %v499, %v814
      %v840 = vmax.f32 %v500, %v815
      %v841 = vmax.f32 %v501, %v816
      %v842 = vmax.f32 %v502, %v817
      %v843 = vmax.f32 %v503, %v818
      %v844 = vmax.f32 %v504, %v819
      %v845 = vmax.f32 %v505, %v820
      %v846 = vmax.f32 %v506, %v821
      %v847 = vmax.f32 %v507, %v822
      %v848 = vld [vmem:[%s165 + $0x188] sm:$0xff]
      %v849 = vld [vmem:[%s165 + $0x190] sm:$0xff]
      %v850 = vld [vmem:[%s165 + $0x198] sm:$0xff]
      %v851 = vld [vmem:[%s165 + $0x1a0] sm:$0xff]
      %v852 = vld [vmem:[%s165 + $0x1a8] sm:$0xff]
      %v853 = vld [vmem:[%s165 + $0x1b0] sm:$0xff]
      %v854 = vld [vmem:[%s165 + $0x1b8] sm:$0xff]
      %v855 = vld [vmem:[%s165 + $0x1c0] sm:$0xff]
      %v856 = vld [vmem:[%s165 + $0x1c8] sm:$0xff]
      %v857 = vld [vmem:[%s165 + $0x1d0] sm:$0xff]
      %v858 = vld [vmem:[%s165 + $0x1d8] sm:$0xff]
      %v859 = vld [vmem:[%s165 + $0x1e0] sm:$0xff]
      %v860 = vld [vmem:[%s165 + $0x1e8] sm:$0xff]
      %v861 = vld [vmem:[%s165 + $0x1f0] sm:$0xff]
      %v862 = vld [vmem:[%s165 + $0x1f8] sm:$0xff]
      %v863 = vld [vmem:[%s165 + $0x200] sm:$0xff]
      %v864 = vld [vmem:[%s165 + $0x208] sm:$0xff]
      %v865 = vld [vmem:[%s165 + $0x210] sm:$0xff]
      %v866 = vld [vmem:[%s165 + $0x218] sm:$0xff]
      %v867 = vld [vmem:[%s165 + $0x220] sm:$0xff]
      %v868 = vld [vmem:[%s165 + $0x228] sm:$0xff]
      %v869 = vld [vmem:[%s165 + $0x230] sm:$0xff]
      %v870 = vld [vmem:[%s165 + $0x238] sm:$0xff]
      %v871 = vld [vmem:[%s165 + $0x240] sm:$0xff]
      %v872 = vld [vmem:[%s165 + $0x248] sm:$0xf]
      %v874 = vsel %vm213, %v848, 0
      %v877 = vsel %vm213, %v849, 0
      %v880 = vsel %vm213, %v850, 0
      %v883 = vsel %vm213, %v851, 0
      %v886 = vsel %vm213, %v852, 0
      %v889 = vsel %vm213, %v853, 0
      %v892 = vsel %vm213, %v854, 0
      %v895 = vsel %vm213, %v855, 0
      %v898 = vsel %vm213, %v856, 0
      %v901 = vsel %vm213, %v857, 0
      %v904 = vsel %vm213, %v858, 0
      %v907 = vsel %vm213, %v859, 0
      %v910 = vsel %vm213, %v860, 0
      %v913 = vsel %vm213, %v861, 0
      %v916 = vsel %vm213, %v862, 0
      %v919 = vsel %vm213, %v863, 0
      %v922 = vsel %vm213, %v864, 0
      %v925 = vsel %vm213, %v865, 0
      %v928 = vsel %vm213, %v866, 0
      %v931 = vsel %vm213, %v867, 0
      %v934 = vsel %vm213, %v868, 0
      %v937 = vsel %vm213, %v869, 0
      %v940 = vsel %vm213, %v870, 0
      %v943 = vsel %vm213, %v871, 0
      %v946 = vsel %vm213, %v872, 0
      %948 = vmatprep.subr.mxu0 0.0
      %949 = vmatpush1.msra.mxu0 %v171
      %950 = vmatprep.subr.mxu0 0.0
      %951 = vmatpush1.msra.mxu0 %v172
      %952 = vmatprep.subr.mxu0 0.0
      %953 = vmatpush1.msra.mxu0 %v173
      %954 = vmatprep.subr.mxu0 0.0
      %955 = vmatpush1.msra.mxu0 %v174
      %956 = vmatprep.subr.mxu0 0.0
      %957 = vmatpush1.msra.mxu0 %v175
      %958 = vmatprep.subr.mxu0 0.0
      %959 = vmatpush1.msra.mxu0 %v176
      %960 = vmatprep.subr.mxu0 0.0
      %961 = vmatpush1.msra.mxu0 %v177
      %962 = vmatprep.subr.mxu0 0.0
      %963 = vmatpush1.msra.mxu0 %v178
      %964 = vmatprep.subr.mxu0 0.0
      %965 = vmatpush1.msra.mxu0 %v179
      %966 = vmatprep.subr.mxu0 0.0
      %967 = vmatpush1.msra.mxu0 %v291
      %968 = vmatprep.subr.mxu0 0.0
      %969 = vmatpush1.msra.mxu0 0.0
      %970 = vmatprep.subr.mxu0 0.0
      %971 = vmatpush1.msra.mxu0 0.0
      %972 = vmatprep.subr.mxu0 0.0
      %973 = vmatpush1.msra.mxu0 0.0
      %974 = vmatprep.subr.mxu0 0.0
      %975 = vmatpush1.msra.mxu0 0.0
      %976 = vmatprep.subr.mxu0 0.0
      %977 = vmatpush1.msra.mxu0 0.0
      %978 = vmatprep.subr.mxu0 0.0
      %979 = vmatpush1.msra.mxu0 0.0
      %980 = vmatprep.subr.mxu0 0.0
      %981 = vmatpush1.msra.mxu0 0.0
      %982 = vmatprep.subr.mxu0 0.0
      %983 = vmatpush1.msra.mxu0 0.0
      %984 = vmatprep.subr.mxu0 0.0
      %985 = vmatpush1.msra.mxu0 0.0
      %986 = vmatprep.subr.mxu0 0.0
      %987 = vmatpush1.msra.mxu0 0.0
      %988 = vmatprep.subr.mxu0 0.0
      %989 = vmatpush1.msra.mxu0 0.0
      %990 = vmatprep.subr.mxu0 0.0
      %991 = vmatpush1.msra.mxu0 0.0
      %992 = vmatprep.subr.mxu0 0.0
      %993 = vmatpush1.msra.mxu0 0.0
      %994 = vmatprep.subr.mxu0 0.0
      %995 = vmatpush1.msra.mxu0 0.0
      %996 = vmatprep.subr.mxu0 0.0
      %997 = vmatpush1.msra.mxu0 0.0
      %998 = vmatprep.subr.mxu0 0.0
      %999 = vmatpush1.msra.mxu0 0.0
      %1000 = vmatprep.subr.mxu0 0.0
      %1001 = vmatpush1.msra.mxu0 0.0
      %1002 = vmatprep.subr.mxu0 0.0
      %1003 = vmatpush1.msra.mxu0 0.0
      %1004 = vmatprep.subr.mxu0 0.0
      %1005 = vmatpush1.msra.mxu0 0.0
      %1006 = vmatprep.subr.mxu0 0.0
      %1007 = vmatpush1.msra.mxu0 0.0
      %1008 = vmatprep.subr.mxu0 0.0
      %1009 = vmatpush1.msra.mxu0 0.0
      %1010 = vmatprep.subr.mxu0 0.0
      %1011 = vmatpush1.msra.mxu0 0.0
      %1012 = vmatprep.mubr.f32.mxu0 0.0
      %1013 = vmatmul.mubr.f32.gmra.mrb[0].mxu0 %v874
      %v1014 = vpop.f32.mrb[0].mxu0
      %v1015 = vadd.f32 %v211, %v1014
      %v1016 = vpop.f32.mrb[0].mxu0
      %1017 = vmatprep.mubr.f32.mxu0 0.0
      %1018 = vmatmul.mubr.f32.gmra.mrb[0].mxu0 %v877
      %v1019 = vpop.f32.mrb[0].mxu0
      %v1020 = vadd.f32 %v211, %v1019
      %v1021 = vpop.f32.mrb[0].mxu0
      %1022 = vmatprep.mubr.f32.mxu0 0.0
      %1023 = vmatmul.mubr.f32.gmra.mrb[0].mxu0 %v880
      %v1024 = vpop.f32.mrb[0].mxu0
      %v1025 = vadd.f32 %v211, %v1024
      %v1026 = vpop.f32.mrb[0].mxu0
      %1027 = vmatprep.mubr.f32.mxu0 0.0
      %1028 = vmatmul.mubr.f32.gmra.mrb[0].mxu0 %v883
      %v1029 = vpop.f32.mrb[0].mxu0
      %v1030 = vadd.f32 %v211, %v1029
      %v1031 = vpop.f32.mrb[0].mxu0
      %1032 = vmatprep.mubr.f32.mxu0 0.0
      %1033 = vmatmul.mubr.f32.gmra.mrb[0].mxu0 %v886
      %v1034 = vpop.f32.mrb[0].mxu0
      %v1035 = vadd.f32 %v211, %v1034
      %v1036 = vpop.f32.mrb[0].mxu0
      %1037 = vmatprep.mubr.f32.mxu0 0.0
      %1038 = vmatmul.mubr.f32.gmra.mrb[0].mxu0 %v889
      %v1039 = vpop.f32.mrb[0].mxu0
      %v1040 = vadd.f32 %v211, %v1039
      %v1041 = vpop.f32.mrb[0].mxu0
      %1042 = vmatprep.mubr.f32.mxu0 0.0
      %1043 = vmatmul.mubr.f32.gmra.mrb[0].mxu0 %v892
      %v1044 = vpop.f32.mrb[0].mxu0
      %v1045 = vadd.f32 %v211, %v1044
      %v1046 = vpop.f32.mrb[0].mxu0
      %1047 = vmatprep.mubr.f32.mxu0 0.0
      %1048 = vmatmul.mubr.f32.gmra.mrb[0].mxu0 %v895
      %v1049 = vpop.f32.mrb[0].mxu0
      %v1050 = vadd.f32 %v211, %v1049
      %v1051 = vpop.f32.mrb[0].mxu0
      %1052 = vmatprep.mubr.f32.mxu0 0.0
      %1053 = vmatmul.mubr.f32.gmra.mrb[0].mxu0 %v898
      %v1054 = vpop.f32.mrb[0].mxu0
      %v1055 = vadd.f32 %v211, %v1054
      %v1056 = vpop.f32.mrb[0].mxu0
      %1057 = vmatprep.mubr.f32.mxu0 0.0
      %1058 = vmatmul.mubr.f32.gmra.mrb[0].mxu0 %v901
      %v1059 = vpop.f32.mrb[0].mxu0
      %v1060 = vadd.f32 %v211, %v1059
      %v1061 = vpop.f32.mrb[0].mxu0
      %1062 = vmatprep.mubr.f32.mxu0 0.0
      %1063 = vmatmul.mubr.f32.gmra.mrb[0].mxu0 %v904
      %v1064 = vpop.f32.mrb[0].mxu0
      %v1065 = vadd.f32 %v211, %v1064
      %v1066 = vpop.f32.mrb[0].mxu0
      %1067 = vmatprep.mubr.f32.mxu0 0.0
      %1068 = vmatmul.mubr.f32.gmra.mrb[0].mxu0 %v907
      %v1069 = vpop.f32.mrb[0].mxu0
      %v1070 = vadd.f32 %v211, %v1069
      %v1071 = vpop.f32.mrb[0].mxu0
      %1072 = vmatprep.mubr.f32.mxu0 0.0
      %1073 = vmatmul.mubr.f32.gmra.mrb[0].mxu0 %v910
      %v1074 = vpop.f32.mrb[0].mxu0
      %v1075 = vadd.f32 %v211, %v1074
      %v1076 = vpop.f32.mrb[0].mxu0
      %1077 = vmatprep.mubr.f32.mxu0 0.0
      %1078 = vmatmul.mubr.f32.gmra.mrb[0].mxu0 %v913
      %v1079 = vpop.f32.mrb[0].mxu0
      %v1080 = vadd.f32 %v211, %v1079
      %v1081 = vpop.f32.mrb[0].mxu0
      %1082 = vmatprep.mubr.f32.mxu0 0.0
      %1083 = vmatmul.mubr.f32.gmra.mrb[0].mxu0 %v916
      %v1084 = vpop.f32.mrb[0].mxu0
      %v1085 = vadd.f32 %v211, %v1084
      %v1086 = vpop.f32.mrb[0].mxu0
      %1087 = vmatprep.mubr.f32.mxu0 0.0
      %1088 = vmatmul.mubr.f32.gmra.mrb[0].mxu0 %v919
      %v1089 = vpop.f32.mrb[0].mxu0
      %v1090 = vadd.f32 %v211, %v1089
      %v1091 = vpop.f32.mrb[0].mxu0
      %1092 = vmatprep.mubr.f32.mxu0 0.0
      %1093 = vmatmul.mubr.f32.gmra.mrb[0].mxu0 %v922
      %v1094 = vpop.f32.mrb[0].mxu0
      %v1095 = vadd.f32 %v211, %v1094
      %v1096 = vpop.f32.mrb[0].mxu0
      %1097 = vmatprep.mubr.f32.mxu0 0.0
      %1098 = vmatmul.mubr.f32.gmra.mrb[0].mxu0 %v925
      %v1099 = vpop.f32.mrb[0].mxu0
      %v1100 = vadd.f32 %v211, %v1099
      %v1101 = vpop.f32.mrb[0].mxu0
      %1102 = vmatprep.mubr.f32.mxu0 0.0
      %1103 = vmatmul.mubr.f32.gmra.mrb[0].mxu0 %v928
      %v1104 = vpop.f32.mrb[0].mxu0
      %v1105 = vadd.f32 %v211, %v1104
      %v1106 = vpop.f32.mrb[0].mxu0
      %1107 = vmatprep.mubr.f32.mxu0 0.0
      %1108 = vmatmul.mubr.f32.gmra.mrb[0].mxu0 %v931
      %v1109 = vpop.f32.mrb[0].mxu0
      %v1110 = vadd.f32 %v211, %v1109
      %v1111 = vpop.f32.mrb[0].mxu0
      %1112 = vmatprep.mubr.f32.mxu0 0.0
      %1113 = vmatmul.mubr.f32.gmra.mrb[0].mxu0 %v934
      %v1114 = vpop.f32.mrb[0].mxu0
      %v1115 = vadd.f32 %v211, %v1114
      %v1116 = vpop.f32.mrb[0].mxu0
      %1117 = vmatprep.mubr.f32.mxu0 0.0
      %1118 = vmatmul.mubr.f32.gmra.mrb[0].mxu0 %v937
      %v1119 = vpop.f32.mrb[0].mxu0
      %v1120 = vadd.f32 %v211, %v1119
      %v1121 = vpop.f32.mrb[0].mxu0
      %1122 = vmatprep.mubr.f32.mxu0 0.0
      %1123 = vmatmul.mubr.f32.gmra.mrb[0].mxu0 %v940
      %v1124 = vpop.f32.mrb[0].mxu0
      %v1125 = vadd.f32 %v211, %v1124
      %v1126 = vpop.f32.mrb[0].mxu0
      %1127 = vmatprep.mubr.f32.mxu0 0.0
      %1128 = vmatmul.mubr.f32.gmra.mrb[0].mxu0 %v943
      %v1129 = vpop.f32.mrb[0].mxu0
      %v1130 = vadd.f32 %v211, %v1129
      %v1131 = vpop.f32.mrb[0].mxu0
      %1132 = vmatprep.mubr.f32.mxu0 0.0
      %1133 = vmatmul.mubr.f32.gmra.mrb[0].mxu0 %v946
      %v1134 = vpop.f32.mrb[0].mxu0
      %v1135 = vadd.f32 %v211, %v1134
      %v1136 = vpop.f32.mrb[0].mxu0
      %1137 = vdwg.mxu0
      %v1138 = vmax.f32 %v1015, 0.0
      %v1139 = vmax.f32 %v1020, 0.0
      %v1140 = vmax.f32 %v1025, 0.0
      %v1141 = vmax.f32 %v1030, 0.0
      %v1142 = vmax.f32 %v1035, 0.0
      %v1143 = vmax.f32 %v1040, 0.0
      %v1144 = vmax.f32 %v1045, 0.0
      %v1145 = vmax.f32 %v1050, 0.0
      %v1146 = vmax.f32 %v1055, 0.0
      %v1147 = vmax.f32 %v1060, 0.0
      %v1148 = vmax.f32 %v1065, 0.0
      %v1149 = vmax.f32 %v1070, 0.0
      %v1150 = vmax.f32 %v1075, 0.0
      %v1151 = vmax.f32 %v1080, 0.0
      %v1152 = vmax.f32 %v1085, 0.0
      %v1153 = vmax.f32 %v1090, 0.0
      %v1154 = vmax.f32 %v1095, 0.0
      %v1155 = vmax.f32 %v1100, 0.0
      %v1156 = vmax.f32 %v1105, 0.0
      %v1157 = vmax.f32 %v1110, 0.0
      %v1158 = vmax.f32 %v1115, 0.0
      %v1159 = vmax.f32 %v1120, 0.0
      %v1160 = vmax.f32 %v1125, 0.0
      %v1161 = vmax.f32 %v1130, 0.0
      %v1162 = vmax.f32 %v1135, 0.0
      %v1163 = vmax.f32 %v823, %v1138
      %v1164 = vmax.f32 %v824, %v1139
      %v1165 = vmax.f32 %v825, %v1140
      %v1166 = vmax.f32 %v826, %v1141
      %v1167 = vmax.f32 %v827, %v1142
      %v1168 = vmax.f32 %v828, %v1143
      %v1169 = vmax.f32 %v829, %v1144
      %v1170 = vmax.f32 %v830, %v1145
      %v1171 = vmax.f32 %v831, %v1146
      %v1172 = vmax.f32 %v832, %v1147
      %v1173 = vmax.f32 %v833, %v1148
      %v1174 = vmax.f32 %v834, %v1149
      %v1175 = vmax.f32 %v835, %v1150
      %v1176 = vmax.f32 %v836, %v1151
      %v1177 = vmax.f32 %v837, %v1152
      %v1178 = vmax.f32 %v838, %v1153
      %v1179 = vmax.f32 %v839, %v1154
      %v1180 = vmax.f32 %v840, %v1155
      %v1181 = vmax.f32 %v841, %v1156
      %v1182 = vmax.f32 %v842, %v1157
      %v1183 = vmax.f32 %v843, %v1158
      %v1184 = vmax.f32 %v844, %v1159
      %v1185 = vmax.f32 %v845, %v1160
      %v1186 = vmax.f32 %v846, %v1161
      %v1187 = vmax.f32 %v847, %v1162
      %v1188 = vld [vmem:[%s165 + $0x24c] sm:$0xff]
      %v1189 = vld [vmem:[%s165 + $0x254] sm:$0xff]
      %v1190 = vld [vmem:[%s165 + $0x25c] sm:$0xff]
      %v1191 = vld [vmem:[%s165 + $0x264] sm:$0xff]
      %v1192 = vld [vmem:[%s165 + $0x26c] sm:$0xff]
      %v1193 = vld [vmem:[%s165 + $0x274] sm:$0xff]
      %v1194 = vld [vmem:[%s165 + $0x27c] sm:$0xff]
      %v1195 = vld [vmem:[%s165 + $0x284] sm:$0xff]
      %v1196 = vld [vmem:[%s165 + $0x28c] sm:$0xff]
      %v1197 = vld [vmem:[%s165 + $0x294] sm:$0xff]
      %v1198 = vld [vmem:[%s165 + $0x29c] sm:$0xff]
      %v1199 = vld [vmem:[%s165 + $0x2a4] sm:$0xff]
      %v1200 = vld [vmem:[%s165 + $0x2ac] sm:$0xff]
      %v1201 = vld [vmem:[%s165 + $0x2b4] sm:$0xff]
      %v1202 = vld [vmem:[%s165 + $0x2bc] sm:$0xff]
      %v1203 = vld [vmem:[%s165 + $0x2c4] sm:$0xff]
      %v1204 = vld [vmem:[%s165 + $0x2cc] sm:$0xff]
      %v1205 = vld [vmem:[%s165 + $0x2d4] sm:$0xff]
      %v1206 = vld [vmem:[%s165 + $0x2dc] sm:$0xff]
      %v1207 = vld [vmem:[%s165 + $0x2e4] sm:$0xff]
      %v1208 = vld [vmem:[%s165 + $0x2ec] sm:$0xff]
      %v1209 = vld [vmem:[%s165 + $0x2f4] sm:$0xff]
      %v1210 = vld [vmem:[%s165 + $0x2fc] sm:$0xff]
      %v1211 = vld [vmem:[%s165 + $0x304] sm:$0xff]
      %v1212 = vld [vmem:[%s165 + $0x30c] sm:$0xf]
      %v1214 = vsel %vm213, %v1188, 0
      %v1217 = vsel %vm213, %v1189, 0
      %v1220 = vsel %vm213, %v1190, 0
      %v1223 = vsel %vm213, %v1191, 0
      %v1226 = vsel %vm213, %v1192, 0
      %v1229 = vsel %vm213, %v1193, 0
      %v1232 = vsel %vm213, %v1194, 0
      %v1235 = vsel %vm213, %v1195, 0
      %v1238 = vsel %vm213, %v1196, 0
      %v1241 = vsel %vm213, %v1197, 0
      %v1244 = vsel %vm213, %v1198, 0
      %v1247 = vsel %vm213, %v1199, 0
      %v1250 = vsel %vm213, %v1200, 0
      %v1253 = vsel %vm213, %v1201, 0
      %v1256 = vsel %vm213, %v1202, 0
      %v1259 = vsel %vm213, %v1203, 0
      %v1262 = vsel %vm213, %v1204, 0
      %v1265 = vsel %vm213, %v1205, 0
      %v1268 = vsel %vm213, %v1206, 0
      %v1271 = vsel %vm213, %v1207, 0
      %v1274 = vsel %vm213, %v1208, 0
      %v1277 = vsel %vm213, %v1209, 0
      %v1280 = vsel %vm213, %v1210, 0
      %v1283 = vsel %vm213, %v1211, 0
      %v1286 = vsel %vm213, %v1212, 0
      %1288 = vmatprep.subr.mxu0 0.0
      %1289 = vmatpush1.msra.mxu0 %v171
      %1290 = vmatprep.subr.mxu0 0.0
      %1291 = vmatpush1.msra.mxu0 %v172
      %1292 = vmatprep.subr.mxu0 0.0
      %1293 = vmatpush1.msra.mxu0 %v173
      %1294 = vmatprep.subr.mxu0 0.0
      %1295 = vmatpush1.msra.mxu0 %v174
      %1296 = vmatprep.subr.mxu0 0.0
      %1297 = vmatpush1.msra.mxu0 %v175
      %1298 = vmatprep.subr.mxu0 0.0
      %1299 = vmatpush1.msra.mxu0 %v176
      %1300 = vmatprep.subr.mxu0 0.0
      %1301 = vmatpush1.msra.mxu0 %v177
      %1302 = vmatprep.subr.mxu0 0.0
      %1303 = vmatpush1.msra.mxu0 %v178
      %1304 = vmatprep.subr.mxu0 0.0
      %1305 = vmatpush1.msra.mxu0 %v179
      %1306 = vmatprep.subr.mxu0 0.0
      %1307 = vmatpush1.msra.mxu0 %v291
      %1308 = vmatprep.subr.mxu0 0.0
      %1309 = vmatpush1.msra.mxu0 0.0
      %1310 = vmatprep.subr.mxu0 0.0
      %1311 = vmatpush1.msra.mxu0 0.0
      %1312 = vmatprep.subr.mxu0 0.0
      %1313 = vmatpush1.msra.mxu0 0.0
      %1314 = vmatprep.subr.mxu0 0.0
      %1315 = vmatpush1.msra.mxu0 0.0
      %1316 = vmatprep.subr.mxu0 0.0
      %1317 = vmatpush1.msra.mxu0 0.0
      %1318 = vmatprep.subr.mxu0 0.0
      %1319 = vmatpush1.msra.mxu0 0.0
      %1320 = vmatprep.subr.mxu0 0.0
      %1321 = vmatpush1.msra.mxu0 0.0
      %1322 = vmatprep.subr.mxu0 0.0
      %1323 = vmatpush1.msra.mxu0 0.0
      %1324 = vmatprep.subr.mxu0 0.0
      %1325 = vmatpush1.msra.mxu0 0.0
      %1326 = vmatprep.subr.mxu0 0.0
      %1327 = vmatpush1.msra.mxu0 0.0
      %1328 = vmatprep.subr.mxu0 0.0
      %1329 = vmatpush1.msra.mxu0 0.0
      %1330 = vmatprep.subr.mxu0 0.0
      %1331 = vmatpush1.msra.mxu0 0.0
      %1332 = vmatprep.subr.mxu0 0.0
      %1333 = vmatpush1.msra.mxu0 0.0
      %1334 = vmatprep.subr.mxu0 0.0
      %1335 = vmatpush1.msra.mxu0 0.0
      %1336 = vmatprep.subr.mxu0 0.0
      %1337 = vmatpush1.msra.mxu0 0.0
      %1338 = vmatprep.subr.mxu0 0.0
      %1339 = vmatpush1.msra.mxu0 0.0
      %1340 = vmatprep.subr.mxu0 0.0
      %1341 = vmatpush1.msra.mxu0 0.0
      %1342 = vmatprep.subr.mxu0 0.0
      %1343 = vmatpush1.msra.mxu0 0.0
      %1344 = vmatprep.subr.mxu0 0.0
      %1345 = vmatpush1.msra.mxu0 0.0
      %1346 = vmatprep.subr.mxu0 0.0
      %1347 = vmatpush1.msra.mxu0 0.0
      %1348 = vmatprep.subr.mxu0 0.0
      %1349 = vmatpush1.msra.mxu0 0.0
      %1350 = vmatprep.subr.mxu0 0.0
      %1351 = vmatpush1.msra.mxu0 0.0
      %1352 = vmatprep.mubr.f32.mxu0 0.0
      %1353 = vmatmul.mubr.f32.gmra.mrb[0].mxu0 %v1214
      %v1354 = vpop.f32.mrb[0].mxu0
      %v1355 = vadd.f32 %v211, %v1354
      %v1356 = vpop.f32.mrb[0].mxu0
      %1357 = vmatprep.mubr.f32.mxu0 0.0
      %1358 = vmatmul.mubr.f32.gmra.mrb[0].mxu0 %v1217
      %v1359 = vpop.f32.mrb[0].mxu0
      %v1360 = vadd.f32 %v211, %v1359
      %v1361 = vpop.f32.mrb[0].mxu0
      %1362 = vmatprep.mubr.f32.mxu0 0.0
      %1363 = vmatmul.mubr.f32.gmra.mrb[0].mxu0 %v1220
      %v1364 = vpop.f32.mrb[0].mxu0
      %v1365 = vadd.f32 %v211, %v1364
      %v1366 = vpop.f32.mrb[0].mxu0
      %1367 = vmatprep.mubr.f32.mxu0 0.0
      %1368 = vmatmul.mubr.f32.gmra.mrb[0].mxu0 %v1223
      %v1369 = vpop.f32.mrb[0].mxu0
      %v1370 = vadd.f32 %v211, %v1369
      %v1371 = vpop.f32.mrb[0].mxu0
      %1372 = vmatprep.mubr.f32.mxu0 0.0
      %1373 = vmatmul.mubr.f32.gmra.mrb[0].mxu0 %v1226
      %v1374 = vpop.f32.mrb[0].mxu0
      %v1375 = vadd.f32 %v211, %v1374
      %v1376 = vpop.f32.mrb[0].mxu0
      %1377 = vmatprep.mubr.f32.mxu0 0.0
      %1378 = vmatmul.mubr.f32.gmra.mrb[0].mxu0 %v1229
      %v1379 = vpop.f32.mrb[0].mxu0
      %v1380 = vadd.f32 %v211, %v1379
      %v1381 = vpop.f32.mrb[0].mxu0
      %1382 = vmatprep.mubr.f32.mxu0 0.0
      %1383 = vmatmul.mubr.f32.gmra.mrb[0].mxu0 %v1232
      %v1384 = vpop.f32.mrb[0].mxu0
      %v1385 = vadd.f32 %v211, %v1384
      %v1386 = vpop.f32.mrb[0].mxu0
      %1387 = vmatprep.mubr.f32.mxu0 0.0
      %1388 = vmatmul.mubr.f32.gmra.mrb[0].mxu0 %v1235
      %v1389 = vpop.f32.mrb[0].mxu0
      %v1390 = vadd.f32 %v211, %v1389
      %v1391 = vpop.f32.mrb[0].mxu0
      %1392 = vmatprep.mubr.f32.mxu0 0.0
      %1393 = vmatmul.mubr.f32.gmra.mrb[0].mxu0 %v1238
      %v1394 = vpop.f32.mrb[0].mxu0
      %v1395 = vadd.f32 %v211, %v1394
      %v1396 = vpop.f32.mrb[0].mxu0
      %1397 = vmatprep.mubr.f32.mxu0 0.0
      %1398 = vmatmul.mubr.f32.gmra.mrb[0].mxu0 %v1241
      %v1399 = vpop.f32.mrb[0].mxu0
      %v1400 = vadd.f32 %v211, %v1399
      %v1401 = vpop.f32.mrb[0].mxu0
      %1402 = vmatprep.mubr.f32.mxu0 0.0
      %1403 = vmatmul.mubr.f32.gmra.mrb[0].mxu0 %v1244
      %v1404 = vpop.f32.mrb[0].mxu0
      %v1405 = vadd.f32 %v211, %v1404
      %v1406 = vpop.f32.mrb[0].mxu0
      %1407 = vmatprep.mubr.f32.mxu0 0.0
      %1408 = vmatmul.mubr.f32.gmra.mrb[0].mxu0 %v1247
      %v1409 = vpop.f32.mrb[0].mxu0
      %v1410 = vadd.f32 %v211, %v1409
      %v1411 = vpop.f32.mrb[0].mxu0
      %1412 = vmatprep.mubr.f32.mxu0 0.0
      %1413 = vmatmul.mubr.f32.gmra.mrb[0].mxu0 %v1250
      %v1414 = vpop.f32.mrb[0].mxu0
      %v1415 = vadd.f32 %v211, %v1414
      %v1416 = vpop.f32.mrb[0].mxu0
      %1417 = vmatprep.mubr.f32.mxu0 0.0
      %1418 = vmatmul.mubr.f32.gmra.mrb[0].mxu0 %v1253
      %v1419 = vpop.f32.mrb[0].mxu0
      %v1420 = vadd.f32 %v211, %v1419
      %v1421 = vpop.f32.mrb[0].mxu0
      %1422 = vmatprep.mubr.f32.mxu0 0.0
      %1423 = vmatmul.mubr.f32.gmra.mrb[0].mxu0 %v1256
      %v1424 = vpop.f32.mrb[0].mxu0
      %v1425 = vadd.f32 %v211, %v1424
      %v1426 = vpop.f32.mrb[0].mxu0
      %1427 = vmatprep.mubr.f32.mxu0 0.0
      %1428 = vmatmul.mubr.f32.gmra.mrb[0].mxu0 %v1259
      %v1429 = vpop.f32.mrb[0].mxu0
      %v1430 = vadd.f32 %v211, %v1429
      %v1431 = vpop.f32.mrb[0].mxu0
      %1432 = vmatprep.mubr.f32.mxu0 0.0
      %1433 = vmatmul.mubr.f32.gmra.mrb[0].mxu0 %v1262
      %v1434 = vpop.f32.mrb[0].mxu0
      %v1435 = vadd.f32 %v211, %v1434
      %v1436 = vpop.f32.mrb[0].mxu0
      %1437 = vmatprep.mubr.f32.mxu0 0.0
      %1438 = vmatmul.mubr.f32.gmra.mrb[0].mxu0 %v1265
      %v1439 = vpop.f32.mrb[0].mxu0
      %v1440 = vadd.f32 %v211, %v1439
      %v1441 = vpop.f32.mrb[0].mxu0
      %1442 = vmatprep.mubr.f32.mxu0 0.0
      %1443 = vmatmul.mubr.f32.gmra.mrb[0].mxu0 %v1268
      %v1444 = vpop.f32.mrb[0].mxu0
      %v1445 = vadd.f32 %v211, %v1444
      %v1446 = vpop.f32.mrb[0].mxu0
      %1447 = vmatprep.mubr.f32.mxu0 0.0
      %1448 = vmatmul.mubr.f32.gmra.mrb[0].mxu0 %v1271
      %v1449 = vpop.f32.mrb[0].mxu0
      %v1450 = vadd.f32 %v211, %v1449
      %v1451 = vpop.f32.mrb[0].mxu0
      %1452 = vmatprep.mubr.f32.mxu0 0.0
      %1453 = vmatmul.mubr.f32.gmra.mrb[0].mxu0 %v1274
      %v1454 = vpop.f32.mrb[0].mxu0
      %v1455 = vadd.f32 %v211, %v1454
      %v1456 = vpop.f32.mrb[0].mxu0
      %1457 = vmatprep.mubr.f32.mxu0 0.0
      %1458 = vmatmul.mubr.f32.gmra.mrb[0].mxu0 %v1277
      %v1459 = vpop.f32.mrb[0].mxu0
      %v1460 = vadd.f32 %v211, %v1459
      %v1461 = vpop.f32.mrb[0].mxu0
      %1462 = vmatprep.mubr.f32.mxu0 0.0
      %1463 = vmatmul.mubr.f32.gmra.mrb[0].mxu0 %v1280
      %v1464 = vpop.f32.mrb[0].mxu0
      %v1465 = vadd.f32 %v211, %v1464
      %v1466 = vpop.f32.mrb[0].mxu0
      %1467 = vmatprep.mubr.f32.mxu0 0.0
      %1468 = vmatmul.mubr.f32.gmra.mrb[0].mxu0 %v1283
      %v1469 = vpop.f32.mrb[0].mxu0
      %v1470 = vadd.f32 %v211, %v1469
      %v1471 = vpop.f32.mrb[0].mxu0
      %1472 = vmatprep.mubr.f32.mxu0 0.0
      %1473 = vmatmul.mubr.f32.gmra.mrb[0].mxu0 %v1286
      %v1474 = vpop.f32.mrb[0].mxu0
      %v1475 = vadd.f32 %v211, %v1474
      %v1476 = vpop.f32.mrb[0].mxu0
      %1477 = vdwg.mxu0
      %v1478 = vmax.f32 %v1355, 0.0
      %v1479 = vmax.f32 %v1360, 0.0
      %v1480 = vmax.f32 %v1365, 0.0
      %v1481 = vmax.f32 %v1370, 0.0
      %v1482 = vmax.f32 %v1375, 0.0
      %v1483 = vmax.f32 %v1380, 0.0
      %v1484 = vmax.f32 %v1385, 0.0
      %v1485 = vmax.f32 %v1390, 0.0
      %v1486 = vmax.f32 %v1395, 0.0
      %v1487 = vmax.f32 %v1400, 0.0
      %v1488 = vmax.f32 %v1405, 0.0
      %v1489 = vmax.f32 %v1410, 0.0
      %v1490 = vmax.f32 %v1415, 0.0
      %v1491 = vmax.f32 %v1420, 0.0
      %v1492 = vmax.f32 %v1425, 0.0
      %v1493 = vmax.f32 %v1430, 0.0
      %v1494 = vmax.f32 %v1435, 0.0
      %v1495 = vmax.f32 %v1440, 0.0
      %v1496 = vmax.f32 %v1445, 0.0
      %v1497 = vmax.f32 %v1450, 0.0
      %v1498 = vmax.f32 %v1455, 0.0
      %v1499 = vmax.f32 %v1460, 0.0
      %v1500 = vmax.f32 %v1465, 0.0
      %v1501 = vmax.f32 %v1470, 0.0
      %v1502 = vmax.f32 %v1475, 0.0
      %v1503 = vmax.f32 %v1163, %v1478
      %v1504 = vmax.f32 %v1164, %v1479
      %v1505 = vmax.f32 %v1165, %v1480
      %v1506 = vmax.f32 %v1166, %v1481
      %v1507 = vmax.f32 %v1167, %v1482
      %v1508 = vmax.f32 %v1168, %v1483
      %v1509 = vmax.f32 %v1169, %v1484
      %v1510 = vmax.f32 %v1170, %v1485
      %v1511 = vmax.f32 %v1171, %v1486
      %v1512 = vmax.f32 %v1172, %v1487
      %v1513 = vmax.f32 %v1173, %v1488
      %v1514 = vmax.f32 %v1174, %v1489
      %v1515 = vmax.f32 %v1175, %v1490
      %v1516 = vmax.f32 %v1176, %v1491
      %v1517 = vmax.f32 %v1177, %v1492
      %v1518 = vmax.f32 %v1178, %v1493
      %v1519 = vmax.f32 %v1179, %v1494
      %v1520 = vmax.f32 %v1180, %v1495
      %v1521 = vmax.f32 %v1181, %v1496
      %v1522 = vmax.f32 %v1182, %v1497
      %v1523 = vmax.f32 %v1183, %v1498
      %v1524 = vmax.f32 %v1184, %v1499
      %v1525 = vmax.f32 %v1185, %v1500
      %v1526 = vmax.f32 %v1186, %v1501
      %v1527 = vmax.f32 %v1187, %v1502
      %1528 = vst [vmem:[%s170] sm:$0xff] %v1503
      %1529 = vst [vmem:[%s170 + $0x8] sm:$0xff] %v1504
      %1530 = vst [vmem:[%s170 + $0x10] sm:$0xff] %v1505
      %1531 = vst [vmem:[%s170 + $0x18] sm:$0xff] %v1506
      %1532 = vst [vmem:[%s170 + $0x20] sm:$0xff] %v1507
      %1533 = vst [vmem:[%s170 + $0x28] sm:$0xff] %v1508
      %1534 = vst [vmem:[%s170 + $0x30] sm:$0xff] %v1509
      %1535 = vst [vmem:[%s170 + $0x38] sm:$0xff] %v1510
      %1536 = vst [vmem:[%s170 + $0x40] sm:$0xff] %v1511
      %1537 = vst [vmem:[%s170 + $0x48] sm:$0xff] %v1512
      %1538 = vst [vmem:[%s170 + $0x50] sm:$0xff] %v1513
      %1539 = vst [vmem:[%s170 + $0x58] sm:$0xff] %v1514
      %1540 = vst [vmem:[%s170 + $0x60] sm:$0xff] %v1515
      %1541 = vst [vmem:[%s170 + $0x68] sm:$0xff] %v1516
      %1542 = vst [vmem:[%s170 + $0x70] sm:$0xff] %v1517
      %1543 = vst [vmem:[%s170 + $0x78] sm:$0xff] %v1518
      %1544 = vst [vmem:[%s170 + $0x80] sm:$0xff] %v1519
      %1545 = vst [vmem:[%s170 + $0x88] sm:$0xff] %v1520
      %1546 = vst [vmem:[%s170 + $0x90] sm:$0xff] %v1521
      %1547 = vst [vmem:[%s170 + $0x98] sm:$0xff] %v1522
      %1548 = vst [vmem:[%s170 + $0xa0] sm:$0xff] %v1523
      %1549 = vst [vmem:[%s170 + $0xa8] sm:$0xff] %v1524
      %1550 = vst [vmem:[%s170 + $0xb0] sm:$0xff] %v1525
      %1551 = vst [vmem:[%s170 + $0xb8] sm:$0xff] %v1526
      %1552 = vst [vmem:[%s170 + $0xc0] sm:$0xf] %v1527
      %p1553 = scmp.lt.s32.totalorder %s14, 1
      %s1554 = scalar_select %p1553, %s14, 1
      %s1555 = smul.addr %s1554, 25
      %s1556 = smul.addr %s1555, 8
      %s1557 = scalar_lea.vmem %s3, %s1556
      // Predicated region
      $region33: #{net_forward.3} parent=31 // pred_check
        %p1558 = pneg %p100
      $region34: #{net_forward.3} parent=31 // pred_check_branch
        %1560 = sbr.rel (%p1558) target = $region36
      $region35: #{net_forward.3} parent=31 // pred_region
        _
      $region36: #{net_forward.3} parent=31 // pred_fallthru
        _
    $region32: #{net_forward.3} parent=5 // pred_fallthru
      _
    %p1561 = scmp.le.s32.totalorder 2, %s9
    // Predicated region
    $region37: #{net_forward.3} parent=5 // pred_check
      %p1562 = pneg %p1561
    $region38: #{net_forward.3} parent=5 // pred_check_branch
      %1564 = sbr.rel (%p1562) target = $region40
    $region39: #{net_forward.3} parent=5 // pred_region
      %s1565 = ssub.s32 %s9, 2
      // Predicated region
      $region41: #{net_forward.3} parent=39 // pred_check
        %p1566 = pneg %p106
      $region42: #{net_forward.3} parent=39 // pred_check_branch
        %1568 = sbr.rel (%p1566) target = $region44
      $region43: #{net_forward.3} parent=39 // pred_region
        %p1569 = scmp.lt.s32.totalorder %s15, 1
        %s1570 = scalar_select %p1569, %s15, 1
        %s1571 = smul.addr %s1570, 25
        %s1572 = smul.addr %s1571, 8
        %s1573 = scalar_lea.vmem %s3, %s1572
      $region44: #{net_forward.3} parent=39 // pred_fallthru
        _
    $region40: #{net_forward.3} parent=5 // pred_fallthru
      _
  $region6: #{net_forward.3} parent=0 // loop_footer
    %s13 = sadd.s32 1, %s9
  $region7: #{net_forward.3} parent=0 // loop_footer_branch
    %8 = sbr.rel target = $region3
  $region8: #{net_forward.3} parent=0 // loop_exit
    _

// kernel: net_forward.4
$region0: #{net_forward.4}
  #allocation0 [shape = 'u32[]', space=smem, size = 0x4, offset = 0x4, fixed_abs, tag = 'smem constant byte address 0x4 - core index']
  #allocation1 [shape = 'u32[144,128]{1,0:T(1,128)}', space=vmem, size = 0x12000, scoped, tag = 'internal scratch']
  %s0 = inlined_call_operand.vmem [shape: f32[2,100,500], index: 0, kind: input, shape index: {}]
  %s1 = inlined_call_operand.vmem [shape: f32[500,128], index: 1, kind: input, shape index: {}]
  %s2 = inlined_call_operand.vmem [shape: f32[1,128], index: 2, kind: input, shape index: {}]
  %s3 = inlined_call_operand.vmem [shape: f32[2,25,128], index: 3, kind: output, shape index: {}]
  %s4 = sld [smem:[#allocation0]]
  $region45: #{net_forward.4} parent=0
    _
  %s6 = ssub.s32 1, %s4
  %s7 = scalar_select 0, %s6, %s4
  loop: start=0, step=1, limit=4
  $region2: #{net_forward.4} parent=0 // loop_pre_header
    _
  $region3: #{net_forward.4} parent=0 // loop_header
    %s9 = sphi 0, %s13
    %p10 = scmp.ge.s32.totalorder %s9, 4
    %s19 = sphi 0, %s21
    %s22 = sphi 0, %s19
    %s23 = sphi 0, %s22
    %s39 = sphi 0, %s23
    %s43 = sphi 0, %s43
    %s45 = sphi 0, %s43
    %s46 = sphi 0, %s45
    %s60 = sphi 0, %s46
    %s64 = sphi 0, %s64
    %s66 = sphi 0, %s64
    %s67 = sphi 0, %s66
    %s81 = sphi 0, %s67
    %s87 = sphi 0, %s89
    %s90 = sphi 0, %s87
    %s91 = sphi 0, %s90
    %s107 = sphi 0, %s91
  $region4: #{net_forward.4} parent=0 // loop_header_branch
    %12 = sbr.rel (%p10) target = $region8
  $region5: #{net_forward.4} parent=0 // loop_body
    %s14 = ssub.s32 %s9, 1
    %s15 = ssub.s32 %s9, 2
    %s16 = sadd.s32 %s9, 1
    %s17 = ssub.s32 %s9, %s16
    %p18 = scmp.eq.s32.totalorder %s17, 0
    %s20 = sadd.s32 %s19, 1
    %s21 = scalar_select %p18, %s19, %s20
    %p24 = pneg %p18
    %p25 = scmp.eq.s32.totalorder %s9, 1
    %p26 = por %p24, %p25
    %p27 = scmp.ne.s32.totalorder %s19, %s22
    %p28 = scmp.eq.s32.totalorder %s9, 0
    %p29 = por %p27, %p28
    %p30 = scmp.ne.s32.totalorder %s19, %s22
    %p31 = scmp.eq.s32.totalorder %s14, 1
    %p32 = por %p30, %p31
    %p33 = scmp.ne.s32.totalorder %s22, %s23
    %p34 = scmp.eq.s32.totalorder %s14, 0
    %p35 = por %p33, %p34
    %p36 = scmp.ne.s32.totalorder %s22, %s23
    %p37 = scmp.eq.s32.totalorder %s15, 1
    %p38 = por %p36, %p37
    %p40 = scmp.ne.s32.totalorder %s23, %s39
    %p41 = scmp.eq.s32.totalorder %s15, 0
    %p42 = por %p40, %p41
    %s44 = sadd.s32 %s43, 1
    %p47 = scmp.eq.s32.totalorder %s9, 1
    %p48 = scmp.ne.s32.totalorder %s43, %s45
    %p49 = scmp.eq.s32.totalorder %s9, 0
    %p50 = por %p48, %p49
    %p51 = scmp.ne.s32.totalorder %s43, %s45
    %p52 = scmp.eq.s32.totalorder %s14, 1
    %p53 = por %p51, %p52
    %p54 = scmp.ne.s32.totalorder %s45, %s46
    %p55 = scmp.eq.s32.totalorder %s14, 0
    %p56 = por %p54, %p55
    %p57 = scmp.ne.s32.totalorder %s45, %s46
    %p58 = scmp.eq.s32.totalorder %s15, 1
    %p59 = por %p57, %p58
    %p61 = scmp.ne.s32.totalorder %s46, %s60
    %p62 = scmp.eq.s32.totalorder %s15, 0
    %p63 = por %p61, %p62
    %s65 = sadd.s32 %s64, 1
    %p68 = scmp.eq.s32.totalorder %s9, 1
    %p69 = scmp.ne.s32.totalorder %s64, %s66
    %p70 = scmp.eq.s32.totalorder %s9, 0
    %p71 = por %p69, %p70
    %p72 = scmp.ne.s32.totalorder %s64, %s66
    %p73 = scmp.eq.s32.totalorder %s14, 1
    %p74 = por %p72, %p73
    %p75 = scmp.ne.s32.totalorder %s66, %s67
    %p76 = scmp.eq.s32.totalorder %s14, 0
    %p77 = por %p75, %p76
    %p78 = scmp.ne.s32.totalorder %s66, %s67
    %p79 = scmp.eq.s32.totalorder %s15, 1
    %p80 = por %p78, %p79
    %p82 = scmp.ne.s32.totalorder %s67, %s81
    %p83 = scmp.eq.s32.totalorder %s15, 0
    %p84 = por %p82, %p83
    %s85 = ssub.s32 %s9, %s16
    %p86 = scmp.eq.s32.totalorder %s85, 0
    %s88 = sadd.s32 %s87, 1
    %s89 = scalar_select %p86, %s87, %s88
    %p92 = pneg %p86
    %p93 = scmp.eq.s32.totalorder %s9, 1
    %p94 = por %p92, %p93
    %p95 = scmp.ne.s32.totalorder %s87, %s90
    %p96 = scmp.eq.s32.totalorder %s9, 0
    %p97 = por %p95, %p96
    %p98 = scmp.ne.s32.totalorder %s87, %s90
    %p99 = scmp.eq.s32.totalorder %s14, 1
    %p100 = por %p98, %p99
    %p101 = scmp.ne.s32.totalorder %s90, %s91
    %p102 = scmp.eq.s32.totalorder %s14, 0
    %p103 = por %p101, %p102
    %p104 = scmp.ne.s32.totalorder %s90, %s91
    %p105 = scmp.eq.s32.totalorder %s15, 1
    %p106 = por %p104, %p105
    %p108 = scmp.ne.s32.totalorder %s91, %s107
    %p109 = scmp.eq.s32.totalorder %s15, 0
    %p110 = por %p108, %p109
    %p111 = scmp.le.s32.totalorder 1, %s9
    %p112 = scmp.lt.s32.totalorder %s9, 3
    %p113 = pnand %p111, %p112
    %p114 = pneg %p113
    // Predicated region
    $region9: #{net_forward.4} parent=5 // pred_check
      _
    $region10: #{net_forward.4} parent=5 // pred_check_branch
      %116 = sbr.rel (%p113) target = $region12
    $region11: #{net_forward.4} parent=5 // pred_region
      %s117 = ssub.s32 %s9, 1
      // Predicated region
      $region13: #{net_forward.4} parent=11 // pred_check
        %p118 = pneg %p56
      $region14: #{net_forward.4} parent=11 // pred_check_branch
        %120 = sbr.rel (%p118) target = $region16
      $region15: #{net_forward.4} parent=11 // pred_region
        _
      $region16: #{net_forward.4} parent=11 // pred_fallthru
        _
      // Predicated region
      $region17: #{net_forward.4} parent=11 // pred_check
        %p121 = pneg %p77
      $region18: #{net_forward.4} parent=11 // pred_check_branch
        %123 = sbr.rel (%p121) target = $region20
      $region19: #{net_forward.4} parent=11 // pred_region
        _
      $region20: #{net_forward.4} parent=11 // pred_fallthru
        _
    $region12: #{net_forward.4} parent=5 // pred_fallthru
      _
    %p124 = scmp.lt.s32.totalorder %s9, 2
    // Predicated region
    $region21: #{net_forward.4} parent=5 // pred_check
      %p125 = pneg %p124
    $region22: #{net_forward.4} parent=5 // pred_check_branch
      %127 = sbr.rel (%p125) target = $region24
    $region23: #{net_forward.4} parent=5 // pred_region
      // Predicated region
      $region25: #{net_forward.4} parent=23 // pred_check
        %p128 = pneg %p29
      $region26: #{net_forward.4} parent=23 // pred_check_branch
        %130 = sbr.rel (%p128) target = $region28
      $region27: #{net_forward.4} parent=23 // pred_region
        %p131 = scmp.lt.s32.totalorder %s9, 1
        %s132 = scalar_select %p131, %s9, 1
        %s133 = smul.addr %s132, 52
        %s134 = smul.addr %s133, 8
        %s135 = scalar_lea.vmem %s0, %s134
      $region28: #{net_forward.4} parent=23 // pred_fallthru
        _
    $region24: #{net_forward.4} parent=5 // pred_fallthru
      _
    %p136 = scmp.le.s32.totalorder 1, %s9
    %p137 = scmp.lt.s32.totalorder %s9, 3
    %p138 = pnand %p136, %p137
    %p139 = pneg %p138
    // Predicated region
    $region29: #{net_forward.4} parent=5 // pred_check
      _
    $region30: #{net_forward.4} parent=5 // pred_check_branch
      %141 = sbr.rel (%p138) target = $region32
    $region31: #{net_forward.4} parent=5 // pred_region
      %s142 = ssub.s32 %s9, 1
      %p143 = scmp.lt.s32.totalorder %s14, 1
      %s144 = scalar_select %p143, %s14, 1
      %s145 = smul.addr %s144, 52
      %s146 = smul.addr %s145, 8
      %s147 = scalar_lea.vmem %s0, %s146
      %p148 = pneg %p35
      %p149 = pneg %p32
      %p150 = pneg %p56
      %p151 = pneg %p53
      %p152 = pneg %p77
      %p153 = pneg %p74
      %p154 = pneg %p103
      %p155 = pneg %p100
      %p156 = scmp.lt.s32.totalorder %s14, 1
      %s157 = scalar_select %p156, %s14, 1
      %s158 = smul.addr %s157, 4
      %s159 = smul.addr %s158, 8
      %s160 = scalar_lea.vmem %s3, %s159
      %p161 = scmp.lt.s32.totalorder %s14, 1
      %s162 = scalar_select %p161, %s14, 1
      %s163 = smul.addr %s162, 52
      %s164 = smul.addr %s163, 8
      %s165 = scalar_lea.vmem %s0, %s164
      %p166 = scmp.lt.s32.totalorder %s14, 1
      %s167 = scalar_select %p166, %s14, 1
      %s168 = smul.addr %s167, 4
      %s169 = smul.addr %s168, 8
      %s170 = scalar_lea.vmem %s3, %s169
      %v171 = vld [vmem:[%s1] sm:$0xff]
      %v172 = vld [vmem:[%s1 + $0x8] sm:$0xff]
      %v173 = vld [vmem:[%s1 + $0x10] sm:$0xff]
      %v174 = vld [vmem:[%s1 + $0x18] sm:$0xff]
      %v175 = vld [vmem:[%s1 + $0x20] sm:$0xff]
      %v176 = vld [vmem:[%s1 + $0x28] sm:$0xff]
      %v177 = vld [vmem:[%s1 + $0x30] sm:$0xff]
      %v178 = vld [vmem:[%s1 + $0x38] sm:$0xff]
      %v179 = vld [vmem:[%s1 + $0x40] sm:$0xff]
      %v180 = vld [vmem:[%s1 + $0x48] sm:$0xff]
      %v181 = vld [vmem:[%s1 + $0x50] sm:$0xff]
      %v182 = vld [vmem:[%s1 + $0x58] sm:$0xff]
      %v183 = vld [vmem:[%s1 + $0x60] sm:$0xff]
      %v184 = vld [vmem:[%s1 + $0x68] sm:$0xff]
      %v185 = vld [vmem:[%s1 + $0x70] sm:$0xff]
      %v186 = vld [vmem:[%s1 + $0x78] sm:$0xff]
      %v187 = vld [vmem:[%s1 + $0x80] sm:$0xff]
      %v188 = vld [vmem:[%s1 + $0x88] sm:$0xff]
      %v189 = vld [vmem:[%s1 + $0x90] sm:$0xff]
      %v190 = vld [vmem:[%s1 + $0x98] sm:$0xff]
      %v191 = vld [vmem:[%s1 + $0xa0] sm:$0xff]
      %v192 = vld [vmem:[%s1 + $0xa8] sm:$0xff]
      %v193 = vld [vmem:[%s1 + $0xb0] sm:$0xff]
      %v194 = vld [vmem:[%s1 + $0xb8] sm:$0xff]
      %v195 = vld [vmem:[%s1 + $0xc0] sm:$0xff]
      %v196 = vld [vmem:[%s1 + $0xc8] sm:$0xff]
      %v197 = vld [vmem:[%s1 + $0xd0] sm:$0xff]
      %v198 = vld [vmem:[%s1 + $0xd8] sm:$0xff]
      %v199 = vld [vmem:[%s1 + $0xe0] sm:$0xff]
      %v200 = vld [vmem:[%s1 + $0xe8] sm:$0xff]
      %v201 = vld [vmem:[%s1 + $0xf0] sm:$0xff]
      %v202 = vld [vmem:[%s1 + $0xf8] sm:$0xff]
      %v203 = vld [vmem:[%s1 + $0x100] sm:$0xff]
      %v204 = vld [vmem:[%s1 + $0x108] sm:$0xff]
      %v205 = vld [vmem:[%s1 + $0x110] sm:$0xff]
      %v206 = vld [vmem:[%s1 + $0x118] sm:$0xff]
      %v207 = vld [vmem:[%s1 + $0x120] sm:$0xff]
      %v208 = vld [vmem:[%s1 + $0x128] sm:$0xff]
      %v209 = vld [vmem:[%s1 + $0x130] sm:$0xff]
      %v210 = vld [vmem:[%s1 + $0x138] sm:$0xff]
      %v211 = vld [vmem:[%s1 + $0x140] sm:$0xff]
      %v212 = vld [vmem:[%s1 + $0x148] sm:$0xff]
      %v213 = vld [vmem:[%s1 + $0x150] sm:$0xff]
      %v214 = vld [vmem:[%s1 + $0x158] sm:$0xff]
      %v215 = vld [vmem:[%s1 + $0x160] sm:$0xff]
      %v216 = vld [vmem:[%s1 + $0x168] sm:$0xff]
      %v217 = vld [vmem:[%s1 + $0x170] sm:$0xff]
      %v218 = vld [vmem:[%s1 + $0x178] sm:$0xff]
      %v219 = vld [vmem:[%s1 + $0x180] sm:$0xff]
      %v220 = vld [vmem:[%s1 + $0x188] sm:$0xff]
      %v221 = vld [vmem:[%s1 + $0x190] sm:$0xff]
      %v222 = vld [vmem:[%s1 + $0x198] sm:$0xff]
      %v223 = vld [vmem:[%s1 + $0x1a0] sm:$0xff]
      %v224 = vld [vmem:[%s1 + $0x1a8] sm:$0xff]
      %v225 = vld [vmem:[%s1 + $0x1b0] sm:$0xff]
      %v226 = vld [vmem:[%s1 + $0x1b8] sm:$0xff]
      %v227 = vld [vmem:[%s1 + $0x1c0] sm:$0xff]
      %v228 = vld [vmem:[%s1 + $0x1c8] sm:$0xff]
      %v229 = vld [vmem:[%s1 + $0x1d0] sm:$0xff]
      %v230 = vld [vmem:[%s1 + $0x1d8] sm:$0xff]
      %v231 = vld [vmem:[%s1 + $0x1e0] sm:$0xff]
      %v232 = vld [vmem:[%s1 + $0x1e8] sm:$0xff]
      %v233 = vld [vmem:[%s1 + $0x1f0] sm:$0xf]
      %v234 = vld [vmem:[%s2] sm:$0x1]
      %v235 = vld [vmem:[%s165] sm:$0xff]
      %v236 = vld [vmem:[%s165 + $0x8] sm:$0xff]
      %v237 = vld [vmem:[%s165 + $0x10] sm:$0xff]
      %v238 = vld [vmem:[%s165 + $0x18] sm:$0xff]
      %v239 = vld [vmem:[%s165 + $0x20] sm:$0xff]
      %v240 = vld [vmem:[%s165 + $0x28] sm:$0xff]
      %v241 = vld [vmem:[%s165 + $0x30] sm:$0xff]
      %v242 = vld [vmem:[%s165 + $0x38] sm:$0xff]
      %v243 = vld [vmem:[%s165 + $0x40] sm:$0xff]
      %v244 = vld [vmem:[%s165 + $0x48] sm:$0xff]
      %v245 = vld [vmem:[%s165 + $0x50] sm:$0xff]
      %v246 = vld [vmem:[%s165 + $0x58] sm:$0xff]
      %v247 = vld [vmem:[%s165 + $0x60] sm:$0x1]
      %v248 = vld [vmem:[%s165 + $0x68] sm:$0x1]
      %v249 = vld [vmem:[%s165 + $0x70] sm:$0x1]
      %v250 = vld [vmem:[%s165 + $0x78] sm:$0x1]
      %v252 = vlaneseq
      %v253 = vshrl.u32 %v252, 7
      %v254 = vsub.s32 0, %v253
      %v255 = vrot.slane %v234, %v254
      %vm257 = vcmask 949248
      %v259 = vsel %vm257, %v238, 0
      %v262 = vsel %vm257, %v242, 0
      %v265 = vsel %vm257, %v246, 0
      %v268 = vsel %vm257, %v250, 0
      %vm270 = vcmask 1043456
      %v272 = vsel %vm270, %v233, 0
      %274 = vmatprep.subr.mxu0 0.0
      %275 = vmatpush1.msra.mxu0 %v171
      %276 = vmatprep.subr.mxu0 0.0
      %277 = vmatpush1.msra.mxu0 %v172
      %278 = vmatprep.subr.mxu0 0.0
      %279 = vmatpush1.msra.mxu0 %v173
      %280 = vmatprep.subr.mxu0 0.0
      %281 = vmatpush1.msra.mxu0 %v174
      %282 = vmatprep.subr.mxu0 0.0
      %283 = vmatpush1.msra.mxu0 %v175
      %284 = vmatprep.subr.mxu0 0.0
      %285 = vmatpush1.msra.mxu0 %v176
      %286 = vmatprep.subr.mxu0 0.0
      %287 = vmatpush1.msra.mxu0 %v177
      %288 = vmatprep.subr.mxu0 0.0
      %289 = vmatpush1.msra.mxu0 %v178
      %290 = vmatprep.subr.mxu0 0.0
      %291 = vmatpush1.msra.mxu0 %v179
      %292 = vmatprep.subr.mxu0 0.0
      %293 = vmatpush1.msra.mxu0 %v180
      %294 = vmatprep.subr.mxu0 0.0
      %295 = vmatpush1.msra.mxu0 %v181
      %296 = vmatprep.subr.mxu0 0.0
      %297 = vmatpush1.msra.mxu0 %v182
      %298 = vmatprep.subr.mxu0 0.0
      %299 = vmatpush1.msra.mxu0 %v183
      %300 = vmatprep.subr.mxu0 0.0
      %301 = vmatpush1.msra.mxu0 %v184
      %302 = vmatprep.subr.mxu0 0.0
      %303 = vmatpush1.msra.mxu0 %v185
      %304 = vmatprep.subr.mxu0 0.0
      %305 = vmatpush1.msra.mxu0 %v186
      %306 = vmatprep.subr.mxu0 0.0
      %307 = vmatpush1.msra.mxu0 %v187
      %308 = vmatprep.subr.mxu0 0.0
      %309 = vmatpush1.msra.mxu0 %v188
      %310 = vmatprep.subr.mxu0 0.0
      %311 = vmatpush1.msra.mxu0 %v189
      %312 = vmatprep.subr.mxu0 0.0
      %313 = vmatpush1.msra.mxu0 %v190
      %314 = vmatprep.subr.mxu0 0.0
      %315 = vmatpush1.msra.mxu0 %v191
      %316 = vmatprep.subr.mxu0 0.0
      %317 = vmatpush1.msra.mxu0 %v192
      %318 = vmatprep.subr.mxu0 0.0
      %319 = vmatpush1.msra.mxu0 %v193
      %320 = vmatprep.subr.mxu0 0.0
      %321 = vmatpush1.msra.mxu0 %v194
      %322 = vmatprep.subr.mxu0 0.0
      %323 = vmatpush1.msra.mxu0 %v195
      %324 = vmatprep.subr.mxu0 0.0
      %325 = vmatpush1.msra.mxu0 %v196
      %326 = vmatprep.subr.mxu0 0.0
      %327 = vmatpush1.msra.mxu0 %v197
      %328 = vmatprep.subr.mxu0 0.0
      %329 = vmatpush1.msra.mxu0 %v198
      %330 = vmatprep.subr.mxu0 0.0
      %331 = vmatpush1.msra.mxu0 %v199
      %332 = vmatprep.subr.mxu0 0.0
      %333 = vmatpush1.msra.mxu0 %v200
      %334 = vmatprep.subr.mxu0 0.0
      %335 = vmatpush1.msra.mxu0 %v201
      %336 = vmatprep.subr.mxu0 0.0
      %337 = vmatpush1.msra.mxu0 %v202
      %338 = vmatprep.mubr.f32.mxu0 %v236
      %339 = vmatmul.mubr.f32.gmra.mrb[0].mxu0 %v235
      %v340 = vpop.f32.mrb[0].mxu0
      %v341 = vadd.f32 %v255, %v340
      %v342 = vpop.f32.mrb[0].mxu0
      %343 = vmatprep.mubr.f32.mxu0 %v240
      %344 = vmatmul.mubr.f32.gmra.mrb[0].mxu0 %v239
      %v345 = vpop.f32.mrb[0].mxu0
      %v346 = vadd.f32 %v255, %v345
      %v347 = vpop.f32.mrb[0].mxu0
      %348 = vmatprep.mubr.f32.mxu0 %v244
      %349 = vmatmul.mubr.f32.gmra.mrb[0].mxu0 %v243
      %v350 = vpop.f32.mrb[0].mxu0
      %v351 = vadd.f32 %v255, %v350
      %v352 = vpop.f32.mrb[0].mxu0
      %353 = vmatprep.mubr.f32.mxu0 %v248
      %354 = vmatmul.mubr.f32.gmra.mrb[0].mxu0 %v247
      %v355 = vpop.f32.mrb[0].mxu0
      %v356 = vadd.f32 %v255, %v355
      %v357 = vpop.f32.mrb[0].mxu0
      %358 = vdwg.mxu0
      %359 = vmatprep.subr.mxu0 0.0
      %360 = vmatpush1.msra.mxu0 %v203
      %361 = vmatprep.subr.mxu0 0.0
      %362 = vmatpush1.msra.mxu0 %v204
      %363 = vmatprep.subr.mxu0 0.0
      %364 = vmatpush1.msra.mxu0 %v205
      %365 = vmatprep.subr.mxu0 0.0
      %366 = vmatpush1.msra.mxu0 %v206
      %367 = vmatprep.subr.mxu0 0.0
      %368 = vmatpush1.msra.mxu0 %v207
      %369 = vmatprep.subr.mxu0 0.0
      %370 = vmatpush1.msra.mxu0 %v208
      %371 = vmatprep.subr.mxu0 0.0
      %372 = vmatpush1.msra.mxu0 %v209
      %373 = vmatprep.subr.mxu0 0.0
      %374 = vmatpush1.msra.mxu0 %v210
      %375 = vmatprep.subr.mxu0 0.0
      %376 = vmatpush1.msra.mxu0 %v211
      %377 = vmatprep.subr.mxu0 0.0
      %378 = vmatpush1.msra.mxu0 %v212
      %379 = vmatprep.subr.mxu0 0.0
      %380 = vmatpush1.msra.mxu0 %v213
      %381 = vmatprep.subr.mxu0 0.0
      %382 = vmatpush1.msra.mxu0 %v214
      %383 = vmatprep.subr.mxu0 0.0
      %384 = vmatpush1.msra.mxu0 %v215
      %385 = vmatprep.subr.mxu0 0.0
      %386 = vmatpush1.msra.mxu0 %v216
      %387 = vmatprep.subr.mxu0 0.0
      %388 = vmatpush1.msra.mxu0 %v217
      %389 = vmatprep.subr.mxu0 0.0
      %390 = vmatpush1.msra.mxu0 %v218
      %391 = vmatprep.subr.mxu0 0.0
      %392 = vmatpush1.msra.mxu0 %v219
      %393 = vmatprep.subr.mxu0 0.0
      %394 = vmatpush1.msra.mxu0 %v220
      %395 = vmatprep.subr.mxu0 0.0
      %396 = vmatpush1.msra.mxu0 %v221
      %397 = vmatprep.subr.mxu0 0.0
      %398 = vmatpush1.msra.mxu0 %v222
      %399 = vmatprep.subr.mxu0 0.0
      %400 = vmatpush1.msra.mxu0 %v223
      %401 = vmatprep.subr.mxu0 0.0
      %402 = vmatpush1.msra.mxu0 %v224
      %403 = vmatprep.subr.mxu0 0.0
      %404 = vmatpush1.msra.mxu0 %v225
      %405 = vmatprep.subr.mxu0 0.0
      %406 = vmatpush1.msra.mxu0 %v226
      %407 = vmatprep.subr.mxu0 0.0
      %408 = vmatpush1.msra.mxu0 %v227
      %409 = vmatprep.subr.mxu0 0.0
      %410 = vmatpush1.msra.mxu0 %v228
      %411 = vmatprep.subr.mxu0 0.0
      %412 = vmatpush1.msra.mxu0 %v229
      %413 = vmatprep.subr.mxu0 0.0
      %414 = vmatpush1.msra.mxu0 %v230
      %415 = vmatprep.subr.mxu0 0.0
      %416 = vmatpush1.msra.mxu0 %v231
      %417 = vmatprep.subr.mxu0 0.0
      %418 = vmatpush1.msra.mxu0 %v232
      %419 = vmatprep.subr.mxu0 0.0
      %420 = vmatpush1.msra.mxu0 %v272
      %421 = vmatprep.subr.mxu0 0.0
      %422 = vmatpush1.msra.mxu0 0.0
      %423 = vmatprep.mubr.f32.mxu0 %v259
      %424 = vmatmul.mubr.f32.gmra.mrb[0].mxu0 %v237
      %v425 = vpop.f32.mrb[0].mxu0
      %v426 = vadd.f32 %v341, %v425
      %v427 = vpop.f32.mrb[0].mxu0
      %428 = vmatprep.mubr.f32.mxu0 %v262
      %429 = vmatmul.mubr.f32.gmra.mrb[0].mxu0 %v241
      %v430 = vpop.f32.mrb[0].mxu0
      %v431 = vadd.f32 %v346, %v430
      %v432 = vpop.f32.mrb[0].mxu0
      %433 = vmatprep.mubr.f32.mxu0 %v265
      %434 = vmatmul.mubr.f32.gmra.mrb[0].mxu0 %v245
      %v435 = vpop.f32.mrb[0].mxu0
      %v436 = vadd.f32 %v351, %v435
      %v437 = vpop.f32.mrb[0].mxu0
      %438 = vmatprep.mubr.f32.mxu0 %v268
      %439 = vmatmul.mubr.f32.gmra.mrb[0].mxu0 %v249
      %v440 = vpop.f32.mrb[0].mxu0
      %v441 = vadd.f32 %v356, %v440
      %v442 = vpop.f32.mrb[0].mxu0
      %443 = vdwg.mxu0
      %v444 = vmax.f32 %v426, 0.0
      %v445 = vmax.f32 %v431, 0.0
      %v446 = vmax.f32 %v436, 0.0
      %v447 = vmax.f32 %v441, 0.0
      %v448 = vld [vmem:[%s165 + $0x60] sm:$0xfe]
      %v449 = vld [vmem:[%s165 + $0x68] sm:$0xfe]
      %v450 = vld [vmem:[%s165 + $0x70] sm:$0xfe]
      %v451 = vld [vmem:[%s165 + $0x78] sm:$0xfe]
      %v452 = vld [vmem:[%s165 + $0x80] sm:$0xff]
      %v453 = vld [vmem:[%s165 + $0x88] sm:$0xff]
      %v454 = vld [vmem:[%s165 + $0x90] sm:$0xff]
      %v455 = vld [vmem:[%s165 + $0x98] sm:$0xff]
      %v456 = vld [vmem:[%s165 + $0xa0] sm:$0xff]
      %v457 = vld [vmem:[%s165 + $0xa8] sm:$0xff]
      %v458 = vld [vmem:[%s165 + $0xb0] sm:$0xff]
      %v459 = vld [vmem:[%s165 + $0xb8] sm:$0xff]
      %v460 = vld [vmem:[%s165 + $0xc0] sm:$0x3]
      %v461 = vld [vmem:[%s165 + $0xc8] sm:$0x3]
      %v462 = vld [vmem:[%s165 + $0xd0] sm:$0x3]
      %v463 = vld [vmem:[%s165 + $0xd8] sm:$0x3]
      %vm480 = vcmask 1046528
      %v481 = vrot.slane %v448, 1
      %v482 = vrot.slane %v452, 1
      %v483 = vsel %vm480, %v481, %v482
      %v484 = vrot.slane %v449, 1
      %v485 = vrot.slane %v453, 1
      %v486 = vsel %vm480, %v484, %v485
      %v487 = vrot.slane %v450, 1
      %v488 = vrot.slane %v454, 1
      %v489 = vsel %vm480, %v487, %v488
      %v490 = vrot.slane %v451, 1
      %v491 = vrot.slane %v455, 1
      %v492 = vsel %vm480, %v490, %v491
      %v493 = vrot.slane %v456, 1
      %v494 = vsel %vm480, %v482, %v493
      %v495 = vrot.slane %v457, 1
      %v496 = vsel %vm480, %v485, %v495
      %v497 = vrot.slane %v458, 1
      %v498 = vsel %vm480, %v488, %v497
      %v499 = vrot.slane %v459, 1
      %v500 = vsel %vm480, %v491, %v499
      %v501 = vrot.slane %v460, 1
      %v502 = vsel %vm480, %v493, %v501
      %v503 = vrot.slane %v461, 1
      %v504 = vsel %vm480, %v495, %v503
      %v505 = vrot.slane %v462, 1
      %v506 = vsel %vm480, %v497, %v505
      %v507 = vrot.slane %v463, 1
      %v508 = vsel %vm480, %v499, %v507
      %v521 = vsel %vm257, %v492, 0
      %v523 = vsel %vm257, %v500, 0
      %v525 = vsel %vm257, %v508, 0
      %v527 = vsel %vm257, %v507, 0
      %529 = vmatprep.subr.mxu0 0.0
      %530 = vmatpush1.msra.mxu0 %v171
      %531 = vmatprep.subr.mxu0 0.0
      %532 = vmatpush1.msra.mxu0 %v172
      %533 = vmatprep.subr.mxu0 0.0
      %534 = vmatpush1.msra.mxu0 %v173
      %535 = vmatprep.subr.mxu0 0.0
      %536 = vmatpush1.msra.mxu0 %v174
      %537 = vmatprep.subr.mxu0 0.0
      %538 = vmatpush1.msra.mxu0 %v175
      %539 = vmatprep.subr.mxu0 0.0
      %540 = vmatpush1.msra.mxu0 %v176
      %541 = vmatprep.subr.mxu0 0.0
      %542 = vmatpush1.msra.mxu0 %v177
      %543 = vmatprep.subr.mxu0 0.0
      %544 = vmatpush1.msra.mxu0 %v178
      %545 = vmatprep.subr.mxu0 0.0
      %546 = vmatpush1.msra.mxu0 %v179
      %547 = vmatprep.subr.mxu0 0.0
      %548 = vmatpush1.msra.mxu0 %v180
      %549 = vmatprep.subr.mxu0 0.0
      %550 = vmatpush1.msra.mxu0 %v181
      %551 = vmatprep.subr.mxu0 0.0
      %552 = vmatpush1.msra.mxu0 %v182
      %553 = vmatprep.subr.mxu0 0.0
      %554 = vmatpush1.msra.mxu0 %v183
      %555 = vmatprep.subr.mxu0 0.0
      %556 = vmatpush1.msra.mxu0 %v184
      %557 = vmatprep.subr.mxu0 0.0
      %558 = vmatpush1.msra.mxu0 %v185
      %559 = vmatprep.subr.mxu0 0.0
      %560 = vmatpush1.msra.mxu0 %v186
      %561 = vmatprep.subr.mxu0 0.0
      %562 = vmatpush1.msra.mxu0 %v187
      %563 = vmatprep.subr.mxu0 0.0
      %564 = vmatpush1.msra.mxu0 %v188
      %565 = vmatprep.subr.mxu0 0.0
      %566 = vmatpush1.msra.mxu0 %v189
      %567 = vmatprep.subr.mxu0 0.0
      %568 = vmatpush1.msra.mxu0 %v190
      %569 = vmatprep.subr.mxu0 0.0
      %570 = vmatpush1.msra.mxu0 %v191
      %571 = vmatprep.subr.mxu0 0.0
      %572 = vmatpush1.msra.mxu0 %v192
      %573 = vmatprep.subr.mxu0 0.0
      %574 = vmatpush1.msra.mxu0 %v193
      %575 = vmatprep.subr.mxu0 0.0
      %576 = vmatpush1.msra.mxu0 %v194
      %577 = vmatprep.subr.mxu0 0.0
      %578 = vmatpush1.msra.mxu0 %v195
      %579 = vmatprep.subr.mxu0 0.0
      %580 = vmatpush1.msra.mxu0 %v196
      %581 = vmatprep.subr.mxu0 0.0
      %582 = vmatpush1.msra.mxu0 %v197
      %583 = vmatprep.subr.mxu0 0.0
      %584 = vmatpush1.msra.mxu0 %v198
      %585 = vmatprep.subr.mxu0 0.0
      %586 = vmatpush1.msra.mxu0 %v199
      %587 = vmatprep.subr.mxu0 0.0
      %588 = vmatpush1.msra.mxu0 %v200
      %589 = vmatprep.subr.mxu0 0.0
      %590 = vmatpush1.msra.mxu0 %v201
      %591 = vmatprep.subr.mxu0 0.0
      %592 = vmatpush1.msra.mxu0 %v202
      %593 = vmatprep.mubr.f32.mxu0 %v486
      %594 = vmatmul.mubr.f32.gmra.mrb[0].mxu0 %v483
      %v595 = vpop.f32.mrb[0].mxu0
      %v596 = vadd.f32 %v255, %v595
      %v597 = vpop.f32.mrb[0].mxu0
      %598 = vmatprep.mubr.f32.mxu0 %v496
      %599 = vmatmul.mubr.f32.gmra.mrb[0].mxu0 %v494
      %v600 = vpop.f32.mrb[0].mxu0
      %v601 = vadd.f32 %v255, %v600
      %v602 = vpop.f32.mrb[0].mxu0
      %603 = vmatprep.mubr.f32.mxu0 %v504
      %604 = vmatmul.mubr.f32.gmra.mrb[0].mxu0 %v502
      %v605 = vpop.f32.mrb[0].mxu0
      %v606 = vadd.f32 %v255, %v605
      %v607 = vpop.f32.mrb[0].mxu0
      %608 = vmatprep.mubr.f32.mxu0 %v503
      %609 = vmatmul.mubr.f32.gmra.mrb[0].mxu0 %v501
      %v610 = vpop.f32.mrb[0].mxu0
      %v611 = vadd.f32 %v255, %v610
      %v612 = vpop.f32.mrb[0].mxu0
      %613 = vdwg.mxu0
      %614 = vmatprep.subr.mxu0 0.0
      %615 = vmatpush1.msra.mxu0 %v203
      %616 = vmatprep.subr.mxu0 0.0
      %617 = vmatpush1.msra.mxu0 %v204
      %618 = vmatprep.subr.mxu0 0.0
      %619 = vmatpush1.msra.mxu0 %v205
      %620 = vmatprep.subr.mxu0 0.0
      %621 = vmatpush1.msra.mxu0 %v206
      %622 = vmatprep.subr.mxu0 0.0
      %623 = vmatpush1.msra.mxu0 %v207
      %624 = vmatprep.subr.mxu0 0.0
      %625 = vmatpush1.msra.mxu0 %v208
      %626 = vmatprep.subr.mxu0 0.0
      %627 = vmatpush1.msra.mxu0 %v209
      %628 = vmatprep.subr.mxu0 0.0
      %629 = vmatpush1.msra.mxu0 %v210
      %630 = vmatprep.subr.mxu0 0.0
      %631 = vmatpush1.msra.mxu0 %v211
      %632 = vmatprep.subr.mxu0 0.0
      %633 = vmatpush1.msra.mxu0 %v212
      %634 = vmatprep.subr.mxu0 0.0
      %635 = vmatpush1.msra.mxu0 %v213
      %636 = vmatprep.subr.mxu0 0.0
      %637 = vmatpush1.msra.mxu0 %v214
      %638 = vmatprep.subr.mxu0 0.0
      %639 = vmatpush1.msra.mxu0 %v215
      %640 = vmatprep.subr.mxu0 0.0
      %641 = vmatpush1.msra.mxu0 %v216
      %642 = vmatprep.subr.mxu0 0.0
      %643 = vmatpush1.msra.mxu0 %v217
      %644 = vmatprep.subr.mxu0 0.0
      %645 = vmatpush1.msra.mxu0 %v218
      %646 = vmatprep.subr.mxu0 0.0
      %647 = vmatpush1.msra.mxu0 %v219
      %648 = vmatprep.subr.mxu0 0.0
      %649 = vmatpush1.msra.mxu0 %v220
      %650 = vmatprep.subr.mxu0 0.0
      %651 = vmatpush1.msra.mxu0 %v221
      %652 = vmatprep.subr.mxu0 0.0
      %653 = vmatpush1.msra.mxu0 %v222
      %654 = vmatprep.subr.mxu0 0.0
      %655 = vmatpush1.msra.mxu0 %v223
      %656 = vmatprep.subr.mxu0 0.0
      %657 = vmatpush1.msra.mxu0 %v224
      %658 = vmatprep.subr.mxu0 0.0
      %659 = vmatpush1.msra.mxu0 %v225
      %660 = vmatprep.subr.mxu0 0.0
      %661 = vmatpush1.msra.mxu0 %v226
      %662 = vmatprep.subr.mxu0 0.0
      %663 = vmatpush1.msra.mxu0 %v227
      %664 = vmatprep.subr.mxu0 0.0
      %665 = vmatpush1.msra.mxu0 %v228
      %666 = vmatprep.subr.mxu0 0.0
      %667 = vmatpush1.msra.mxu0 %v229
      %668 = vmatprep.subr.mxu0 0.0
      %669 = vmatpush1.msra.mxu0 %v230
      %670 = vmatprep.subr.mxu0 0.0
      %671 = vmatpush1.msra.mxu0 %v231
      %672 = vmatprep.subr.mxu0 0.0
      %673 = vmatpush1.msra.mxu0 %v232
      %674 = vmatprep.subr.mxu0 0.0
      %675 = vmatpush1.msra.mxu0 %v272
      %676 = vmatprep.subr.mxu0 0.0
      %677 = vmatpush1.msra.mxu0 0.0
      %678 = vmatprep.mubr.f32.mxu0 %v521
      %679 = vmatmul.mubr.f32.gmra.mrb[0].mxu0 %v489
      %v680 = vpop.f32.mrb[0].mxu0
      %v681 = vadd.f32 %v596, %v680
      %v682 = vpop.f32.mrb[0].mxu0
      %683 = vmatprep.mubr.f32.mxu0 %v523
      %684 = vmatmul.mubr.f32.gmra.mrb[0].mxu0 %v498
      %v685 = vpop.f32.mrb[0].mxu0
      %v686 = vadd.f32 %v601, %v685
      %v687 = vpop.f32.mrb[0].mxu0
      %688 = vmatprep.mubr.f32.mxu0 %v525
      %689 = vmatmul.mubr.f32.gmra.mrb[0].mxu0 %v506
      %v690 = vpop.f32.mrb[0].mxu0
      %v691 = vadd.f32 %v606, %v690
      %v692 = vpop.f32.mrb[0].mxu0
      %693 = vmatprep.mubr.f32.mxu0 %v527
      %694 = vmatmul.mubr.f32.gmra.mrb[0].mxu0 %v505
      %v695 = vpop.f32.mrb[0].mxu0
      %v696 = vadd.f32 %v611, %v695
      %v697 = vpop.f32.mrb[0].mxu0
      %698 = vdwg.mxu0
      %v699 = vmax.f32 %v681, 0.0
      %v700 = vmax.f32 %v686, 0.0
      %v701 = vmax.f32 %v691, 0.0
      %v702 = vmax.f32 %v696, 0.0
      %v703 = vmax.f32 %v444, %v699
      %v704 = vmax.f32 %v445, %v700
      %v705 = vmax.f32 %v446, %v701
      %v706 = vmax.f32 %v447, %v702
      %v707 = vld [vmem:[%s165 + $0xc0] sm:$0xfc]
      %v708 = vld [vmem:[%s165 + $0xc8] sm:$0xfc]
      %v709 = vld [vmem:[%s165 + $0xd0] sm:$0xfc]
      %v710 = vld [vmem:[%s165 + $0xd8] sm:$0xfc]
      %v711 = vld [vmem:[%s165 + $0xe0] sm:$0xff]
      %v712 = vld [vmem:[%s165 + $0xe8] sm:$0xff]
      %v713 = vld [vmem:[%s165 + $0xf0] sm:$0xff]
      %v714 = vld [vmem:[%s165 + $0xf8] sm:$0xff]
      %v715 = vld [vmem:[%s165 + $0x100] sm:$0xff]
      %v716 = vld [vmem:[%s165 + $0x108] sm:$0xff]
      %v717 = vld [vmem:[%s165 + $0x110] sm:$0xff]
      %v718 = vld [vmem:[%s165 + $0x118] sm:$0xff]
      %v719 = vld [vmem:[%s165 + $0x120] sm:$0x7]
      %v720 = vld [vmem:[%s165 + $0x128] sm:$0x7]
      %v721 = vld [vmem:[%s165 + $0x130] sm:$0x7]
      %v722 = vld [vmem:[%s165 + $0x138] sm:$0x7]
      %vm739 = vcmask 1045504
      %v740 = vrot.slane %v707, 2
      %v741 = vrot.slane %v711, 2
      %v742 = vsel %vm739, %v740, %v741
      %v743 = vrot.slane %v708, 2
      %v744 = vrot.slane %v712, 2
      %v745 = vsel %vm739, %v743, %v744
      %v746 = vrot.slane %v709, 2
      %v747 = vrot.slane %v713, 2
      %v748 = vsel %vm739, %v746, %v747
      %v749 = vrot.slane %v710, 2
      %v750 = vrot.slane %v714, 2
      %v751 = vsel %vm739, %v749, %v750
      %v752 = vrot.slane %v715, 2
      %v753 = vsel %vm739, %v741, %v752
      %v754 = vrot.slane %v716, 2
      %v755 = vsel %vm739, %v744, %v754
      %v756 = vrot.slane %v717, 2
      %v757 = vsel %vm739, %v747, %v756
      %v758 = vrot.slane %v718, 2
      %v759 = vsel %vm739, %v750, %v758
      %v760 = vrot.slane %v719, 2
      %v761 = vsel %vm739, %v752, %v760
      %v762 = vrot.slane %v720, 2
      %v763 = vsel %vm739, %v754, %v762
      %v764 = vrot.slane %v721, 2
      %v765 = vsel %vm739, %v756, %v764
      %v766 = vrot.slane %v722, 2
      %v767 = vsel %vm739, %v758, %v766
      %v780 = vsel %vm257, %v751, 0
      %v782 = vsel %vm257, %v759, 0
      %v784 = vsel %vm257, %v767, 0
      %v786 = vsel %vm257, %v766, 0
      %788 = vmatprep.subr.mxu0 0.0
      %789 = vmatpush1.msra.mxu0 %v171
      %790 = vmatprep.subr.mxu0 0.0
      %791 = vmatpush1.msra.mxu0 %v172
      %792 = vmatprep.subr.mxu0 0.0
      %793 = vmatpush1.msra.mxu0 %v173
      %794 = vmatprep.subr.mxu0 0.0
      %795 = vmatpush1.msra.mxu0 %v174
      %796 = vmatprep.subr.mxu0 0.0
      %797 = vmatpush1.msra.mxu0 %v175
      %798 = vmatprep.subr.mxu0 0.0
      %799 = vmatpush1.msra.mxu0 %v176
      %800 = vmatprep.subr.mxu0 0.0
      %801 = vmatpush1.msra.mxu0 %v177
      %802 = vmatprep.subr.mxu0 0.0
      %803 = vmatpush1.msra.mxu0 %v178
      %804 = vmatprep.subr.mxu0 0.0
      %805 = vmatpush1.msra.mxu0 %v179
      %806 = vmatprep.subr.mxu0 0.0
      %807 = vmatpush1.msra.mxu0 %v180
      %808 = vmatprep.subr.mxu0 0.0
      %809 = vmatpush1.msra.mxu0 %v181
      %810 = vmatprep.subr.mxu0 0.0
      %811 = vmatpush1.msra.mxu0 %v182
      %812 = vmatprep.subr.mxu0 0.0
      %813 = vmatpush1.msra.mxu0 %v183
      %814 = vmatprep.subr.mxu0 0.0
      %815 = vmatpush1.msra.mxu0 %v184
      %816 = vmatprep.subr.mxu0 0.0
      %817 = vmatpush1.msra.mxu0 %v185
      %818 = vmatprep.subr.mxu0 0.0
      %819 = vmatpush1.msra.mxu0 %v186
      %820 = vmatprep.subr.mxu0 0.0
      %821 = vmatpush1.msra.mxu0 %v187
      %822 = vmatprep.subr.mxu0 0.0
      %823 = vmatpush1.msra.mxu0 %v188
      %824 = vmatprep.subr.mxu0 0.0
      %825 = vmatpush1.msra.mxu0 %v189
      %826 = vmatprep.subr.mxu0 0.0
      %827 = vmatpush1.msra.mxu0 %v190
      %828 = vmatprep.subr.mxu0 0.0
      %829 = vmatpush1.msra.mxu0 %v191
      %830 = vmatprep.subr.mxu0 0.0
      %831 = vmatpush1.msra.mxu0 %v192
      %832 = vmatprep.subr.mxu0 0.0
      %833 = vmatpush1.msra.mxu0 %v193
      %834 = vmatprep.subr.mxu0 0.0
      %835 = vmatpush1.msra.mxu0 %v194
      %836 = vmatprep.subr.mxu0 0.0
      %837 = vmatpush1.msra.mxu0 %v195
      %838 = vmatprep.subr.mxu0 0.0
      %839 = vmatpush1.msra.mxu0 %v196
      %840 = vmatprep.subr.mxu0 0.0
      %841 = vmatpush1.msra.mxu0 %v197
      %842 = vmatprep.subr.mxu0 0.0
      %843 = vmatpush1.msra.mxu0 %v198
      %844 = vmatprep.subr.mxu0 0.0
      %845 = vmatpush1.msra.mxu0 %v199
      %846 = vmatprep.subr.mxu0 0.0
      %847 = vmatpush1.msra.mxu0 %v200
      %848 = vmatprep.subr.mxu0 0.0
      %849 = vmatpush1.msra.mxu0 %v201
      %850 = vmatprep.subr.mxu0 0.0
      %851 = vmatpush1.msra.mxu0 %v202
      %852 = vmatprep.mubr.f32.mxu0 %v745
      %853 = vmatmul.mubr.f32.gmra.mrb[0].mxu0 %v742
      %v854 = vpop.f32.mrb[0].mxu0
      %v855 = vadd.f32 %v255, %v854
      %v856 = vpop.f32.mrb[0].mxu0
      %857 = vmatprep.mubr.f32.mxu0 %v755
      %858 = vmatmul.mubr.f32.gmra.mrb[0].mxu0 %v753
      %v859 = vpop.f32.mrb[0].mxu0
      %v860 = vadd.f32 %v255, %v859
      %v861 = vpop.f32.mrb[0].mxu0
      %862 = vmatprep.mubr.f32.mxu0 %v763
      %863 = vmatmul.mubr.f32.gmra.mrb[0].mxu0 %v761
      %v864 = vpop.f32.mrb[0].mxu0
      %v865 = vadd.f32 %v255, %v864
      %v866 = vpop.f32.mrb[0].mxu0
      %867 = vmatprep.mubr.f32.mxu0 %v762
      %868 = vmatmul.mubr.f32.gmra.mrb[0].mxu0 %v760
      %v869 = vpop.f32.mrb[0].mxu0
      %v870 = vadd.f32 %v255, %v869
      %v871 = vpop.f32.mrb[0].mxu0
      %872 = vdwg.mxu0
      %873 = vmatprep.subr.mxu0 0.0
      %874 = vmatpush1.msra.mxu0 %v203
      %875 = vmatprep.subr.mxu0 0.0
      %876 = vmatpush1.msra.mxu0 %v204
      %877 = vmatprep.subr.mxu0 0.0
      %878 = vmatpush1.msra.mxu0 %v205
      %879 = vmatprep.subr.mxu0 0.0
      %880 = vmatpush1.msra.mxu0 %v206
      %881 = vmatprep.subr.mxu0 0.0
      %882 = vmatpush1.msra.mxu0 %v207
      %883 = vmatprep.subr.mxu0 0.0
      %884 = vmatpush1.msra.mxu0 %v208
      %885 = vmatprep.subr.mxu0 0.0
      %886 = vmatpush1.msra.mxu0 %v209
      %887 = vmatprep.subr.mxu0 0.0
      %888 = vmatpush1.msra.mxu0 %v210
      %889 = vmatprep.subr.mxu0 0.0
      %890 = vmatpush1.msra.mxu0 %v211
      %891 = vmatprep.subr.mxu0 0.0
      %892 = vmatpush1.msra.mxu0 %v212
      %893 = vmatprep.subr.mxu0 0.0
      %894 = vmatpush1.msra.mxu0 %v213
      %895 = vmatprep.subr.mxu0 0.0
      %896 = vmatpush1.msra.mxu0 %v214
      %897 = vmatprep.subr.mxu0 0.0
      %898 = vmatpush1.msra.mxu0 %v215
      %899 = vmatprep.subr.mxu0 0.0
      %900 = vmatpush1.msra.mxu0 %v216
      %901 = vmatprep.subr.mxu0 0.0
      %902 = vmatpush1.msra.mxu0 %v217
      %903 = vmatprep.subr.mxu0 0.0
      %904 = vmatpush1.msra.mxu0 %v218
      %905 = vmatprep.subr.mxu0 0.0
      %906 = vmatpush1.msra.mxu0 %v219
      %907 = vmatprep.subr.mxu0 0.0
      %908 = vmatpush1.msra.mxu0 %v220
      %909 = vmatprep.subr.mxu0 0.0
      %910 = vmatpush1.msra.mxu0 %v221
      %911 = vmatprep.subr.mxu0 0.0
      %912 = vmatpush1.msra.mxu0 %v222
      %913 = vmatprep.subr.mxu0 0.0
      %914 = vmatpush1.msra.mxu0 %v223
      %915 = vmatprep.subr.mxu0 0.0
      %916 = vmatpush1.msra.mxu0 %v224
      %917 = vmatprep.subr.mxu0 0.0
      %918 = vmatpush1.msra.mxu0 %v225
      %919 = vmatprep.subr.mxu0 0.0
      %920 = vmatpush1.msra.mxu0 %v226
      %921 = vmatprep.subr.mxu0 0.0
      %922 = vmatpush1.msra.mxu0 %v227
      %923 = vmatprep.subr.mxu0 0.0
      %924 = vmatpush1.msra.mxu0 %v228
      %925 = vmatprep.subr.mxu0 0.0
      %926 = vmatpush1.msra.mxu0 %v229
      %927 = vmatprep.subr.mxu0 0.0
      %928 = vmatpush1.msra.mxu0 %v230
      %929 = vmatprep.subr.mxu0 0.0
      %930 = vmatpush1.msra.mxu0 %v231
      %931 = vmatprep.subr.mxu0 0.0
      %932 = vmatpush1.msra.mxu0 %v232
      %933 = vmatprep.subr.mxu0 0.0
      %934 = vmatpush1.msra.mxu0 %v272
      %935 = vmatprep.subr.mxu0 0.0
      %936 = vmatpush1.msra.mxu0 0.0
      %937 = vmatprep.mubr.f32.mxu0 %v780
      %938 = vmatmul.mubr.f32.gmra.mrb[0].mxu0 %v748
      %v939 = vpop.f32.mrb[0].mxu0
      %v940 = vadd.f32 %v855, %v939
      %v941 = vpop.f32.mrb[0].mxu0
      %942 = vmatprep.mubr.f32.mxu0 %v782
      %943 = vmatmul.mubr.f32.gmra.mrb[0].mxu0 %v757
      %v944 = vpop.f32.mrb[0].mxu0
      %v945 = vadd.f32 %v860, %v944
      %v946 = vpop.f32.mrb[0].mxu0
      %947 = vmatprep.mubr.f32.mxu0 %v784
      %948 = vmatmul.mubr.f32.gmra.mrb[0].mxu0 %v765
      %v949 = vpop.f32.mrb[0].mxu0
      %v950 = vadd.f32 %v865, %v949
      %v951 = vpop.f32.mrb[0].mxu0
      %952 = vmatprep.mubr.f32.mxu0 %v786
      %953 = vmatmul.mubr.f32.gmra.mrb[0].mxu0 %v764
      %v954 = vpop.f32.mrb[0].mxu0
      %v955 = vadd.f32 %v870, %v954
      %v956 = vpop.f32.mrb[0].mxu0
      %957 = vdwg.mxu0
      %v958 = vmax.f32 %v940, 0.0
      %v959 = vmax.f32 %v945, 0.0
      %v960 = vmax.f32 %v950, 0.0
      %v961 = vmax.f32 %v955, 0.0
      %v962 = vmax.f32 %v703, %v958
      %v963 = vmax.f32 %v704, %v959
      %v964 = vmax.f32 %v705, %v960
      %v965 = vmax.f32 %v706, %v961
      %v966 = vld [vmem:[%s165 + $0x120] sm:$0xf8]
      %v967 = vld [vmem:[%s165 + $0x128] sm:$0xf8]
      %v968 = vld [vmem:[%s165 + $0x130] sm:$0xf8]
      %v969 = vld [vmem:[%s165 + $0x138] sm:$0xf8]
      %v970 = vld [vmem:[%s165 + $0x140] sm:$0xff]
      %v971 = vld [vmem:[%s165 + $0x148] sm:$0xff]
      %v972 = vld [vmem:[%s165 + $0x150] sm:$0xff]
      %v973 = vld [vmem:[%s165 + $0x158] sm:$0xff]
      %v974 = vld [vmem:[%s165 + $0x160] sm:$0xff]
      %v975 = vld [vmem:[%s165 + $0x168] sm:$0xff]
      %v976 = vld [vmem:[%s165 + $0x170] sm:$0xff]
      %v977 = vld [vmem:[%s165 + $0x178] sm:$0xff]
      %v978 = vld [vmem:[%s165 + $0x180] sm:$0xf]
      %v979 = vld [vmem:[%s165 + $0x188] sm:$0xf]
      %v980 = vld [vmem:[%s165 + $0x190] sm:$0xf]
      %v981 = vld [vmem:[%s165 + $0x198] sm:$0xf]
      %vm998 = vcmask 1044480
      %v999 = vrot.slane %v966, 3
      %v1000 = vrot.slane %v970, 3
      %v1001 = vsel %vm998, %v999, %v1000
      %v1002 = vrot.slane %v967, 3
      %v1003 = vrot.slane %v971, 3
      %v1004 = vsel %vm998, %v1002, %v1003
      %v1005 = vrot.slane %v968, 3
      %v1006 = vrot.slane %v972, 3
      %v1007 = vsel %vm998, %v1005, %v1006
      %v1008 = vrot.slane %v969, 3
      %v1009 = vrot.slane %v973, 3
      %v1010 = vsel %vm998, %v1008, %v1009
      %v1011 = vrot.slane %v974, 3
      %v1012 = vsel %vm998, %v1000, %v1011
      %v1013 = vrot.slane %v975, 3
      %v1014 = vsel %vm998, %v1003, %v1013
      %v1015 = vrot.slane %v976, 3
      %v1016 = vsel %vm998, %v1006, %v1015
      %v1017 = vrot.slane %v977, 3
      %v1018 = vsel %vm998, %v1009, %v1017
      %v1019 = vrot.slane %v978, 3
      %v1020 = vsel %vm998, %v1011, %v1019
      %v1021 = vrot.slane %v979, 3
      %v1022 = vsel %vm998, %v1013, %v1021
      %v1023 = vrot.slane %v980, 3
      %v1024 = vsel %vm998, %v1015, %v1023
      %v1025 = vrot.slane %v981, 3
      %v1026 = vsel %vm998, %v1017, %v1025
      %v1039 = vsel %vm257, %v1010, 0
      %v1041 = vsel %vm257, %v1018, 0
      %v1043 = vsel %vm257, %v1026, 0
      %v1045 = vsel %vm257, %v1025, 0
      %1047 = vmatprep.subr.mxu0 0.0
      %1048 = vmatpush1.msra.mxu0 %v171
      %1049 = vmatprep.subr.mxu0 0.0
      %1050 = vmatpush1.msra.mxu0 %v172
      %1051 = vmatprep.subr.mxu0 0.0
      %1052 = vmatpush1.msra.mxu0 %v173
      %1053 = vmatprep.subr.mxu0 0.0
      %1054 = vmatpush1.msra.mxu0 %v174
      %1055 = vmatprep.subr.mxu0 0.0
      %1056 = vmatpush1.msra.mxu0 %v175
      %1057 = vmatprep.subr.mxu0 0.0
      %1058 = vmatpush1.msra.mxu0 %v176
      %1059 = vmatprep.subr.mxu0 0.0
      %1060 = vmatpush1.msra.mxu0 %v177
      %1061 = vmatprep.subr.mxu0 0.0
      %1062 = vmatpush1.msra.mxu0 %v178
      %1063 = vmatprep.subr.mxu0 0.0
      %1064 = vmatpush1.msra.mxu0 %v179
      %1065 = vmatprep.subr.mxu0 0.0
      %1066 = vmatpush1.msra.mxu0 %v180
      %1067 = vmatprep.subr.mxu0 0.0
      %1068 = vmatpush1.msra.mxu0 %v181
      %1069 = vmatprep.subr.mxu0 0.0
      %1070 = vmatpush1.msra.mxu0 %v182
      %1071 = vmatprep.subr.mxu0 0.0
      %1072 = vmatpush1.msra.mxu0 %v183
      %1073 = vmatprep.subr.mxu0 0.0
      %1074 = vmatpush1.msra.mxu0 %v184
      %1075 = vmatprep.subr.mxu0 0.0
      %1076 = vmatpush1.msra.mxu0 %v185
      %1077 = vmatprep.subr.mxu0 0.0
      %1078 = vmatpush1.msra.mxu0 %v186
      %1079 = vmatprep.subr.mxu0 0.0
      %1080 = vmatpush1.msra.mxu0 %v187
      %1081 = vmatprep.subr.mxu0 0.0
      %1082 = vmatpush1.msra.mxu0 %v188
      %1083 = vmatprep.subr.mxu0 0.0
      %1084 = vmatpush1.msra.mxu0 %v189
      %1085 = vmatprep.subr.mxu0 0.0
      %1086 = vmatpush1.msra.mxu0 %v190
      %1087 = vmatprep.subr.mxu0 0.0
      %1088 = vmatpush1.msra.mxu0 %v191
      %1089 = vmatprep.subr.mxu0 0.0
      %1090 = vmatpush1.msra.mxu0 %v192
      %1091 = vmatprep.subr.mxu0 0.0
      %1092 = vmatpush1.msra.mxu0 %v193
      %1093 = vmatprep.subr.mxu0 0.0
      %1094 = vmatpush1.msra.mxu0 %v194
      %1095 = vmatprep.subr.mxu0 0.0
      %1096 = vmatpush1.msra.mxu0 %v195
      %1097 = vmatprep.subr.mxu0 0.0
      %1098 = vmatpush1.msra.mxu0 %v196
      %1099 = vmatprep.subr.mxu0 0.0
      %1100 = vmatpush1.msra.mxu0 %v197
      %1101 = vmatprep.subr.mxu0 0.0
      %1102 = vmatpush1.msra.mxu0 %v198
      %1103 = vmatprep.subr.mxu0 0.0
      %1104 = vmatpush1.msra.mxu0 %v199
      %1105 = vmatprep.subr.mxu0 0.0
      %1106 = vmatpush1.msra.mxu0 %v200
      %1107 = vmatprep.subr.mxu0 0.0
      %1108 = vmatpush1.msra.mxu0 %v201
      %1109 = vmatprep.subr.mxu0 0.0
      %1110 = vmatpush1.msra.mxu0 %v202
      %1111 = vmatprep.mubr.f32.mxu0 %v1004
      %1112 = vmatmul.mubr.f32.gmra.mrb[0].mxu0 %v1001
      %v1113 = vpop.f32.mrb[0].mxu0
      %v1114 = vadd.f32 %v255, %v1113
      %v1115 = vpop.f32.mrb[0].mxu0
      %1116 = vmatprep.mubr.f32.mxu0 %v1014
      %1117 = vmatmul.mubr.f32.gmra.mrb[0].mxu0 %v1012
      %v1118 = vpop.f32.mrb[0].mxu0
      %v1119 = vadd.f32 %v255, %v1118
      %v1120 = vpop.f32.mrb[0].mxu0
      %1121 = vmatprep.mubr.f32.mxu0 %v1022
      %1122 = vmatmul.mubr.f32.gmra.mrb[0].mxu0 %v1020
      %v1123 = vpop.f32.mrb[0].mxu0
      %v1124 = vadd.f32 %v255, %v1123
      %v1125 = vpop.f32.mrb[0].mxu0
      %1126 = vmatprep.mubr.f32.mxu0 %v1021
      %1127 = vmatmul.mubr.f32.gmra.mrb[0].mxu0 %v1019
      %v1128 = vpop.f32.mrb[0].mxu0
      %v1129 = vadd.f32 %v255, %v1128
      %v1130 = vpop.f32.mrb[0].mxu0
      %1131 = vdwg.mxu0
      %1132 = vmatprep.subr.mxu0 0.0
      %1133 = vmatpush1.msra.mxu0 %v203
      %1134 = vmatprep.subr.mxu0 0.0
      %1135 = vmatpush1.msra.mxu0 %v204
      %1136 = vmatprep.subr.mxu0 0.0
      %1137 = vmatpush1.msra.mxu0 %v205
      %1138 = vmatprep.subr.mxu0 0.0
      %1139 = vmatpush1.msra.mxu0 %v206
      %1140 = vmatprep.subr.mxu0 0.0
      %1141 = vmatpush1.msra.mxu0 %v207
      %1142 = vmatprep.subr.mxu0 0.0
      %1143 = vmatpush1.msra.mxu0 %v208
      %1144 = vmatprep.subr.mxu0 0.0
      %1145 = vmatpush1.msra.mxu0 %v209
      %1146 = vmatprep.subr.mxu0 0.0
      %1147 = vmatpush1.msra.mxu0 %v210
      %1148 = vmatprep.subr.mxu0 0.0
      %1149 = vmatpush1.msra.mxu0 %v211
      %1150 = vmatprep.subr.mxu0 0.0
      %1151 = vmatpush1.msra.mxu0 %v212
      %1152 = vmatprep.subr.mxu0 0.0
      %1153 = vmatpush1.msra.mxu0 %v213
      %1154 = vmatprep.subr.mxu0 0.0
      %1155 = vmatpush1.msra.mxu0 %v214
      %1156 = vmatprep.subr.mxu0 0.0
      %1157 = vmatpush1.msra.mxu0 %v215
      %1158 = vmatprep.subr.mxu0 0.0
      %1159 = vmatpush1.msra.mxu0 %v216
      %1160 = vmatprep.subr.mxu0 0.0
      %1161 = vmatpush1.msra.mxu0 %v217
      %1162 = vmatprep.subr.mxu0 0.0
      %1163 = vmatpush1.msra.mxu0 %v218
      %1164 = vmatprep.subr.mxu0 0.0
      %1165 = vmatpush1.msra.mxu0 %v219
      %1166 = vmatprep.subr.mxu0 0.0
      %1167 = vmatpush1.msra.mxu0 %v220
      %1168 = vmatprep.subr.mxu0 0.0
      %1169 = vmatpush1.msra.mxu0 %v221
      %1170 = vmatprep.subr.mxu0 0.0
      %1171 = vmatpush1.msra.mxu0 %v222
      %1172 = vmatprep.subr.mxu0 0.0
      %1173 = vmatpush1.msra.mxu0 %v223
      %1174 = vmatprep.subr.mxu0 0.0
      %1175 = vmatpush1.msra.mxu0 %v224
      %1176 = vmatprep.subr.mxu0 0.0
      %1177 = vmatpush1.msra.mxu0 %v225
      %1178 = vmatprep.subr.mxu0 0.0
      %1179 = vmatpush1.msra.mxu0 %v226
      %1180 = vmatprep.subr.mxu0 0.0
      %1181 = vmatpush1.msra.mxu0 %v227
      %1182 = vmatprep.subr.mxu0 0.0
      %1183 = vmatpush1.msra.mxu0 %v228
      %1184 = vmatprep.subr.mxu0 0.0
      %1185 = vmatpush1.msra.mxu0 %v229
      %1186 = vmatprep.subr.mxu0 0.0
      %1187 = vmatpush1.msra.mxu0 %v230
      %1188 = vmatprep.subr.mxu0 0.0
      %1189 = vmatpush1.msra.mxu0 %v231
      %1190 = vmatprep.subr.mxu0 0.0
      %1191 = vmatpush1.msra.mxu0 %v232
      %1192 = vmatprep.subr.mxu0 0.0
      %1193 = vmatpush1.msra.mxu0 %v272
      %1194 = vmatprep.subr.mxu0 0.0
      %1195 = vmatpush1.msra.mxu0 0.0
      %1196 = vmatprep.mubr.f32.mxu0 %v1039
      %1197 = vmatmul.mubr.f32.gmra.mrb[0].mxu0 %v1007
      %v1198 = vpop.f32.mrb[0].mxu0
      %v1199 = vadd.f32 %v1114, %v1198
      %v1200 = vpop.f32.mrb[0].mxu0
      %1201 = vmatprep.mubr.f32.mxu0 %v1041
      %1202 = vmatmul.mubr.f32.gmra.mrb[0].mxu0 %v1016
      %v1203 = vpop.f32.mrb[0].mxu0
      %v1204 = vadd.f32 %v1119, %v1203
      %v1205 = vpop.f32.mrb[0].mxu0
      %1206 = vmatprep.mubr.f32.mxu0 %v1043
      %1207 = vmatmul.mubr.f32.gmra.mrb[0].mxu0 %v1024
      %v1208 = vpop.f32.mrb[0].mxu0
      %v1209 = vadd.f32 %v1124, %v1208
      %v1210 = vpop.f32.mrb[0].mxu0
      %1211 = vmatprep.mubr.f32.mxu0 %v1045
      %1212 = vmatmul.mubr.f32.gmra.mrb[0].mxu0 %v1023
      %v1213 = vpop.f32.mrb[0].mxu0
      %v1214 = vadd.f32 %v1129, %v1213
      %v1215 = vpop.f32.mrb[0].mxu0
      %1216 = vdwg.mxu0
      %v1217 = vmax.f32 %v1199, 0.0
      %v1218 = vmax.f32 %v1204, 0.0
      %v1219 = vmax.f32 %v1209, 0.0
      %v1220 = vmax.f32 %v1214, 0.0
      %v1221 = vmax.f32 %v962, %v1217
      %v1222 = vmax.f32 %v963, %v1218
      %v1223 = vmax.f32 %v964, %v1219
      %v1224 = vmax.f32 %v965, %v1220
      %1225 = vst [vmem:[%s170] sm:$0xff] %v1221
      %1226 = vst [vmem:[%s170 + $0x8] sm:$0xff] %v1222
      %1227 = vst [vmem:[%s170 + $0x10] sm:$0xff] %v1223
      %1228 = vst [vmem:[%s170 + $0x18] sm:$0x1] %v1224
      %p1229 = scmp.lt.s32.totalorder %s14, 1
      %s1230 = scalar_select %p1229, %s14, 1
      %s1231 = smul.addr %s1230, 4
      %s1232 = smul.addr %s1231, 8
      %s1233 = scalar_lea.vmem %s3, %s1232
      // Predicated region
      $region33: #{net_forward.4} parent=31 // pred_check
        %p1234 = pneg %p100
      $region34: #{net_forward.4} parent=31 // pred_check_branch
        %1236 = sbr.rel (%p1234) target = $region36
      $region35: #{net_forward.4} parent=31 // pred_region
        _
      $region36: #{net_forward.4} parent=31 // pred_fallthru
        _
    $region32: #{net_forward.4} parent=5 // pred_fallthru
      _
    %p1237 = scmp.le.s32.totalorder 2, %s9
    // Predicated region
    $region37: #{net_forward.4} parent=5 // pred_check
      %p1238 = pneg %p1237
    $region38: #{net_forward.4} parent=5 // pred_check_branch
      %1240 = sbr.rel (%p1238) target = $region40
    $region39: #{net_forward.4} parent=5 // pred_region
      %s1241 = ssub.s32 %s9, 2
      // Predicated region
      $region41: #{net_forward.4} parent=39 // pred_check
        %p1242 = pneg %p106
      $region42: #{net_forward.4} parent=39 // pred_check_branch
        %1244 = sbr.rel (%p1242) target = $region44
      $region43: #{net_forward.4} parent=39 // pred_region
        %p1245 = scmp.lt.s32.totalorder %s15, 1
        %s1246 = scalar_select %p1245, %s15, 1
        %s1247 = smul.addr %s1246, 4
        %s1248 = smul.addr %s1247, 8
        %s1249 = scalar_lea.vmem %s3, %s1248
      $region44: #{net_forward.4} parent=39 // pred_fallthru
        _
    $region40: #{net_forward.4} parent=5 // pred_fallthru
      _
  $region6: #{net_forward.4} parent=0 // loop_footer
    %s13 = sadd.s32 1, %s9
  $region7: #{net_forward.4} parent=0 // loop_footer_branch
    %8 = sbr.rel target = $region3
  $region8: #{net_forward.4} parent=0 // loop_exit
    _

// kernel: net_forward.5
$region0: #{net_forward.5}
  #allocation0 [shape = 'u32[]', space=smem, size = 0x4, offset = 0x4, fixed_abs, tag = 'smem constant byte address 0x4 - core index']
  #allocation1 [shape = 'u32[144,128]{1,0:T(1,128)}', space=vmem, size = 0x12000, scoped, tag = 'internal scratch']
  %s0 = inlined_call_operand.vmem [shape: f32[2,1500], index: 0, kind: input, shape index: {}]
  %s1 = inlined_call_operand.vmem [shape: f32[1500,128], index: 1, kind: input, shape index: {}]
  %s2 = inlined_call_operand.vmem [shape: f32[1,128], index: 2, kind: input, shape index: {}]
  %s3 = inlined_call_operand.vmem [shape: f32[128,128], index: 3, kind: input, shape index: {}]
  %s4 = inlined_call_operand.vmem [shape: f32[1,128], index: 4, kind: input, shape index: {}]
  %s5 = inlined_call_operand.vmem [shape: f32[128,128], index: 5, kind: input, shape index: {}]
  %s6 = inlined_call_operand.vmem [shape: f32[1,128], index: 6, kind: input, shape index: {}]
  %s7 = inlined_call_operand.hbm [shape: f32[2,128], index: 7, kind: output, shape index: {}]
  %s8 = sld [smem:[#allocation0]]
  $region38: #{net_forward.5} parent=0
    _
  %s10 = ssub.s32 1, %s8
  %s11 = scalar_select 0, %s10, %s8
  $region1: #{net_forward.5} parent=0
    #allocation2 [shape = 'u8[1024]{0}', space=vmem, size = 0x400, scoped, tag = 'output window, operand 0, single buffered']
    #allocation3 [shape = 's32[1]{0}', space=sflag, size = 0x4, scoped, tag = 'scoped memory for net_forward.5']
    %12 = vsyncpa [#allocation3], 0
    // Predicated region
    $region2: #{net_forward.5} parent=1 // pred_check
      _
    $region3: #{net_forward.5} parent=1 // pred_check_branch
      %14 = sbr.rel (0) target = $region5
    $region4: #{net_forward.5} parent=1 // pred_region
      _
    $region5: #{net_forward.5} parent=1 // pred_fallthru
      _
    // Predicated region
    $region6: #{net_forward.5} parent=1 // pred_check
      _
    $region7: #{net_forward.5} parent=1 // pred_check_branch
      %16 = sbr.rel (0) target = $region9
    $region8: #{net_forward.5} parent=1 // pred_region
      _
    $region9: #{net_forward.5} parent=1 // pred_fallthru
      _
    // Predicated region
    $region10: #{net_forward.5} parent=1 // pred_check
      _
    $region11: #{net_forward.5} parent=1 // pred_check_branch
      %18 = sbr.rel (0) target = $region13
    $region12: #{net_forward.5} parent=1 // pred_region
      _
    $region13: #{net_forward.5} parent=1 // pred_fallthru
      _
    // Predicated region
    $region14: #{net_forward.5} parent=1 // pred_check
      _
    $region15: #{net_forward.5} parent=1 // pred_check_branch
      %20 = sbr.rel (0) target = $region17
    $region16: #{net_forward.5} parent=1 // pred_region
      _
    $region17: #{net_forward.5} parent=1 // pred_fallthru
      _
    // Predicated region
    $region18: #{net_forward.5} parent=1 // pred_check
      _
    $region19: #{net_forward.5} parent=1 // pred_check_branch
      %22 = sbr.rel (0) target = $region21
    $region20: #{net_forward.5} parent=1 // pred_region
      _
    $region21: #{net_forward.5} parent=1 // pred_fallthru
      _
    // Predicated region
    $region22: #{net_forward.5} parent=1 // pred_check
      _
    $region23: #{net_forward.5} parent=1 // pred_check_branch
      %24 = sbr.rel (0) target = $region25
    $region24: #{net_forward.5} parent=1 // pred_region
      _
    $region25: #{net_forward.5} parent=1 // pred_fallthru
      _
    // Predicated region
    $region26: #{net_forward.5} parent=1 // pred_check
      _
    $region27: #{net_forward.5} parent=1 // pred_check_branch
      %26 = sbr.rel (0) target = $region29
    $region28: #{net_forward.5} parent=1 // pred_region
      _
    $region29: #{net_forward.5} parent=1 // pred_fallthru
      _
    %v27 = vld [vmem:[%s0] sm:$0xff]
    %v28 = vld [vmem:[%s0 + $0x8] sm:$0xff]
    %v29 = vld [vmem:[%s0 + $0x10] sm:$0xff]
    %v30 = vld [vmem:[%s1] sm:$0xff]
    %v31 = vld [vmem:[%s1 + $0x8] sm:$0xff]
    %v32 = vld [vmem:[%s1 + $0x10] sm:$0xff]
    %v33 = vld [vmem:[%s1 + $0x18] sm:$0xff]
    %v34 = vld [vmem:[%s1 + $0x20] sm:$0xff]
    %v35 = vld [vmem:[%s1 + $0x28] sm:$0xff]
    %v36 = vld [vmem:[%s1 + $0x30] sm:$0xff]
    %v37 = vld [vmem:[%s1 + $0x38] sm:$0xff]
    %v38 = vld [vmem:[%s1 + $0x40] sm:$0xff]
    %v39 = vld [vmem:[%s1 + $0x48] sm:$0xff]
    %v40 = vld [vmem:[%s1 + $0x50] sm:$0xff]
    %v41 = vld [vmem:[%s1 + $0x58] sm:$0xff]
    %v42 = vld [vmem:[%s1 + $0x60] sm:$0xff]
    %v43 = vld [vmem:[%s1 + $0x68] sm:$0xff]
    %v44 = vld [vmem:[%s1 + $0x70] sm:$0xff]
    %v45 = vld [vmem:[%s1 + $0x78] sm:$0xff]
    %v46 = vld [vmem:[%s1 + $0x80] sm:$0xff]
    %v47 = vld [vmem:[%s1 + $0x88] sm:$0xff]
    %v48 = vld [vmem:[%s1 + $0x90] sm:$0xff]
    %v49 = vld [vmem:[%s1 + $0x98] sm:$0xff]
    %v50 = vld [vmem:[%s1 + $0xa0] sm:$0xff]
    %v51 = vld [vmem:[%s1 + $0xa8] sm:$0xff]
    %v52 = vld [vmem:[%s1 + $0xb0] sm:$0xff]
    %v53 = vld [vmem:[%s1 + $0xb8] sm:$0xff]
    %v54 = vld [vmem:[%s1 + $0xc0] sm:$0xff]
    %v55 = vld [vmem:[%s1 + $0xc8] sm:$0xff]
    %v56 = vld [vmem:[%s1 + $0xd0] sm:$0xff]
    %v57 = vld [vmem:[%s1 + $0xd8] sm:$0xff]
    %v58 = vld [vmem:[%s1 + $0xe0] sm:$0xff]
    %v59 = vld [vmem:[%s1 + $0xe8] sm:$0xff]
    %v60 = vld [vmem:[%s1 + $0xf0] sm:$0xff]
    %v61 = vld [vmem:[%s1 + $0xf8] sm:$0xff]
    %v62 = vld [vmem:[%s1 + $0x100] sm:$0xff]
    %v63 = vld [vmem:[%s1 + $0x108] sm:$0xff]
    %v64 = vld [vmem:[%s1 + $0x110] sm:$0xff]
    %v65 = vld [vmem:[%s1 + $0x118] sm:$0xff]
    %v66 = vld [vmem:[%s1 + $0x120] sm:$0xff]
    %v67 = vld [vmem:[%s1 + $0x128] sm:$0xff]
    %v68 = vld [vmem:[%s1 + $0x130] sm:$0xff]
    %v69 = vld [vmem:[%s1 + $0x138] sm:$0xff]
    %v70 = vld [vmem:[%s1 + $0x140] sm:$0xff]
    %v71 = vld [vmem:[%s1 + $0x148] sm:$0xff]
    %v72 = vld [vmem:[%s1 + $0x150] sm:$0xff]
    %v73 = vld [vmem:[%s1 + $0x158] sm:$0xff]
    %v74 = vld [vmem:[%s1 + $0x160] sm:$0xff]
    %v75 = vld [vmem:[%s1 + $0x168] sm:$0xff]
    %v76 = vld [vmem:[%s1 + $0x170] sm:$0xff]
    %v77 = vld [vmem:[%s1 + $0x178] sm:$0xff]
    %v78 = vld [vmem:[%s1 + $0x180] sm:$0xff]
    %v79 = vld [vmem:[%s1 + $0x188] sm:$0xff]
    %v80 = vld [vmem:[%s1 + $0x190] sm:$0xff]
    %v81 = vld [vmem:[%s1 + $0x198] sm:$0xff]
    %v82 = vld [vmem:[%s1 + $0x1a0] sm:$0xff]
    %v83 = vld [vmem:[%s1 + $0x1a8] sm:$0xff]
    %v84 = vld [vmem:[%s1 + $0x1b0] sm:$0xff]
    %v85 = vld [vmem:[%s1 + $0x1b8] sm:$0xff]
    %v86 = vld [vmem:[%s1 + $0x1c0] sm:$0xff]
    %v87 = vld [vmem:[%s1 + $0x1c8] sm:$0xff]
    %v88 = vld [vmem:[%s1 + $0x1d0] sm:$0xff]
    %v89 = vld [vmem:[%s1 + $0x1d8] sm:$0xff]
    %v90 = vld [vmem:[%s1 + $0x1e0] sm:$0xff]
    %v91 = vld [vmem:[%s1 + $0x1e8] sm:$0xff]
    %v92 = vld [vmem:[%s1 + $0x1f0] sm:$0xff]
    %v93 = vld [vmem:[%s1 + $0x1f8] sm:$0xff]
    %v94 = vld [vmem:[%s1 + $0x200] sm:$0xff]
    %v95 = vld [vmem:[%s1 + $0x208] sm:$0xff]
    %v96 = vld [vmem:[%s1 + $0x210] sm:$0xff]
    %v97 = vld [vmem:[%s1 + $0x218] sm:$0xff]
    %v98 = vld [vmem:[%s1 + $0x220] sm:$0xff]
    %v99 = vld [vmem:[%s1 + $0x228] sm:$0xff]
    %v100 = vld [vmem:[%s1 + $0x230] sm:$0xff]
    %v101 = vld [vmem:[%s1 + $0x238] sm:$0xff]
    %v102 = vld [vmem:[%s1 + $0x240] sm:$0xff]
    %v103 = vld [vmem:[%s1 + $0x248] sm:$0xff]
    %v104 = vld [vmem:[%s1 + $0x250] sm:$0xff]
    %v105 = vld [vmem:[%s1 + $0x258] sm:$0xff]
    %v106 = vld [vmem:[%s1 + $0x260] sm:$0xff]
    %v107 = vld [vmem:[%s1 + $0x268] sm:$0xff]
    %v108 = vld [vmem:[%s1 + $0x270] sm:$0xff]
    %v109 = vld [vmem:[%s1 + $0x278] sm:$0xff]
    %v110 = vld [vmem:[%s1 + $0x280] sm:$0xff]
    %v111 = vld [vmem:[%s1 + $0x288] sm:$0xff]
    %v112 = vld [vmem:[%s1 + $0x290] sm:$0xff]
    %v113 = vld [vmem:[%s1 + $0x298] sm:$0xff]
    %v114 = vld [vmem:[%s1 + $0x2a0] sm:$0xff]
    %v115 = vld [vmem:[%s1 + $0x2a8] sm:$0xff]
    %v116 = vld [vmem:[%s1 + $0x2b0] sm:$0xff]
    %v117 = vld [vmem:[%s1 + $0x2b8] sm:$0xff]
    %v118 = vld [vmem:[%s1 + $0x2c0] sm:$0xff]
    %v119 = vld [vmem:[%s1 + $0x2c8] sm:$0xff]
    %v120 = vld [vmem:[%s1 + $0x2d0] sm:$0xff]
    %v121 = vld [vmem:[%s1 + $0x2d8] sm:$0xff]
    %v122 = vld [vmem:[%s1 + $0x2e0] sm:$0xff]
    %v123 = vld [vmem:[%s1 + $0x2e8] sm:$0xff]
    %v124 = vld [vmem:[%s1 + $0x2f0] sm:$0xff]
    %v125 = vld [vmem:[%s1 + $0x2f8] sm:$0xff]
    %v126 = vld [vmem:[%s1 + $0x300] sm:$0xff]
    %v127 = vld [vmem:[%s1 + $0x308] sm:$0xff]
    %v128 = vld [vmem:[%s1 + $0x310] sm:$0xff]
    %v129 = vld [vmem:[%s1 + $0x318] sm:$0xff]
    %v130 = vld [vmem:[%s1 + $0x320] sm:$0xff]
    %v131 = vld [vmem:[%s1 + $0x328] sm:$0xff]
    %v132 = vld [vmem:[%s1 + $0x330] sm:$0xff]
    %v133 = vld [vmem:[%s1 + $0x338] sm:$0xff]
    %v134 = vld [vmem:[%s1 + $0x340] sm:$0xff]
    %v135 = vld [vmem:[%s1 + $0x348] sm:$0xff]
    %v136 = vld [vmem:[%s1 + $0x350] sm:$0xff]
    %v137 = vld [vmem:[%s1 + $0x358] sm:$0xff]
    %v138 = vld [vmem:[%s1 + $0x360] sm:$0xff]
    %v139 = vld [vmem:[%s1 + $0x368] sm:$0xff]
    %v140 = vld [vmem:[%s1 + $0x370] sm:$0xff]
    %v141 = vld [vmem:[%s1 + $0x378] sm:$0xff]
    %v142 = vld [vmem:[%s1 + $0x380] sm:$0xff]
    %v143 = vld [vmem:[%s1 + $0x388] sm:$0xff]
    %v144 = vld [vmem:[%s1 + $0x390] sm:$0xff]
    %v145 = vld [vmem:[%s1 + $0x398] sm:$0xff]
    %v146 = vld [vmem:[%s1 + $0x3a0] sm:$0xff]
    %v147 = vld [vmem:[%s1 + $0x3a8] sm:$0xff]
    %v148 = vld [vmem:[%s1 + $0x3b0] sm:$0xff]
    %v149 = vld [vmem:[%s1 + $0x3b8] sm:$0xff]
    %v150 = vld [vmem:[%s1 + $0x3c0] sm:$0xff]
    %v151 = vld [vmem:[%s1 + $0x3c8] sm:$0xff]
    %v152 = vld [vmem:[%s1 + $0x3d0] sm:$0xff]
    %v153 = vld [vmem:[%s1 + $0x3d8] sm:$0xff]
    %v154 = vld [vmem:[%s1 + $0x3e0] sm:$0xff]
    %v155 = vld [vmem:[%s1 + $0x3e8] sm:$0xff]
    %v156 = vld [vmem:[%s1 + $0x3f0] sm:$0xff]
    %v157 = vld [vmem:[%s1 + $0x3f8] sm:$0xff]
    %v158 = vld [vmem:[%s1 + $0x400] sm:$0xff]
    %v159 = vld [vmem:[%s1 + $0x408] sm:$0xff]
    %v160 = vld [vmem:[%s1 + $0x410] sm:$0xff]
    %v161 = vld [vmem:[%s1 + $0x418] sm:$0xff]
    %v162 = vld [vmem:[%s1 + $0x420] sm:$0xff]
    %v163 = vld [vmem:[%s1 + $0x428] sm:$0xff]
    %v164 = vld [vmem:[%s1 + $0x430] sm:$0xff]
    %v165 = vld [vmem:[%s1 + $0x438] sm:$0xff]
    %v166 = vld [vmem:[%s1 + $0x440] sm:$0xff]
    %v167 = vld [vmem:[%s1 + $0x448] sm:$0xff]
    %v168 = vld [vmem:[%s1 + $0x450] sm:$0xff]
    %v169 = vld [vmem:[%s1 + $0x458] sm:$0xff]
    %v170 = vld [vmem:[%s1 + $0x460] sm:$0xff]
    %v171 = vld [vmem:[%s1 + $0x468] sm:$0xff]
    %v172 = vld [vmem:[%s1 + $0x470] sm:$0xff]
    %v173 = vld [vmem:[%s1 + $0x478] sm:$0xff]
    %v174 = vld [vmem:[%s1 + $0x480] sm:$0xff]
    %v175 = vld [vmem:[%s1 + $0x488] sm:$0xff]
    %v176 = vld [vmem:[%s1 + $0x490] sm:$0xff]
    %v177 = vld [vmem:[%s1 + $0x498] sm:$0xff]
    %v178 = vld [vmem:[%s1 + $0x4a0] sm:$0xff]
    %v179 = vld [vmem:[%s1 + $0x4a8] sm:$0xff]
    %v180 = vld [vmem:[%s1 + $0x4b0] sm:$0xff]
    %v181 = vld [vmem:[%s1 + $0x4b8] sm:$0xff]
    %v182 = vld [vmem:[%s1 + $0x4c0] sm:$0xff]
    %v183 = vld [vmem:[%s1 + $0x4c8] sm:$0xff]
    %v184 = vld [vmem:[%s1 + $0x4d0] sm:$0xff]
    %v185 = vld [vmem:[%s1 + $0x4d8] sm:$0xff]
    %v186 = vld [vmem:[%s1 + $0x4e0] sm:$0xff]
    %v187 = vld [vmem:[%s1 + $0x4e8] sm:$0xff]
    %v188 = vld [vmem:[%s1 + $0x4f0] sm:$0xff]
    %v189 = vld [vmem:[%s1 + $0x4f8] sm:$0xff]
    %v190 = vld [vmem:[%s1 + $0x500] sm:$0xff]
    %v191 = vld [vmem:[%s1 + $0x508] sm:$0xff]
    %v192 = vld [vmem:[%s1 + $0x510] sm:$0xff]
    %v193 = vld [vmem:[%s1 + $0x518] sm:$0xff]
    %v194 = vld [vmem:[%s1 + $0x520] sm:$0xff]
    %v195 = vld [vmem:[%s1 + $0x528] sm:$0xff]
    %v196 = vld [vmem:[%s1 + $0x530] sm:$0xff]
    %v197 = vld [vmem:[%s1 + $0x538] sm:$0xff]
    %v198 = vld [vmem:[%s1 + $0x540] sm:$0xff]
    %v199 = vld [vmem:[%s1 + $0x548] sm:$0xff]
    %v200 = vld [vmem:[%s1 + $0x550] sm:$0xff]
    %v201 = vld [vmem:[%s1 + $0x558] sm:$0xff]
    %v202 = vld [vmem:[%s1 + $0x560] sm:$0xff]
    %v203 = vld [vmem:[%s1 + $0x568] sm:$0xff]
    %v204 = vld [vmem:[%s1 + $0x570] sm:$0xff]
    %v205 = vld [vmem:[%s1 + $0x578] sm:$0xff]
    %v206 = vld [vmem:[%s1 + $0x580] sm:$0xff]
    %v207 = vld [vmem:[%s1 + $0x588] sm:$0xff]
    %v208 = vld [vmem:[%s1 + $0x590] sm:$0xff]
    %v209 = vld [vmem:[%s1 + $0x598] sm:$0xff]
    %v210 = vld [vmem:[%s1 + $0x5a0] sm:$0xff]
    %v211 = vld [vmem:[%s1 + $0x5a8] sm:$0xff]
    %v212 = vld [vmem:[%s1 + $0x5b0] sm:$0xff]
    %v213 = vld [vmem:[%s1 + $0x5b8] sm:$0xff]
    %v214 = vld [vmem:[%s1 + $0x5c0] sm:$0xff]
    %v215 = vld [vmem:[%s1 + $0x5c8] sm:$0xff]
    %v216 = vld [vmem:[%s1 + $0x5d0] sm:$0xff]
    %v217 = vld [vmem:[%s1 + $0x5d8] sm:$0xf]
    %v218 = vld [vmem:[%s2] sm:$0x1]
    %v220 = vlaneseq
    %v221 = vshrl.u32 %v220, 7
    %v222 = vsub.s32 0, %v221
    %v223 = vrot.slane %v218, %v222
    %v228 = vcombine.high %v27, %v27
    %v230 = vunpack.c.l.s4 1983009808
    %v231 = vunpack.c.0.s8 %v230
    %v232 = vlaneseq
    %v233 = vshrl.u32 %v232, 7
    %v234 = vsub.s32 %v231, %v233
    %v235 = vrot.slane %v27, %v234
    %v237 = vunpack.c.l.s4 1983009808
    %v238 = vunpack.c.0.s8 %v237
    %v239 = vlaneseq
    %v240 = vshrl.u32 %v239, 7
    %v241 = vsub.s32 %v238, %v240
    %v242 = vrot.slane %v228, %v241
    %v243 = vcombine.high %v235, %v235
    %v244 = vcombine.high %v242, %v242
    %v245 = vcombine.high %v28, %v28
    %v247 = vunpack.c.l.s4 1983009808
    %v248 = vunpack.c.0.s8 %v247
    %v249 = vlaneseq
    %v250 = vshrl.u32 %v249, 7
    %v251 = vsub.s32 %v248, %v250
    %v252 = vrot.slane %v28, %v251
    %v254 = vunpack.c.l.s4 1983009808
    %v255 = vunpack.c.0.s8 %v254
    %v256 = vlaneseq
    %v257 = vshrl.u32 %v256, 7
    %v258 = vsub.s32 %v255, %v257
    %v259 = vrot.slane %v245, %v258
    %v260 = vcombine.high %v252, %v252
    %v261 = vcombine.high %v259, %v259
    %v262 = vcombine.high %v29, %v29
    %v264 = vunpack.c.l.s4 1983009808
    %v265 = vunpack.c.0.s8 %v264
    %v266 = vlaneseq
    %v267 = vshrl.u32 %v266, 7
    %v268 = vsub.s32 %v265, %v267
    %v269 = vrot.slane %v29, %v268
    %v271 = vunpack.c.l.s4 1983009808
    %v272 = vunpack.c.0.s8 %v271
    %v273 = vlaneseq
    %v274 = vshrl.u32 %v273, 7
    %v275 = vsub.s32 %v272, %v274
    %v276 = vrot.slane %v262, %v275
    %v277 = vcombine.high %v269, %v269
    %v278 = vcombine.high %v276, %v276
    %vm290 = vcmask 752640
    %v291 = vsel %vm290, %v278, 0
    %vm293 = vcmask 1043456
    %v295 = vsel %vm293, %v217, 0
    %297 = vmatprep.subr.mxu0 0.0
    %298 = vmatpush1.msra.mxu0 %v30
    %299 = vmatprep.subr.mxu0 0.0
    %300 = vmatpush1.msra.mxu0 %v31
    %301 = vmatprep.subr.mxu0 0.0
    %302 = vmatpush1.msra.mxu0 %v32
    %303 = vmatprep.subr.mxu0 0.0
    %304 = vmatpush1.msra.mxu0 %v33
    %305 = vmatprep.subr.mxu0 0.0
    %306 = vmatpush1.msra.mxu0 %v34
    %307 = vmatprep.subr.mxu0 0.0
    %308 = vmatpush1.msra.mxu0 %v35
    %309 = vmatprep.subr.mxu0 0.0
    %310 = vmatpush1.msra.mxu0 %v36
    %311 = vmatprep.subr.mxu0 0.0
    %312 = vmatpush1.msra.mxu0 %v37
    %313 = vmatprep.subr.mxu0 0.0
    %314 = vmatpush1.msra.mxu0 %v38
    %315 = vmatprep.subr.mxu0 0.0
    %316 = vmatpush1.msra.mxu0 %v39
    %317 = vmatprep.subr.mxu0 0.0
    %318 = vmatpush1.msra.mxu0 %v40
    %319 = vmatprep.subr.mxu0 0.0
    %320 = vmatpush1.msra.mxu0 %v41
    %321 = vmatprep.subr.mxu0 0.0
    %322 = vmatpush1.msra.mxu0 %v42
    %323 = vmatprep.subr.mxu0 0.0
    %324 = vmatpush1.msra.mxu0 %v43
    %325 = vmatprep.subr.mxu0 0.0
    %326 = vmatpush1.msra.mxu0 %v44
    %327 = vmatprep.subr.mxu0 0.0
    %328 = vmatpush1.msra.mxu0 %v45
    %329 = vmatprep.subr.mxu0 0.0
    %330 = vmatpush1.msra.mxu0 %v46
    %331 = vmatprep.subr.mxu0 0.0
    %332 = vmatpush1.msra.mxu0 %v47
    %333 = vmatprep.subr.mxu0 0.0
    %334 = vmatpush1.msra.mxu0 %v48
    %335 = vmatprep.subr.mxu0 0.0
    %336 = vmatpush1.msra.mxu0 %v49
    %337 = vmatprep.subr.mxu0 0.0
    %338 = vmatpush1.msra.mxu0 %v50
    %339 = vmatprep.subr.mxu0 0.0
    %340 = vmatpush1.msra.mxu0 %v51
    %341 = vmatprep.subr.mxu0 0.0
    %342 = vmatpush1.msra.mxu0 %v52
    %343 = vmatprep.subr.mxu0 0.0
    %344 = vmatpush1.msra.mxu0 %v53
    %345 = vmatprep.subr.mxu0 0.0
    %346 = vmatpush1.msra.mxu0 %v54
    %347 = vmatprep.subr.mxu0 0.0
    %348 = vmatpush1.msra.mxu0 %v55
    %349 = vmatprep.subr.mxu0 0.0
    %350 = vmatpush1.msra.mxu0 %v56
    %351 = vmatprep.subr.mxu0 0.0
    %352 = vmatpush1.msra.mxu0 %v57
    %353 = vmatprep.subr.mxu0 0.0
    %354 = vmatpush1.msra.mxu0 %v58
    %355 = vmatprep.subr.mxu0 0.0
    %356 = vmatpush1.msra.mxu0 %v59
    %357 = vmatprep.subr.mxu0 0.0
    %358 = vmatpush1.msra.mxu0 %v60
    %359 = vmatprep.subr.mxu0 0.0
    %360 = vmatpush1.msra.mxu0 %v61
    %361 = vmatprep.mubr.f32.mxu0 %v243
    %362 = vmatmul.mubr.f32.gmra.mrb[0].mxu0 %v235
    %v363 = vpop.f32.mrb[0].mxu0
    %v364 = vadd.f32 %v223, %v363
    %v365 = vpop.f32.mrb[0].mxu0
    %366 = vdwg.mxu0
    %367 = vmatprep.subr.mxu0 0.0
    %368 = vmatpush1.msra.mxu0 %v62
    %369 = vmatprep.subr.mxu0 0.0
    %370 = vmatpush1.msra.mxu0 %v63
    %371 = vmatprep.subr.mxu0 0.0
    %372 = vmatpush1.msra.mxu0 %v64
    %373 = vmatprep.subr.mxu0 0.0
    %374 = vmatpush1.msra.mxu0 %v65
    %375 = vmatprep.subr.mxu0 0.0
    %376 = vmatpush1.msra.mxu0 %v66
    %377 = vmatprep.subr.mxu0 0.0
    %378 = vmatpush1.msra.mxu0 %v67
    %379 = vmatprep.subr.mxu0 0.0
    %380 = vmatpush1.msra.mxu0 %v68
    %381 = vmatprep.subr.mxu0 0.0
    %382 = vmatpush1.msra.mxu0 %v69
    %383 = vmatprep.subr.mxu0 0.0
    %384 = vmatpush1.msra.mxu0 %v70
    %385 = vmatprep.subr.mxu0 0.0
    %386 = vmatpush1.msra.mxu0 %v71
    %387 = vmatprep.subr.mxu0 0.0
    %388 = vmatpush1.msra.mxu0 %v72
    %389 = vmatprep.subr.mxu0 0.0
    %390 = vmatpush1.msra.mxu0 %v73
    %391 = vmatprep.subr.mxu0 0.0
    %392 = vmatpush1.msra.mxu0 %v74
    %393 = vmatprep.subr.mxu0 0.0
    %394 = vmatpush1.msra.mxu0 %v75
    %395 = vmatprep.subr.mxu0 0.0
    %396 = vmatpush1.msra.mxu0 %v76
    %397 = vmatprep.subr.mxu0 0.0
    %398 = vmatpush1.msra.mxu0 %v77
    %399 = vmatprep.subr.mxu0 0.0
    %400 = vmatpush1.msra.mxu0 %v78
    %401 = vmatprep.subr.mxu0 0.0
    %402 = vmatpush1.msra.mxu0 %v79
    %403 = vmatprep.subr.mxu0 0.0
    %404 = vmatpush1.msra.mxu0 %v80
    %405 = vmatprep.subr.mxu0 0.0
    %406 = vmatpush1.msra.mxu0 %v81
    %407 = vmatprep.subr.mxu0 0.0
    %408 = vmatpush1.msra.mxu0 %v82
    %409 = vmatprep.subr.mxu0 0.0
    %410 = vmatpush1.msra.mxu0 %v83
    %411 = vmatprep.subr.mxu0 0.0
    %412 = vmatpush1.msra.mxu0 %v84
    %413 = vmatprep.subr.mxu0 0.0
    %414 = vmatpush1.msra.mxu0 %v85
    %415 = vmatprep.subr.mxu0 0.0
    %416 = vmatpush1.msra.mxu0 %v86
    %417 = vmatprep.subr.mxu0 0.0
    %418 = vmatpush1.msra.mxu0 %v87
    %419 = vmatprep.subr.mxu0 0.0
    %420 = vmatpush1.msra.mxu0 %v88
    %421 = vmatprep.subr.mxu0 0.0
    %422 = vmatpush1.msra.mxu0 %v89
    %423 = vmatprep.subr.mxu0 0.0
    %424 = vmatpush1.msra.mxu0 %v90
    %425 = vmatprep.subr.mxu0 0.0
    %426 = vmatpush1.msra.mxu0 %v91
    %427 = vmatprep.subr.mxu0 0.0
    %428 = vmatpush1.msra.mxu0 %v92
    %429 = vmatprep.subr.mxu0 0.0
    %430 = vmatpush1.msra.mxu0 %v93
    %431 = vmatprep.mubr.f32.mxu0 %v244
    %432 = vmatmul.mubr.f32.gmra.mrb[0].mxu0 %v242
    %v433 = vpop.f32.mrb[0].mxu0
    %v434 = vadd.f32 %v364, %v433
    %v435 = vpop.f32.mrb[0].mxu0
    %436 = vdwg.mxu0
    %437 = vmatprep.subr.mxu0 0.0
    %438 = vmatpush1.msra.mxu0 %v94
    %439 = vmatprep.subr.mxu0 0.0
    %440 = vmatpush1.msra.mxu0 %v95
    %441 = vmatprep.subr.mxu0 0.0
    %442 = vmatpush1.msra.mxu0 %v96
    %443 = vmatprep.subr.mxu0 0.0
    %444 = vmatpush1.msra.mxu0 %v97
    %445 = vmatprep.subr.mxu0 0.0
    %446 = vmatpush1.msra.mxu0 %v98
    %447 = vmatprep.subr.mxu0 0.0
    %448 = vmatpush1.msra.mxu0 %v99
    %449 = vmatprep.subr.mxu0 0.0
    %450 = vmatpush1.msra.mxu0 %v100
    %451 = vmatprep.subr.mxu0 0.0
    %452 = vmatpush1.msra.mxu0 %v101
    %453 = vmatprep.subr.mxu0 0.0
    %454 = vmatpush1.msra.mxu0 %v102
    %455 = vmatprep.subr.mxu0 0.0
    %456 = vmatpush1.msra.mxu0 %v103
    %457 = vmatprep.subr.mxu0 0.0
    %458 = vmatpush1.msra.mxu0 %v104
    %459 = vmatprep.subr.mxu0 0.0
    %460 = vmatpush1.msra.mxu0 %v105
    %461 = vmatprep.subr.mxu0 0.0
    %462 = vmatpush1.msra.mxu0 %v106
    %463 = vmatprep.subr.mxu0 0.0
    %464 = vmatpush1.msra.mxu0 %v107
    %465 = vmatprep.subr.mxu0 0.0
    %466 = vmatpush1.msra.mxu0 %v108
    %467 = vmatprep.subr.mxu0 0.0
    %468 = vmatpush1.msra.mxu0 %v109
    %469 = vmatprep.subr.mxu0 0.0
    %470 = vmatpush1.msra.mxu0 %v110
    %471 = vmatprep.subr.mxu0 0.0
    %472 = vmatpush1.msra.mxu0 %v111
    %473 = vmatprep.subr.mxu0 0.0
    %474 = vmatpush1.msra.mxu0 %v112
    %475 = vmatprep.subr.mxu0 0.0
    %476 = vmatpush1.msra.mxu0 %v113
    %477 = vmatprep.subr.mxu0 0.0
    %478 = vmatpush1.msra.mxu0 %v114
    %479 = vmatprep.subr.mxu0 0.0
    %480 = vmatpush1.msra.mxu0 %v115
    %481 = vmatprep.subr.mxu0 0.0
    %482 = vmatpush1.msra.mxu0 %v116
    %483 = vmatprep.subr.mxu0 0.0
    %484 = vmatpush1.msra.mxu0 %v117
    %485 = vmatprep.subr.mxu0 0.0
    %486 = vmatpush1.msra.mxu0 %v118
    %487 = vmatprep.subr.mxu0 0.0
    %488 = vmatpush1.msra.mxu0 %v119
    %489 = vmatprep.subr.mxu0 0.0
    %490 = vmatpush1.msra.mxu0 %v120
    %491 = vmatprep.subr.mxu0 0.0
    %492 = vmatpush1.msra.mxu0 %v121
    %493 = vmatprep.subr.mxu0 0.0
    %494 = vmatpush1.msra.mxu0 %v122
    %495 = vmatprep.subr.mxu0 0.0
    %496 = vmatpush1.msra.mxu0 %v123
    %497 = vmatprep.subr.mxu0 0.0
    %498 = vmatpush1.msra.mxu0 %v124
    %499 = vmatprep.subr.mxu0 0.0
    %500 = vmatpush1.msra.mxu0 %v125
    %501 = vmatprep.mubr.f32.mxu0 %v260
    %502 = vmatmul.mubr.f32.gmra.mrb[0].mxu0 %v252
    %v503 = vpop.f32.mrb[0].mxu0
    %v504 = vadd.f32 %v434, %v503
    %v505 = vpop.f32.mrb[0].mxu0
    %506 = vdwg.mxu0
    %507 = vmatprep.subr.mxu0 0.0
    %508 = vmatpush1.msra.mxu0 %v126
    %509 = vmatprep.subr.mxu0 0.0
    %510 = vmatpush1.msra.mxu0 %v127
    %511 = vmatprep.subr.mxu0 0.0
    %512 = vmatpush1.msra.mxu0 %v128
    %513 = vmatprep.subr.mxu0 0.0
    %514 = vmatpush1.msra.mxu0 %v129
    %515 = vmatprep.subr.mxu0 0.0
    %516 = vmatpush1.msra.mxu0 %v130
    %517 = vmatprep.subr.mxu0 0.0
    %518 = vmatpush1.msra.mxu0 %v131
    %519 = vmatprep.subr.mxu0 0.0
    %520 = vmatpush1.msra.mxu0 %v132
    %521 = vmatprep.subr.mxu0 0.0
    %522 = vmatpush1.msra.mxu0 %v133
    %523 = vmatprep.subr.mxu0 0.0
    %524 = vmatpush1.msra.mxu0 %v134
    %525 = vmatprep.subr.mxu0 0.0
    %526 = vmatpush1.msra.mxu0 %v135
    %527 = vmatprep.subr.mxu0 0.0
    %528 = vmatpush1.msra.mxu0 %v136
    %529 = vmatprep.subr.mxu0 0.0
    %530 = vmatpush1.msra.mxu0 %v137
    %531 = vmatprep.subr.mxu0 0.0
    %532 = vmatpush1.msra.mxu0 %v138
    %533 = vmatprep.subr.mxu0 0.0
    %534 = vmatpush1.msra.mxu0 %v139
    %535 = vmatprep.subr.mxu0 0.0
    %536 = vmatpush1.msra.mxu0 %v140
    %537 = vmatprep.subr.mxu0 0.0
    %538 = vmatpush1.msra.mxu0 %v141
    %539 = vmatprep.subr.mxu0 0.0
    %540 = vmatpush1.msra.mxu0 %v142
    %541 = vmatprep.subr.mxu0 0.0
    %542 = vmatpush1.msra.mxu0 %v143
    %543 = vmatprep.subr.mxu0 0.0
    %544 = vmatpush1.msra.mxu0 %v144
    %545 = vmatprep.subr.mxu0 0.0
    %546 = vmatpush1.msra.mxu0 %v145
    %547 = vmatprep.subr.mxu0 0.0
    %548 = vmatpush1.msra.mxu0 %v146
    %549 = vmatprep.subr.mxu0 0.0
    %550 = vmatpush1.msra.mxu0 %v147
    %551 = vmatprep.subr.mxu0 0.0
    %552 = vmatpush1.msra.mxu0 %v148
    %553 = vmatprep.subr.mxu0 0.0
    %554 = vmatpush1.msra.mxu0 %v149
    %555 = vmatprep.subr.mxu0 0.0
    %556 = vmatpush1.msra.mxu0 %v150
    %557 = vmatprep.subr.mxu0 0.0
    %558 = vmatpush1.msra.mxu0 %v151
    %559 = vmatprep.subr.mxu0 0.0
    %560 = vmatpush1.msra.mxu0 %v152
    %561 = vmatprep.subr.mxu0 0.0
    %562 = vmatpush1.msra.mxu0 %v153
    %563 = vmatprep.subr.mxu0 0.0
    %564 = vmatpush1.msra.mxu0 %v154
    %565 = vmatprep.subr.mxu0 0.0
    %566 = vmatpush1.msra.mxu0 %v155
    %567 = vmatprep.subr.mxu0 0.0
    %568 = vmatpush1.msra.mxu0 %v156
    %569 = vmatprep.subr.mxu0 0.0
    %570 = vmatpush1.msra.mxu0 %v157
    %571 = vmatprep.mubr.f32.mxu0 %v261
    %572 = vmatmul.mubr.f32.gmra.mrb[0].mxu0 %v259
    %v573 = vpop.f32.mrb[0].mxu0
    %v574 = vadd.f32 %v504, %v573
    %v575 = vpop.f32.mrb[0].mxu0
    %576 = vdwg.mxu0
    %577 = vmatprep.subr.mxu0 0.0
    %578 = vmatpush1.msra.mxu0 %v158
    %579 = vmatprep.subr.mxu0 0.0
    %580 = vmatpush1.msra.mxu0 %v159
    %581 = vmatprep.subr.mxu0 0.0
    %582 = vmatpush1.msra.mxu0 %v160
    %583 = vmatprep.subr.mxu0 0.0
    %584 = vmatpush1.msra.mxu0 %v161
    %585 = vmatprep.subr.mxu0 0.0
    %586 = vmatpush1.msra.mxu0 %v162
    %587 = vmatprep.subr.mxu0 0.0
    %588 = vmatpush1.msra.mxu0 %v163
    %589 = vmatprep.subr.mxu0 0.0
    %590 = vmatpush1.msra.mxu0 %v164
    %591 = vmatprep.subr.mxu0 0.0
    %592 = vmatpush1.msra.mxu0 %v165
    %593 = vmatprep.subr.mxu0 0.0
    %594 = vmatpush1.msra.mxu0 %v166
    %595 = vmatprep.subr.mxu0 0.0
    %596 = vmatpush1.msra.mxu0 %v167
    %597 = vmatprep.subr.mxu0 0.0
    %598 = vmatpush1.msra.mxu0 %v168
    %599 = vmatprep.subr.mxu0 0.0
    %600 = vmatpush1.msra.mxu0 %v169
    %601 = vmatprep.subr.mxu0 0.0
    %602 = vmatpush1.msra.mxu0 %v170
    %603 = vmatprep.subr.mxu0 0.0
    %604 = vmatpush1.msra.mxu0 %v171
    %605 = vmatprep.subr.mxu0 0.0
    %606 = vmatpush1.msra.mxu0 %v172
    %607 = vmatprep.subr.mxu0 0.0
    %608 = vmatpush1.msra.mxu0 %v173
    %609 = vmatprep.subr.mxu0 0.0
    %610 = vmatpush1.msra.mxu0 %v174
    %611 = vmatprep.subr.mxu0 0.0
    %612 = vmatpush1.msra.mxu0 %v175
    %613 = vmatprep.subr.mxu0 0.0
    %614 = vmatpush1.msra.mxu0 %v176
    %615 = vmatprep.subr.mxu0 0.0
    %616 = vmatpush1.msra.mxu0 %v177
    %617 = vmatprep.subr.mxu0 0.0
    %618 = vmatpush1.msra.mxu0 %v178
    %619 = vmatprep.subr.mxu0 0.0
    %620 = vmatpush1.msra.mxu0 %v179
    %621 = vmatprep.subr.mxu0 0.0
    %622 = vmatpush1.msra.mxu0 %v180
    %623 = vmatprep.subr.mxu0 0.0
    %624 = vmatpush1.msra.mxu0 %v181
    %625 = vmatprep.subr.mxu0 0.0
    %626 = vmatpush1.msra.mxu0 %v182
    %627 = vmatprep.subr.mxu0 0.0
    %628 = vmatpush1.msra.mxu0 %v183
    %629 = vmatprep.subr.mxu0 0.0
    %630 = vmatpush1.msra.mxu0 %v184
    %631 = vmatprep.subr.mxu0 0.0
    %632 = vmatpush1.msra.mxu0 %v185
    %633 = vmatprep.subr.mxu0 0.0
    %634 = vmatpush1.msra.mxu0 %v186
    %635 = vmatprep.subr.mxu0 0.0
    %636 = vmatpush1.msra.mxu0 %v187
    %637 = vmatprep.subr.mxu0 0.0
    %638 = vmatpush1.msra.mxu0 %v188
    %639 = vmatprep.subr.mxu0 0.0
    %640 = vmatpush1.msra.mxu0 %v189
    %641 = vmatprep.mubr.f32.mxu0 %v277
    %642 = vmatmul.mubr.f32.gmra.mrb[0].mxu0 %v269
    %v643 = vpop.f32.mrb[0].mxu0
    %v644 = vadd.f32 %v574, %v643
    %v645 = vpop.f32.mrb[0].mxu0
    %646 = vdwg.mxu0
    %647 = vmatprep.subr.mxu0 0.0
    %648 = vmatpush1.msra.mxu0 %v190
    %649 = vmatprep.subr.mxu0 0.0
    %650 = vmatpush1.msra.mxu0 %v191
    %651 = vmatprep.subr.mxu0 0.0
    %652 = vmatpush1.msra.mxu0 %v192
    %653 = vmatprep.subr.mxu0 0.0
    %654 = vmatpush1.msra.mxu0 %v193
    %655 = vmatprep.subr.mxu0 0.0
    %656 = vmatpush1.msra.mxu0 %v194
    %657 = vmatprep.subr.mxu0 0.0
    %658 = vmatpush1.msra.mxu0 %v195
    %659 = vmatprep.subr.mxu0 0.0
    %660 = vmatpush1.msra.mxu0 %v196
    %661 = vmatprep.subr.mxu0 0.0
    %662 = vmatpush1.msra.mxu0 %v197
    %663 = vmatprep.subr.mxu0 0.0
    %664 = vmatpush1.msra.mxu0 %v198
    %665 = vmatprep.subr.mxu0 0.0
    %666 = vmatpush1.msra.mxu0 %v199
    %667 = vmatprep.subr.mxu0 0.0
    %668 = vmatpush1.msra.mxu0 %v200
    %669 = vmatprep.subr.mxu0 0.0
    %670 = vmatpush1.msra.mxu0 %v201
    %671 = vmatprep.subr.mxu0 0.0
    %672 = vmatpush1.msra.mxu0 %v202
    %673 = vmatprep.subr.mxu0 0.0
    %674 = vmatpush1.msra.mxu0 %v203
    %675 = vmatprep.subr.mxu0 0.0
    %676 = vmatpush1.msra.mxu0 %v204
    %677 = vmatprep.subr.mxu0 0.0
    %678 = vmatpush1.msra.mxu0 %v205
    %679 = vmatprep.subr.mxu0 0.0
    %680 = vmatpush1.msra.mxu0 %v206
    %681 = vmatprep.subr.mxu0 0.0
    %682 = vmatpush1.msra.mxu0 %v207
    %683 = vmatprep.subr.mxu0 0.0
    %684 = vmatpush1.msra.mxu0 %v208
    %685 = vmatprep.subr.mxu0 0.0
    %686 = vmatpush1.msra.mxu0 %v209
    %687 = vmatprep.subr.mxu0 0.0
    %688 = vmatpush1.msra.mxu0 %v210
    %689 = vmatprep.subr.mxu0 0.0
    %690 = vmatpush1.msra.mxu0 %v211
    %691 = vmatprep.subr.mxu0 0.0
    %692 = vmatpush1.msra.mxu0 %v212
    %693 = vmatprep.subr.mxu0 0.0
    %694 = vmatpush1.msra.mxu0 %v213
    %695 = vmatprep.subr.mxu0 0.0
    %696 = vmatpush1.msra.mxu0 %v214
    %697 = vmatprep.subr.mxu0 0.0
    %698 = vmatpush1.msra.mxu0 %v215
    %699 = vmatprep.subr.mxu0 0.0
    %700 = vmatpush1.msra.mxu0 %v216
    %701 = vmatprep.subr.mxu0 0.0
    %702 = vmatpush1.msra.mxu0 %v295
    %703 = vmatprep.subr.mxu0 0.0
    %704 = vmatpush1.msra.mxu0 0.0
    %705 = vmatprep.subr.mxu0 0.0
    %706 = vmatpush1.msra.mxu0 0.0
    %707 = vmatprep.subr.mxu0 0.0
    %708 = vmatpush1.msra.mxu0 0.0
    %709 = vmatprep.subr.mxu0 0.0
    %710 = vmatpush1.msra.mxu0 0.0
    %711 = vmatprep.mubr.f32.mxu0 %v291
    %712 = vmatmul.mubr.f32.gmra.mrb[0].mxu0 %v276
    %v713 = vpop.f32.mrb[0].mxu0
    %v714 = vadd.f32 %v644, %v713
    %v715 = vpop.f32.mrb[0].mxu0
    %716 = vdwg.mxu0
    %v717 = vmax.f32 %v714, 0.0
    %v718 = vld [vmem:[%s3] sm:$0xff]
    %v719 = vld [vmem:[%s3 + $0x8] sm:$0xff]
    %v720 = vld [vmem:[%s3 + $0x10] sm:$0xff]
    %v721 = vld [vmem:[%s3 + $0x18] sm:$0xff]
    %v722 = vld [vmem:[%s3 + $0x20] sm:$0xff]
    %v723 = vld [vmem:[%s3 + $0x28] sm:$0xff]
    %v724 = vld [vmem:[%s3 + $0x30] sm:$0xff]
    %v725 = vld [vmem:[%s3 + $0x38] sm:$0xff]
    %v726 = vld [vmem:[%s3 + $0x40] sm:$0xff]
    %v727 = vld [vmem:[%s3 + $0x48] sm:$0xff]
    %v728 = vld [vmem:[%s3 + $0x50] sm:$0xff]
    %v729 = vld [vmem:[%s3 + $0x58] sm:$0xff]
    %v730 = vld [vmem:[%s3 + $0x60] sm:$0xff]
    %v731 = vld [vmem:[%s3 + $0x68] sm:$0xff]
    %v732 = vld [vmem:[%s3 + $0x70] sm:$0xff]
    %v733 = vld [vmem:[%s3 + $0x78] sm:$0xff]
    %v734 = vld [vmem:[%s4] sm:$0x1]
    %v736 = vlaneseq
    %v737 = vshrl.u32 %v736, 7
    %v738 = vsub.s32 0, %v737
    %v739 = vrot.slane %v734, %v738
    %741 = vmatprep.subr.mxu0 0.0
    %742 = vmatpush1.msra.mxu0 %v718
    %743 = vmatprep.subr.mxu0 0.0
    %744 = vmatpush1.msra.mxu0 %v719
    %745 = vmatprep.subr.mxu0 0.0
    %746 = vmatpush1.msra.mxu0 %v720
    %747 = vmatprep.subr.mxu0 0.0
    %748 = vmatpush1.msra.mxu0 %v721
    %749 = vmatprep.subr.mxu0 0.0
    %750 = vmatpush1.msra.mxu0 %v722
    %751 = vmatprep.subr.mxu0 0.0
    %752 = vmatpush1.msra.mxu0 %v723
    %753 = vmatprep.subr.mxu0 0.0
    %754 = vmatpush1.msra.mxu0 %v724
    %755 = vmatprep.subr.mxu0 0.0
    %756 = vmatpush1.msra.mxu0 %v725
    %757 = vmatprep.subr.mxu0 0.0
    %758 = vmatpush1.msra.mxu0 %v726
    %759 = vmatprep.subr.mxu0 0.0
    %760 = vmatpush1.msra.mxu0 %v727
    %761 = vmatprep.subr.mxu0 0.0
    %762 = vmatpush1.msra.mxu0 %v728
    %763 = vmatprep.subr.mxu0 0.0
    %764 = vmatpush1.msra.mxu0 %v729
    %765 = vmatprep.subr.mxu0 0.0
    %766 = vmatpush1.msra.mxu0 %v730
    %767 = vmatprep.subr.mxu0 0.0
    %768 = vmatpush1.msra.mxu0 %v731
    %769 = vmatprep.subr.mxu0 0.0
    %770 = vmatpush1.msra.mxu0 %v732
    %771 = vmatprep.subr.mxu0 0.0
    %772 = vmatpush1.msra.mxu0 %v733
    %773 = vmatprep.subr.mxu0 0.0
    %774 = vmatpush1.msra.mxu0 0.0
    %775 = vmatprep.subr.mxu0 0.0
    %776 = vmatpush1.msra.mxu0 0.0
    %777 = vmatprep.subr.mxu0 0.0
    %778 = vmatpush1.msra.mxu0 0.0
    %779 = vmatprep.subr.mxu0 0.0
    %780 = vmatpush1.msra.mxu0 0.0
    %781 = vmatprep.subr.mxu0 0.0
    %782 = vmatpush1.msra.mxu0 0.0
    %783 = vmatprep.subr.mxu0 0.0
    %784 = vmatpush1.msra.mxu0 0.0
    %785 = vmatprep.subr.mxu0 0.0
    %786 = vmatpush1.msra.mxu0 0.0
    %787 = vmatprep.subr.mxu0 0.0
    %788 = vmatpush1.msra.mxu0 0.0
    %789 = vmatprep.subr.mxu0 0.0
    %790 = vmatpush1.msra.mxu0 0.0
    %791 = vmatprep.subr.mxu0 0.0
    %792 = vmatpush1.msra.mxu0 0.0
    %793 = vmatprep.subr.mxu0 0.0
    %794 = vmatpush1.msra.mxu0 0.0
    %795 = vmatprep.subr.mxu0 0.0
    %796 = vmatpush1.msra.mxu0 0.0
    %797 = vmatprep.subr.mxu0 0.0
    %798 = vmatpush1.msra.mxu0 0.0
    %799 = vmatprep.subr.mxu0 0.0
    %800 = vmatpush1.msra.mxu0 0.0
    %801 = vmatprep.subr.mxu0 0.0
    %802 = vmatpush1.msra.mxu0 0.0
    %803 = vmatprep.subr.mxu0 0.0
    %804 = vmatpush1.msra.mxu0 0.0
    %805 = vmatprep.mubr.f32.mxu0 0.0
    %806 = vmatmul.mubr.f32.gmra.mrb[0].mxu0 %v717
    %v807 = vpop.f32.mrb[0].mxu0
    %v808 = vadd.f32 %v739, %v807
    %v809 = vpop.f32.mrb[0].mxu0
    %810 = vdwg.mxu0
    %v811 = vmax.f32 %v808, 0.0
    %v812 = vld [vmem:[%s5] sm:$0xff]
    %v813 = vld [vmem:[%s5 + $0x8] sm:$0xff]
    %v814 = vld [vmem:[%s5 + $0x10] sm:$0xff]
    %v815 = vld [vmem:[%s5 + $0x18] sm:$0xff]
    %v816 = vld [vmem:[%s5 + $0x20] sm:$0xff]
    %v817 = vld [vmem:[%s5 + $0x28] sm:$0xff]
    %v818 = vld [vmem:[%s5 + $0x30] sm:$0xff]
    %v819 = vld [vmem:[%s5 + $0x38] sm:$0xff]
    %v820 = vld [vmem:[%s5 + $0x40] sm:$0xff]
    %v821 = vld [vmem:[%s5 + $0x48] sm:$0xff]
    %v822 = vld [vmem:[%s5 + $0x50] sm:$0xff]
    %v823 = vld [vmem:[%s5 + $0x58] sm:$0xff]
    %v824 = vld [vmem:[%s5 + $0x60] sm:$0xff]
    %v825 = vld [vmem:[%s5 + $0x68] sm:$0xff]
    %v826 = vld [vmem:[%s5 + $0x70] sm:$0xff]
    %v827 = vld [vmem:[%s5 + $0x78] sm:$0xff]
    %v828 = vld [vmem:[%s6] sm:$0x1]
    %v830 = vlaneseq
    %v831 = vshrl.u32 %v830, 7
    %v832 = vsub.s32 0, %v831
    %v833 = vrot.slane %v828, %v832
    %835 = vmatprep.subr.mxu0 0.0
    %836 = vmatpush1.msra.mxu0 %v812
    %837 = vmatprep.subr.mxu0 0.0
    %838 = vmatpush1.msra.mxu0 %v813
    %839 = vmatprep.subr.mxu0 0.0
    %840 = vmatpush1.msra.mxu0 %v814
    %841 = vmatprep.subr.mxu0 0.0
    %842 = vmatpush1.msra.mxu0 %v815
    %843 = vmatprep.subr.mxu0 0.0
    %844 = vmatpush1.msra.mxu0 %v816
    %845 = vmatprep.subr.mxu0 0.0
    %846 = vmatpush1.msra.mxu0 %v817
    %847 = vmatprep.subr.mxu0 0.0
    %848 = vmatpush1.msra.mxu0 %v818
    %849 = vmatprep.subr.mxu0 0.0
    %850 = vmatpush1.msra.mxu0 %v819
    %851 = vmatprep.subr.mxu0 0.0
    %852 = vmatpush1.msra.mxu0 %v820
    %853 = vmatprep.subr.mxu0 0.0
    %854 = vmatpush1.msra.mxu0 %v821
    %855 = vmatprep.subr.mxu0 0.0
    %856 = vmatpush1.msra.mxu0 %v822
    %857 = vmatprep.subr.mxu0 0.0
    %858 = vmatpush1.msra.mxu0 %v823
    %859 = vmatprep.subr.mxu0 0.0
    %860 = vmatpush1.msra.mxu0 %v824
    %861 = vmatprep.subr.mxu0 0.0
    %862 = vmatpush1.msra.mxu0 %v825
    %863 = vmatprep.subr.mxu0 0.0
    %864 = vmatpush1.msra.mxu0 %v826
    %865 = vmatprep.subr.mxu0 0.0
    %866 = vmatpush1.msra.mxu0 %v827
    %867 = vmatprep.subr.mxu0 0.0
    %868 = vmatpush1.msra.mxu0 0.0
    %869 = vmatprep.subr.mxu0 0.0
    %870 = vmatpush1.msra.mxu0 0.0
    %871 = vmatprep.subr.mxu0 0.0
    %872 = vmatpush1.msra.mxu0 0.0
    %873 = vmatprep.subr.mxu0 0.0
    %874 = vmatpush1.msra.mxu0 0.0
    %875 = vmatprep.subr.mxu0 0.0
    %876 = vmatpush1.msra.mxu0 0.0
    %877 = vmatprep.subr.mxu0 0.0
    %878 = vmatpush1.msra.mxu0 0.0
    %879 = vmatprep.subr.mxu0 0.0
    %880 = vmatpush1.msra.mxu0 0.0
    %881 = vmatprep.subr.mxu0 0.0
    %882 = vmatpush1.msra.mxu0 0.0
    %883 = vmatprep.subr.mxu0 0.0
    %884 = vmatpush1.msra.mxu0 0.0
    %885 = vmatprep.subr.mxu0 0.0
    %886 = vmatpush1.msra.mxu0 0.0
    %887 = vmatprep.subr.mxu0 0.0
    %888 = vmatpush1.msra.mxu0 0.0
    %889 = vmatprep.subr.mxu0 0.0
    %890 = vmatpush1.msra.mxu0 0.0
    %891 = vmatprep.subr.mxu0 0.0
    %892 = vmatpush1.msra.mxu0 0.0
    %893 = vmatprep.subr.mxu0 0.0
    %894 = vmatpush1.msra.mxu0 0.0
    %895 = vmatprep.subr.mxu0 0.0
    %896 = vmatpush1.msra.mxu0 0.0
    %897 = vmatprep.subr.mxu0 0.0
    %898 = vmatpush1.msra.mxu0 0.0
    %899 = vmatprep.mubr.f32.mxu0 0.0
    %900 = vmatmul.mubr.f32.gmra.mrb[0].mxu0 %v811
    %v901 = vpop.f32.mrb[0].mxu0
    %v902 = vadd.f32 %v833, %v901
    %v903 = vpop.f32.mrb[0].mxu0
    %904 = vdwg.mxu0
    %905 = vst [vmem:[#allocation2] sm:$0x3] %v902
    // Predicated region
    $region30: #{net_forward.5} parent=1 // pred_check
      _
    $region31: #{net_forward.5} parent=1 // pred_check_branch
      %907 = sbr.rel (0) target = $region33
    $region32: #{net_forward.5} parent=1 // pred_region
      %s909 = ssub.s32 32, 32
      %910 = vsyncadd [#allocation3], %s909
      %s912 = sshll.u32 [#allocation2], 4
      %s913 = int_to_ptr.vmem [resolvable:$true] %s912
      %915 = dma.vmem_to_hbm [thread:$0]  %s913, 32, %s7, [#allocation3]
    $region33: #{net_forward.5} parent=1 // pred_fallthru
      _
    // Predicated region
    $region34: #{net_forward.5} parent=1 // pred_check
      _
    $region35: #{net_forward.5} parent=1 // pred_check_branch
      %917 = sbr.rel (0) target = $region37
    $region36: #{net_forward.5} parent=1 // pred_region
      %918 = dma.done [#allocation3], 32
    $region37: #{net_forward.5} parent=1 // pred_fallthru
      _
    %919 = vsyncpa [#allocation3], 1

</llo_original>
